<compile_context>
chip_gen: v7x
topology: tpu7x:2x2x1
jax: 0.10.0
libtpu: 0.0.40
codegen_flags: <defaults>
</compile_context>

<pallas_src>
import functools
import math

import jax
import jax.numpy as jnp
from jax import lax
from jax.experimental import pallas as pl
from jax.experimental.pallas import tpu as pltpu


# ----------------------------- configuration -------------------------------
NTOKEN   = 8          # bound lazily to inputs.size(-1) in the PyTorch module
D_HID    = 128
NHEAD    = 4
D_HEAD   = D_HID // NHEAD
NLAYERS  = 2
D_OUT    = 8
LN_EPS   = 1e-5
LANE     = 128        # lane-dense width of the padded output slab
COMPUTE_DTYPE = jnp.bfloat16

# Packed per-layer weight bundle (bf16, [NLAYERS, D_HID, 6*D_HID]):
#   cols [0,3D)  = W_qkv (q|k|v, each D_HID cols; NOTE: this is the transpose
#                  of nn.MultiheadAttention.in_proj_weight when porting weights)
#   cols [3D,4D) = W_o,  [4D,5D) = W_ff1,  [5D,6D) = W_ff2
WCOLS = 6 * D_HID
# Packed per-layer vector bundle rows (f32, [NLAYERS, NVEC, D_HID]):
(ROW_BQ, ROW_BK, ROW_BV, ROW_BO, ROW_LN1G, ROW_LN1B,
 ROW_BF1, ROW_BF2, ROW_LN2G, ROW_LN2B) = range(10)
NVEC = 10


# ------------------------ fused whole-model kernel ---------------------------
def _fused_model_kernel(x_ref, w_in_ref, b_in_ref, wl_ref, vl_ref,
                        w_out_ref, b_out_ref, o_ref, *, nlayers, nhead, eps):
    bb, s, ntok = x_ref.shape
    d = w_in_ref.shape[1]
    dh = d // nhead
    n = bb * s
    sm_scale = 1.0 / math.sqrt(dh)

    def layernorm(y, g, b):
        mean = jnp.mean(y, axis=-1, keepdims=True)
        c = y - mean
        var = jnp.mean(c * c, axis=-1, keepdims=True)
        return c * lax.rsqrt(var + eps) * g + b

    # ---- input projection + sqrt(d_hid) scale (fused, applied once) ----
    x = x_ref[...].reshape(n, ntok).astype(COMPUTE_DTYPE)
    h = jnp.dot(x, w_in_ref[...], preferred_element_type=jnp.float32)
    h = (h + b_in_ref[...]) * math.sqrt(d)                 # [n, d] f32

    for l in range(nlayers):
        vec = vl_ref[l]                                    # [NVEC, d] f32 (biases / LN params)

        # ---- fused QKV projection: one lane-dense [d, 3d] matmul ----
        qkv = jnp.dot(h.astype(COMPUTE_DTYPE), wl_ref[l, :, 0:3 * d],
                      preferred_element_type=jnp.float32)  # [n, 3d] f32
        q = (qkv[:, 0:d]       + vec[ROW_BQ:ROW_BQ + 1, :]).astype(COMPUTE_DTYPE).reshape(bb, s, d)
        k = (qkv[:, d:2 * d]   + vec[ROW_BK:ROW_BK + 1, :]).astype(COMPUTE_DTYPE).reshape(bb, s, d)
        v = (qkv[:, 2 * d:3 * d] + vec[ROW_BV:ROW_BV + 1, :]).astype(COMPUTE_DTYPE).reshape(bb, s, d)

        # ---- attention: whole sequence in VMEM, direct f32 softmax ----
        ctx_heads = []
        for hd in range(nhead):
            qh = q[:, :, hd * dh:(hd + 1) * dh]
            kh = k[:, :, hd * dh:(hd + 1) * dh]
            vh = v[:, :, hd * dh:(hd + 1) * dh]
            sc = jnp.einsum("bqd,bkd->bqk", qh, kh,
                            preferred_element_type=jnp.float32) * sm_scale
            sc = sc - sc.max(axis=-1, keepdims=True)
            p = jnp.exp(sc)
            p = p * pl.reciprocal(p.sum(axis=-1, keepdims=True))   # exact recip
            ctx_heads.append(jnp.einsum("bqk,bkd->bqd", p.astype(COMPUTE_DTYPE), vh,
                                        preferred_element_type=jnp.float32))
        ctx = jnp.concatenate(ctx_heads, axis=-1).reshape(n, d)    # lane-dense [n, d]

        # ---- out-proj + bias + residual + post-LN1 (fused) ----
        y = jnp.dot(ctx.astype(COMPUTE_DTYPE), wl_ref[l, :, 3 * d:4 * d],
                    preferred_element_type=jnp.float32)
        y = y + vec[ROW_BO:ROW_BO + 1, :] + h
        h1 = layernorm(y, vec[ROW_LN1G:ROW_LN1G + 1, :], vec[ROW_LN1B:ROW_LN1B + 1, :])

        # ---- FFN (linear -> ReLU -> linear) + residual + post-LN2 (fused) ----
        f = jnp.dot(h1.astype(COMPUTE_DTYPE), wl_ref[l, :, 4 * d:5 * d],
                    preferred_element_type=jnp.float32)
        f = jnp.maximum(f + vec[ROW_BF1:ROW_BF1 + 1, :], 0.0)
        f2 = jnp.dot(f.astype(COMPUTE_DTYPE), wl_ref[l, :, 5 * d:6 * d],
                     preferred_element_type=jnp.float32)
        f2 = f2 + vec[ROW_BF2:ROW_BF2 + 1, :] + h1
        h = layernorm(f2, vec[ROW_LN2G:ROW_LN2G + 1, :], vec[ROW_LN2B:ROW_LN2B + 1, :])

    # ---- output projection into a lane-dense 128-wide f32 slab ----
    out = jnp.dot(h.astype(COMPUTE_DTYPE), w_out_ref[...],
                  preferred_element_type=jnp.float32) + b_out_ref[...]
    o_ref[...] = out.reshape(bb, s, LANE)


def _pick_block_b(batch, seq):
    """Largest batch-block that divides B, keeps >=2 grid steps when B >= 2
    (v7x has 2 TensorCores) and <=256 rows of matmul work per step."""
    best = 1
    for bb in range(1, batch + 1):
        if batch % bb != 0 or bb * seq > 256:
            continue
        if batch // bb >= 2 or batch == 1:
            best = bb
    return best


def whole_sequence_model_forward(packed, inputs):
    """inputs: [B, S, ntoken] float32 -> [B, S, d_output] float32."""
    B, S, ntok = inputs.shape
    bb = _pick_block_b(B, S)
    grid = (B // bb,)

    out = pl.pallas_call(
        functools.partial(_fused_model_kernel,
                          nlayers=NLAYERS, nhead=NHEAD, eps=LN_EPS),
        out_shape=jax.ShapeDtypeStruct((B, S, LANE), jnp.float32),
        grid_spec=pltpu.PrefetchScalarGridSpec(
            num_scalar_prefetch=0,
            grid=grid,
            in_specs=[
                pl.BlockSpec((bb, S, ntok), lambda i: (i, 0, 0)),            # activations
                pl.BlockSpec((ntok, D_HID), lambda i: (0, 0)),               # W_in  (resident)
                pl.BlockSpec((1, D_HID), lambda i: (0, 0)),                  # b_in
                pl.BlockSpec((NLAYERS, D_HID, WCOLS), lambda i: (0, 0, 0)),  # layer weights (resident)
                pl.BlockSpec((NLAYERS, NVEC, D_HID), lambda i: (0, 0, 0)),   # layer bias/LN bundle
                pl.BlockSpec((D_HID, LANE), lambda i: (0, 0)),               # W_out (padded, resident)
                pl.BlockSpec((1, LANE), lambda i: (0, 0)),                   # b_out (padded)
            ],
            out_specs=pl.BlockSpec((bb, S, LANE), lambda i: (i, 0, 0)),      # lane-dense slab
        ),
        compiler_params=pltpu.CompilerParams(dimension_semantics=("parallel",)),
    )(inputs, packed["w_in"], packed["b_in"], packed["w_layers"],
      packed["v_layers"], packed["w_out"], packed["b_out"])

    return out[:, :, :D_OUT]


# ------------------------------ parameters ----------------------------------
def init_params(key):
    """Natural (PyTorch-shaped) parameters in f32."""
    def dense(k, fan_in, fan_out):
        kw, kb = jax.random.split(k)
        bound = 1.0 / math.sqrt(fan_in)
        w = jax.random.uniform(kw, (fan_in, fan_out), jnp.float32, -bound, bound)
        b = jax.random.uniform(kb, (fan_out,), jnp.float32, -bound, bound)
        return w, b

    keys = jax.random.split(key, 2 + NLAYERS)
    w_in, b_in = dense(keys[0], NTOKEN, D_HID)
    w_out, b_out = dense(keys[1], D_HID, D_OUT)
    layers = []
    for l in range(NLAYERS):
        lk = jax.random.split(keys[2 + l], 4)
        w_qkv, b_qkv = dense(lk[0], D_HID, 3 * D_HID)    # fused Q|K|V projection
        w_o,   b_o   = dense(lk[1], D_HID, D_HID)
        w_ff1, b_ff1 = dense(lk[2], D_HID, D_HID)        # dim_feedforward = d_hid
        w_ff2, b_ff2 = dense(lk[3], D_HID, D_HID)
        layers.append(dict(
            w_qkv=w_qkv, b_qkv=b_qkv, w_o=w_o, b_o=b_o,
            w_ff1=w_ff1, b_ff1=b_ff1, w_ff2=w_ff2, b_ff2=b_ff2,
            ln1_g=jnp.ones((D_HID,), jnp.float32), ln1_b=jnp.zeros((D_HID,), jnp.float32),
            ln2_g=jnp.ones((D_HID,), jnp.float32), ln2_b=jnp.zeros((D_HID,), jnp.float32)))
    return dict(w_in=w_in, b_in=b_in, w_out=w_out, b_out=b_out, layers=layers)


def pack_params(params):
    """Pack natural params into the VMEM-resident bundles the kernel expects."""
    d = D_HID
    w_layers = jnp.stack([
        jnp.concatenate([L["w_qkv"], L["w_o"], L["w_ff1"], L["w_ff2"]], axis=1)
        for L in params["layers"]]).astype(COMPUTE_DTYPE)               # [L, d, 6d]
    v_layers = jnp.stack([
        jnp.stack([L["b_qkv"][0:d], L["b_qkv"][d:2 * d], L["b_qkv"][2 * d:3 * d],
                   L["b_o"], L["ln1_g"], L["ln1_b"],
                   L["b_ff1"], L["b_ff2"], L["ln2_g"], L["ln2_b"]])
        for L in params["layers"]]).astype(jnp.float32)                 # [L, 10, d]
    w_out = jnp.zeros((d, LANE), COMPUTE_DTYPE).at[:, :D_OUT].set(
        params["w_out"].astype(COMPUTE_DTYPE))
    b_out = jnp.zeros((1, LANE), jnp.float32).at[0, :D_OUT].set(params["b_out"])
    return dict(
        w_in=params["w_in"].astype(COMPUTE_DTYPE),
        b_in=params["b_in"].astype(jnp.float32).reshape(1, d),
        w_layers=w_layers, v_layers=v_layers,
        w_out=w_out, b_out=b_out)


# ---------------------------------- main -------------------------------------
if __name__ == "__main__":
    key = jax.random.PRNGKey(0)
    pkey, xkey = jax.random.split(key)
    packed = pack_params(init_params(pkey))

    B, S = 2, 16
    inputs = jax.random.normal(xkey, (B, S, NTOKEN), dtype=jnp.float32)

    fwd = jax.jit(whole_sequence_model_forward)
    out = jax.block_until_ready(fwd(packed, inputs))

    assert out.shape == (B, S, D_OUT), out.shape
    assert bool(jnp.all(jnp.isfinite(out)))
    print("KERNEL_OK")
</pallas_src>

<mosaic_0001>
module attributes {stable_mosaic.version = 11 : i64} {
  func.func @_fused_model_kernel(%arg0: i32, %arg1: memref<1x16x8xf32, #tpu.memory_space<vmem>>, %arg2: memref<8x128xbf16, #tpu.memory_space<vmem>>, %arg3: memref<1x128xf32, #tpu.memory_space<vmem>>, %arg4: memref<2x128x768xbf16, #tpu.memory_space<vmem>>, %arg5: memref<2x10x128xf32, #tpu.memory_space<vmem>>, %arg6: memref<128x128xbf16, #tpu.memory_space<vmem>>, %arg7: memref<1x128xf32, #tpu.memory_space<vmem>>, %arg8: memref<1x16x128xf32, #tpu.memory_space<vmem>>) attributes {dimension_semantics = [#tpu.dimension_semantics<parallel>], iteration_bounds = array<i64: 2>, scalar_prefetch = 0 : i64, scratch_operands = 0 : i64, tpu.core_type = #tpu.core_type<tc>, window_params = [{transform_indices = @transform_0, window_bounds = array<i64: 1, 16, 8>}, {pipeline_mode = #tpu.pipeline_mode<synchronous>, transform_indices = @transform_1, window_bounds = array<i64: 8, 128>}, {pipeline_mode = #tpu.pipeline_mode<synchronous>, transform_indices = @transform_2, window_bounds = array<i64: 1, 128>}, {pipeline_mode = #tpu.pipeline_mode<synchronous>, transform_indices = @transform_3, window_bounds = array<i64: 2, 128, 768>}, {pipeline_mode = #tpu.pipeline_mode<synchronous>, transform_indices = @transform_4, window_bounds = array<i64: 2, 10, 128>}, {pipeline_mode = #tpu.pipeline_mode<synchronous>, transform_indices = @transform_5, window_bounds = array<i64: 128, 128>}, {pipeline_mode = #tpu.pipeline_mode<synchronous>, transform_indices = @transform_6, window_bounds = array<i64: 1, 128>}, {transform_indices = @transform_7, window_bounds = array<i64: 1, 16, 128>}]} {
    %c0 = arith.constant 0 : index
    %c0_0 = arith.constant 0 : index
    %c0_1 = arith.constant 0 : index
    %0 = vector.load %arg1[%c0, %c0_0, %c0_1] : memref<1x16x8xf32, #tpu.memory_space<vmem>>, vector<1x16x8xf32>
    %1 = vector.shape_cast %0 : vector<1x16x8xf32> to vector<16x8xf32>
    %2 = arith.truncf %1 : vector<16x8xf32> to vector<16x8xbf16>
    %c0_2 = arith.constant 0 : index
    %c0_3 = arith.constant 0 : index
    %3 = vector.load %arg2[%c0_2, %c0_3] : memref<8x128xbf16, #tpu.memory_space<vmem>>, vector<8x128xbf16>
    %cst = arith.constant dense<0.000000e+00> : vector<16x128xf32>
    %4 = tpu.matmul %2, %3, %cst {dimension_numbers = #tpu.dot_dimension_numbers<[1], [0], [0], [1], [0, 0, 1, 1], [], []>} : vector<16x8xbf16>, vector<8x128xbf16>, vector<16x128xf32> -> vector<16x128xf32>
    %c0_4 = arith.constant 0 : index
    %c0_5 = arith.constant 0 : index
    %5 = vector.load %arg3[%c0_4, %c0_5] : memref<1x128xf32, #tpu.memory_space<vmem>>, vector<1x128xf32>
    %6 = vector.broadcast %5 : vector<1x128xf32> to vector<16x128xf32>
    %7 = arith.addf %4, %6 : vector<16x128xf32>
    %cst_6 = arith.constant 11.3137083 : f32
    %8 = vector.broadcast %cst_6 : f32 to vector<16x128xf32>
    %9 = arith.mulf %7, %8 : vector<16x128xf32>
    %c0_7 = arith.constant 0 : index
    %c0_8 = arith.constant 0 : index
    %c0_9 = arith.constant 0 : index
    %10 = vector.load %arg5[%c0_7, %c0_8, %c0_9] : memref<2x10x128xf32, #tpu.memory_space<vmem>>, vector<1x10x128xf32>
    %11 = vector.shape_cast %10 : vector<1x10x128xf32> to vector<10x128xf32>
    %12 = arith.truncf %9 : vector<16x128xf32> to vector<16x128xbf16>
    %c0_10 = arith.constant 0 : index
    %c0_11 = arith.constant 0 : index
    %c0_12 = arith.constant 0 : index
    %13 = vector.load %arg4[%c0_10, %c0_11, %c0_12] : memref<2x128x768xbf16, #tpu.memory_space<vmem>>, vector<1x128x384xbf16>
    %14 = vector.shape_cast %13 : vector<1x128x384xbf16> to vector<128x384xbf16>
    %cst_13 = arith.constant dense<0.000000e+00> : vector<16x384xf32>
    %15 = tpu.matmul %12, %14, %cst_13 {dimension_numbers = #tpu.dot_dimension_numbers<[1], [0], [0], [1], [0, 0, 1, 1], [], []>} : vector<16x128xbf16>, vector<128x384xbf16>, vector<16x384xf32> -> vector<16x384xf32>
    %16 = vector.extract_strided_slice %15 {offsets = [0, 0], sizes = [16, 128], strides = [1, 1]} : vector<16x384xf32> to vector<16x128xf32>
    %17 = vector.extract_strided_slice %11 {offsets = [0, 0], sizes = [1, 128], strides = [1, 1]} : vector<10x128xf32> to vector<1x128xf32>
    %18 = vector.broadcast %17 : vector<1x128xf32> to vector<16x128xf32>
    %19 = arith.addf %16, %18 : vector<16x128xf32>
    %20 = arith.truncf %19 : vector<16x128xf32> to vector<16x128xbf16>
    %21 = vector.shape_cast %20 : vector<16x128xbf16> to vector<1x16x128xbf16>
    %22 = vector.extract_strided_slice %15 {offsets = [0, 128], sizes = [16, 128], strides = [1, 1]} : vector<16x384xf32> to vector<16x128xf32>
    %23 = vector.extract_strided_slice %11 {offsets = [1, 0], sizes = [1, 128], strides = [1, 1]} : vector<10x128xf32> to vector<1x128xf32>
    %24 = vector.broadcast %23 : vector<1x128xf32> to vector<16x128xf32>
    %25 = arith.addf %22, %24 : vector<16x128xf32>
    %26 = arith.truncf %25 : vector<16x128xf32> to vector<16x128xbf16>
    %27 = vector.shape_cast %26 : vector<16x128xbf16> to vector<1x16x128xbf16>
    %28 = vector.extract_strided_slice %15 {offsets = [0, 256], sizes = [16, 128], strides = [1, 1]} : vector<16x384xf32> to vector<16x128xf32>
    %29 = vector.extract_strided_slice %11 {offsets = [2, 0], sizes = [1, 128], strides = [1, 1]} : vector<10x128xf32> to vector<1x128xf32>
    %30 = vector.broadcast %29 : vector<1x128xf32> to vector<16x128xf32>
    %31 = arith.addf %28, %30 : vector<16x128xf32>
    %32 = arith.truncf %31 : vector<16x128xf32> to vector<16x128xbf16>
    %33 = vector.shape_cast %32 : vector<16x128xbf16> to vector<1x16x128xbf16>
    %34 = vector.extract_strided_slice %21 {offsets = [0, 0, 0], sizes = [1, 16, 32], strides = [1, 1, 1]} : vector<1x16x128xbf16> to vector<1x16x32xbf16>
    %35 = vector.extract_strided_slice %27 {offsets = [0, 0, 0], sizes = [1, 16, 32], strides = [1, 1, 1]} : vector<1x16x128xbf16> to vector<1x16x32xbf16>
    %36 = vector.extract_strided_slice %33 {offsets = [0, 0, 0], sizes = [1, 16, 32], strides = [1, 1, 1]} : vector<1x16x128xbf16> to vector<1x16x32xbf16>
    "tpu.trace_start"() <{level = 10 : i32, message = "bqd,bkd->bqk"}> : () -> ()
    %cst_14 = arith.constant dense<0.000000e+00> : vector<1x16x16xf32>
    %37 = tpu.matmul %34, %35, %cst_14 {dimension_numbers = #tpu.dot_dimension_numbers<[2], [2], [1], [1], [0, 0, 0, 1, 1, 1], [0], [0]>} : vector<1x16x32xbf16>, vector<1x16x32xbf16>, vector<1x16x16xf32> -> vector<1x16x16xf32>
    "tpu.trace_stop"() : () -> ()
    %cst_15 = arith.constant 0.176776692 : f32
    %38 = vector.broadcast %cst_15 : f32 to vector<1x16x16xf32>
    %39 = arith.mulf %37, %38 : vector<1x16x16xf32>
    %cst_16 = arith.constant dense<0xFF800000> : vector<1x16xf32>
    %40 = vector.multi_reduction <maximumf>, %39, %cst_16 [2] : vector<1x16x16xf32> to vector<1x16xf32>
    %41 = vector.shape_cast %40 : vector<1x16xf32> to vector<1x16x1xf32>
    %42 = vector.broadcast %41 : vector<1x16x1xf32> to vector<1x16x16xf32>
    %43 = arith.subf %39, %42 : vector<1x16x16xf32>
    %44 = math.exp %43 : vector<1x16x16xf32>
    %cst_17 = arith.constant dense<0.000000e+00> : vector<1x16xf32>
    %45 = vector.multi_reduction <add>, %44, %cst_17 [2] : vector<1x16x16xf32> to vector<1x16xf32>
    %46 = vector.shape_cast %45 : vector<1x16xf32> to vector<1x16x1xf32>
    %47 = tpu.reciprocal %46 : vector<1x16x1xf32> -> vector<1x16x1xf32>
    %48 = vector.broadcast %47 : vector<1x16x1xf32> to vector<1x16x16xf32>
    %49 = arith.mulf %44, %48 : vector<1x16x16xf32>
    %50 = arith.truncf %49 : vector<1x16x16xf32> to vector<1x16x16xbf16>
    "tpu.trace_start"() <{level = 10 : i32, message = "bqk,bkd->bqd"}> : () -> ()
    %cst_18 = arith.constant dense<0.000000e+00> : vector<1x16x32xf32>
    %51 = tpu.matmul %50, %36, %cst_18 {dimension_numbers = #tpu.dot_dimension_numbers<[2], [1], [1], [2], [0, 0, 0, 1, 1, 2], [0], [0]>} : vector<1x16x16xbf16>, vector<1x16x32xbf16>, vector<1x16x32xf32> -> vector<1x16x32xf32>
    "tpu.trace_stop"() : () -> ()
    %52 = vector.extract_strided_slice %21 {offsets = [0, 0, 32], sizes = [1, 16, 32], strides = [1, 1, 1]} : vector<1x16x128xbf16> to vector<1x16x32xbf16>
    %53 = vector.extract_strided_slice %27 {offsets = [0, 0, 32], sizes = [1, 16, 32], strides = [1, 1, 1]} : vector<1x16x128xbf16> to vector<1x16x32xbf16>
    %54 = vector.extract_strided_slice %33 {offsets = [0, 0, 32], sizes = [1, 16, 32], strides = [1, 1, 1]} : vector<1x16x128xbf16> to vector<1x16x32xbf16>
    "tpu.trace_start"() <{level = 10 : i32, message = "bqd,bkd->bqk"}> : () -> ()
    %cst_19 = arith.constant dense<0.000000e+00> : vector<1x16x16xf32>
    %55 = tpu.matmul %52, %53, %cst_19 {dimension_numbers = #tpu.dot_dimension_numbers<[2], [2], [1], [1], [0, 0, 0, 1, 1, 1], [0], [0]>} : vector<1x16x32xbf16>, vector<1x16x32xbf16>, vector<1x16x16xf32> -> vector<1x16x16xf32>
    "tpu.trace_stop"() : () -> ()
    %cst_20 = arith.constant 0.176776692 : f32
    %56 = vector.broadcast %cst_20 : f32 to vector<1x16x16xf32>
    %57 = arith.mulf %55, %56 : vector<1x16x16xf32>
    %cst_21 = arith.constant dense<0xFF800000> : vector<1x16xf32>
    %58 = vector.multi_reduction <maximumf>, %57, %cst_21 [2] : vector<1x16x16xf32> to vector<1x16xf32>
    %59 = vector.shape_cast %58 : vector<1x16xf32> to vector<1x16x1xf32>
    %60 = vector.broadcast %59 : vector<1x16x1xf32> to vector<1x16x16xf32>
    %61 = arith.subf %57, %60 : vector<1x16x16xf32>
    %62 = math.exp %61 : vector<1x16x16xf32>
    %cst_22 = arith.constant dense<0.000000e+00> : vector<1x16xf32>
    %63 = vector.multi_reduction <add>, %62, %cst_22 [2] : vector<1x16x16xf32> to vector<1x16xf32>
    %64 = vector.shape_cast %63 : vector<1x16xf32> to vector<1x16x1xf32>
    %65 = tpu.reciprocal %64 : vector<1x16x1xf32> -> vector<1x16x1xf32>
    %66 = vector.broadcast %65 : vector<1x16x1xf32> to vector<1x16x16xf32>
    %67 = arith.mulf %62, %66 : vector<1x16x16xf32>
    %68 = arith.truncf %67 : vector<1x16x16xf32> to vector<1x16x16xbf16>
    "tpu.trace_start"() <{level = 10 : i32, message = "bqk,bkd->bqd"}> : () -> ()
    %cst_23 = arith.constant dense<0.000000e+00> : vector<1x16x32xf32>
    %69 = tpu.matmul %68, %54, %cst_23 {dimension_numbers = #tpu.dot_dimension_numbers<[2], [1], [1], [2], [0, 0, 0, 1, 1, 2], [0], [0]>} : vector<1x16x16xbf16>, vector<1x16x32xbf16>, vector<1x16x32xf32> -> vector<1x16x32xf32>
    "tpu.trace_stop"() : () -> ()
    %70 = vector.extract_strided_slice %21 {offsets = [0, 0, 64], sizes = [1, 16, 32], strides = [1, 1, 1]} : vector<1x16x128xbf16> to vector<1x16x32xbf16>
    %71 = vector.extract_strided_slice %27 {offsets = [0, 0, 64], sizes = [1, 16, 32], strides = [1, 1, 1]} : vector<1x16x128xbf16> to vector<1x16x32xbf16>
    %72 = vector.extract_strided_slice %33 {offsets = [0, 0, 64], sizes = [1, 16, 32], strides = [1, 1, 1]} : vector<1x16x128xbf16> to vector<1x16x32xbf16>
    "tpu.trace_start"() <{level = 10 : i32, message = "bqd,bkd->bqk"}> : () -> ()
    %cst_24 = arith.constant dense<0.000000e+00> : vector<1x16x16xf32>
    %73 = tpu.matmul %70, %71, %cst_24 {dimension_numbers = #tpu.dot_dimension_numbers<[2], [2], [1], [1], [0, 0, 0, 1, 1, 1], [0], [0]>} : vector<1x16x32xbf16>, vector<1x16x32xbf16>, vector<1x16x16xf32> -> vector<1x16x16xf32>
    "tpu.trace_stop"() : () -> ()
    %cst_25 = arith.constant 0.176776692 : f32
    %74 = vector.broadcast %cst_25 : f32 to vector<1x16x16xf32>
    %75 = arith.mulf %73, %74 : vector<1x16x16xf32>
    %cst_26 = arith.constant dense<0xFF800000> : vector<1x16xf32>
    %76 = vector.multi_reduction <maximumf>, %75, %cst_26 [2] : vector<1x16x16xf32> to vector<1x16xf32>
    %77 = vector.shape_cast %76 : vector<1x16xf32> to vector<1x16x1xf32>
    %78 = vector.broadcast %77 : vector<1x16x1xf32> to vector<1x16x16xf32>
    %79 = arith.subf %75, %78 : vector<1x16x16xf32>
    %80 = math.exp %79 : vector<1x16x16xf32>
    %cst_27 = arith.constant dense<0.000000e+00> : vector<1x16xf32>
    %81 = vector.multi_reduction <add>, %80, %cst_27 [2] : vector<1x16x16xf32> to vector<1x16xf32>
    %82 = vector.shape_cast %81 : vector<1x16xf32> to vector<1x16x1xf32>
    %83 = tpu.reciprocal %82 : vector<1x16x1xf32> -> vector<1x16x1xf32>
    %84 = vector.broadcast %83 : vector<1x16x1xf32> to vector<1x16x16xf32>
    %85 = arith.mulf %80, %84 : vector<1x16x16xf32>
    %86 = arith.truncf %85 : vector<1x16x16xf32> to vector<1x16x16xbf16>
    "tpu.trace_start"() <{level = 10 : i32, message = "bqk,bkd->bqd"}> : () -> ()
    %cst_28 = arith.constant dense<0.000000e+00> : vector<1x16x32xf32>
    %87 = tpu.matmul %86, %72, %cst_28 {dimension_numbers = #tpu.dot_dimension_numbers<[2], [1], [1], [2], [0, 0, 0, 1, 1, 2], [0], [0]>} : vector<1x16x16xbf16>, vector<1x16x32xbf16>, vector<1x16x32xf32> -> vector<1x16x32xf32>
    "tpu.trace_stop"() : () -> ()
    %88 = vector.extract_strided_slice %21 {offsets = [0, 0, 96], sizes = [1, 16, 32], strides = [1, 1, 1]} : vector<1x16x128xbf16> to vector<1x16x32xbf16>
    %89 = vector.extract_strided_slice %27 {offsets = [0, 0, 96], sizes = [1, 16, 32], strides = [1, 1, 1]} : vector<1x16x128xbf16> to vector<1x16x32xbf16>
    %90 = vector.extract_strided_slice %33 {offsets = [0, 0, 96], sizes = [1, 16, 32], strides = [1, 1, 1]} : vector<1x16x128xbf16> to vector<1x16x32xbf16>
    "tpu.trace_start"() <{level = 10 : i32, message = "bqd,bkd->bqk"}> : () -> ()
    %cst_29 = arith.constant dense<0.000000e+00> : vector<1x16x16xf32>
    %91 = tpu.matmul %88, %89, %cst_29 {dimension_numbers = #tpu.dot_dimension_numbers<[2], [2], [1], [1], [0, 0, 0, 1, 1, 1], [0], [0]>} : vector<1x16x32xbf16>, vector<1x16x32xbf16>, vector<1x16x16xf32> -> vector<1x16x16xf32>
    "tpu.trace_stop"() : () -> ()
    %cst_30 = arith.constant 0.176776692 : f32
    %92 = vector.broadcast %cst_30 : f32 to vector<1x16x16xf32>
    %93 = arith.mulf %91, %92 : vector<1x16x16xf32>
    %cst_31 = arith.constant dense<0xFF800000> : vector<1x16xf32>
    %94 = vector.multi_reduction <maximumf>, %93, %cst_31 [2] : vector<1x16x16xf32> to vector<1x16xf32>
    %95 = vector.shape_cast %94 : vector<1x16xf32> to vector<1x16x1xf32>
    %96 = vector.broadcast %95 : vector<1x16x1xf32> to vector<1x16x16xf32>
    %97 = arith.subf %93, %96 : vector<1x16x16xf32>
    %98 = math.exp %97 : vector<1x16x16xf32>
    %cst_32 = arith.constant dense<0.000000e+00> : vector<1x16xf32>
    %99 = vector.multi_reduction <add>, %98, %cst_32 [2] : vector<1x16x16xf32> to vector<1x16xf32>
    %100 = vector.shape_cast %99 : vector<1x16xf32> to vector<1x16x1xf32>
    %101 = tpu.reciprocal %100 : vector<1x16x1xf32> -> vector<1x16x1xf32>
    %102 = vector.broadcast %101 : vector<1x16x1xf32> to vector<1x16x16xf32>
    %103 = arith.mulf %98, %102 : vector<1x16x16xf32>
    %104 = arith.truncf %103 : vector<1x16x16xf32> to vector<1x16x16xbf16>
    "tpu.trace_start"() <{level = 10 : i32, message = "bqk,bkd->bqd"}> : () -> ()
    %cst_33 = arith.constant dense<0.000000e+00> : vector<1x16x32xf32>
    %105 = tpu.matmul %104, %90, %cst_33 {dimension_numbers = #tpu.dot_dimension_numbers<[2], [1], [1], [2], [0, 0, 0, 1, 1, 2], [0], [0]>} : vector<1x16x16xbf16>, vector<1x16x32xbf16>, vector<1x16x32xf32> -> vector<1x16x32xf32>
    "tpu.trace_stop"() : () -> ()
    %106 = tpu.concatenate %51, %69, %87, %105 in 2 : vector<1x16x32xf32>, vector<1x16x32xf32>, vector<1x16x32xf32>, vector<1x16x32xf32> -> vector<1x16x128xf32>
    %107 = vector.shape_cast %106 : vector<1x16x128xf32> to vector<16x128xf32>
    %108 = arith.truncf %107 : vector<16x128xf32> to vector<16x128xbf16>
    %c0_34 = arith.constant 0 : index
    %c0_35 = arith.constant 0 : index
    %c384 = arith.constant 384 : index
    %109 = vector.load %arg4[%c0_34, %c0_35, %c384] : memref<2x128x768xbf16, #tpu.memory_space<vmem>>, vector<1x128x128xbf16>
    %110 = vector.shape_cast %109 : vector<1x128x128xbf16> to vector<128x128xbf16>
    %cst_36 = arith.constant dense<0.000000e+00> : vector<16x128xf32>
    %111 = tpu.matmul %108, %110, %cst_36 {dimension_numbers = #tpu.dot_dimension_numbers<[1], [0], [0], [1], [0, 0, 1, 1], [], []>} : vector<16x128xbf16>, vector<128x128xbf16>, vector<16x128xf32> -> vector<16x128xf32>
    %112 = vector.extract_strided_slice %11 {offsets = [3, 0], sizes = [1, 128], strides = [1, 1]} : vector<10x128xf32> to vector<1x128xf32>
    %113 = vector.broadcast %112 : vector<1x128xf32> to vector<16x128xf32>
    %114 = arith.addf %111, %113 : vector<16x128xf32>
    %115 = arith.addf %114, %9 : vector<16x128xf32>
    %116 = vector.extract_strided_slice %11 {offsets = [4, 0], sizes = [1, 128], strides = [1, 1]} : vector<10x128xf32> to vector<1x128xf32>
    %117 = vector.extract_strided_slice %11 {offsets = [5, 0], sizes = [1, 128], strides = [1, 1]} : vector<10x128xf32> to vector<1x128xf32>
    %cst_37 = arith.constant dense<0.000000e+00> : vector<16xf32>
    %118 = vector.multi_reduction <add>, %115, %cst_37 [1] : vector<16x128xf32> to vector<16xf32>
    %119 = vector.shape_cast %118 : vector<16xf32> to vector<16x1xf32>
    %cst_38 = arith.constant 1.280000e+02 : f32
    %120 = vector.broadcast %cst_38 : f32 to vector<16x1xf32>
    %121 = arith.divf %119, %120 : vector<16x1xf32>
    %122 = vector.broadcast %121 : vector<16x1xf32> to vector<16x128xf32>
    %123 = arith.subf %115, %122 : vector<16x128xf32>
    %124 = arith.mulf %123, %123 : vector<16x128xf32>
    %cst_39 = arith.constant dense<0.000000e+00> : vector<16xf32>
    %125 = vector.multi_reduction <add>, %124, %cst_39 [1] : vector<16x128xf32> to vector<16xf32>
    %126 = vector.shape_cast %125 : vector<16xf32> to vector<16x1xf32>
    %cst_40 = arith.constant 1.280000e+02 : f32
    %127 = vector.broadcast %cst_40 : f32 to vector<16x1xf32>
    %128 = arith.divf %126, %127 : vector<16x1xf32>
    %cst_41 = arith.constant 9.99999974E-6 : f32
    %129 = vector.broadcast %cst_41 : f32 to vector<16x1xf32>
    %130 = arith.addf %128, %129 : vector<16x1xf32>
    %131 = math.rsqrt %130 : vector<16x1xf32>
    %132 = vector.broadcast %131 : vector<16x1xf32> to vector<16x128xf32>
    %133 = arith.mulf %123, %132 : vector<16x128xf32>
    %134 = vector.broadcast %116 : vector<1x128xf32> to vector<16x128xf32>
    %135 = arith.mulf %133, %134 : vector<16x128xf32>
    %136 = vector.broadcast %117 : vector<1x128xf32> to vector<16x128xf32>
    %137 = arith.addf %135, %136 : vector<16x128xf32>
    %138 = arith.truncf %137 : vector<16x128xf32> to vector<16x128xbf16>
    %c0_42 = arith.constant 0 : index
    %c0_43 = arith.constant 0 : index
    %c512 = arith.constant 512 : index
    %139 = vector.load %arg4[%c0_42, %c0_43, %c512] : memref<2x128x768xbf16, #tpu.memory_space<vmem>>, vector<1x128x128xbf16>
    %140 = vector.shape_cast %139 : vector<1x128x128xbf16> to vector<128x128xbf16>
    %cst_44 = arith.constant dense<0.000000e+00> : vector<16x128xf32>
    %141 = tpu.matmul %138, %140, %cst_44 {dimension_numbers = #tpu.dot_dimension_numbers<[1], [0], [0], [1], [0, 0, 1, 1], [], []>} : vector<16x128xbf16>, vector<128x128xbf16>, vector<16x128xf32> -> vector<16x128xf32>
    %142 = vector.extract_strided_slice %11 {offsets = [6, 0], sizes = [1, 128], strides = [1, 1]} : vector<10x128xf32> to vector<1x128xf32>
    %143 = vector.broadcast %142 : vector<1x128xf32> to vector<16x128xf32>
    %144 = arith.addf %141, %143 : vector<16x128xf32>
    %cst_45 = arith.constant 0.000000e+00 : f32
    %145 = vector.broadcast %cst_45 : f32 to vector<16x128xf32>
    %146 = arith.maximumf %144, %145 : vector<16x128xf32>
    %147 = arith.truncf %146 : vector<16x128xf32> to vector<16x128xbf16>
    %c0_46 = arith.constant 0 : index
    %c0_47 = arith.constant 0 : index
    %c640 = arith.constant 640 : index
    %148 = vector.load %arg4[%c0_46, %c0_47, %c640] : memref<2x128x768xbf16, #tpu.memory_space<vmem>>, vector<1x128x128xbf16>
    %149 = vector.shape_cast %148 : vector<1x128x128xbf16> to vector<128x128xbf16>
    %cst_48 = arith.constant dense<0.000000e+00> : vector<16x128xf32>
    %150 = tpu.matmul %147, %149, %cst_48 {dimension_numbers = #tpu.dot_dimension_numbers<[1], [0], [0], [1], [0, 0, 1, 1], [], []>} : vector<16x128xbf16>, vector<128x128xbf16>, vector<16x128xf32> -> vector<16x128xf32>
    %151 = vector.extract_strided_slice %11 {offsets = [7, 0], sizes = [1, 128], strides = [1, 1]} : vector<10x128xf32> to vector<1x128xf32>
    %152 = vector.broadcast %151 : vector<1x128xf32> to vector<16x128xf32>
    %153 = arith.addf %150, %152 : vector<16x128xf32>
    %154 = arith.addf %153, %137 : vector<16x128xf32>
    %155 = vector.extract_strided_slice %11 {offsets = [8, 0], sizes = [1, 128], strides = [1, 1]} : vector<10x128xf32> to vector<1x128xf32>
    %156 = vector.extract_strided_slice %11 {offsets = [9, 0], sizes = [1, 128], strides = [1, 1]} : vector<10x128xf32> to vector<1x128xf32>
    %cst_49 = arith.constant dense<0.000000e+00> : vector<16xf32>
    %157 = vector.multi_reduction <add>, %154, %cst_49 [1] : vector<16x128xf32> to vector<16xf32>
    %158 = vector.shape_cast %157 : vector<16xf32> to vector<16x1xf32>
    %cst_50 = arith.constant 1.280000e+02 : f32
    %159 = vector.broadcast %cst_50 : f32 to vector<16x1xf32>
    %160 = arith.divf %158, %159 : vector<16x1xf32>
    %161 = vector.broadcast %160 : vector<16x1xf32> to vector<16x128xf32>
    %162 = arith.subf %154, %161 : vector<16x128xf32>
    %163 = arith.mulf %162, %162 : vector<16x128xf32>
    %cst_51 = arith.constant dense<0.000000e+00> : vector<16xf32>
    %164 = vector.multi_reduction <add>, %163, %cst_51 [1] : vector<16x128xf32> to vector<16xf32>
    %165 = vector.shape_cast %164 : vector<16xf32> to vector<16x1xf32>
    %cst_52 = arith.constant 1.280000e+02 : f32
    %166 = vector.broadcast %cst_52 : f32 to vector<16x1xf32>
    %167 = arith.divf %165, %166 : vector<16x1xf32>
    %cst_53 = arith.constant 9.99999974E-6 : f32
    %168 = vector.broadcast %cst_53 : f32 to vector<16x1xf32>
    %169 = arith.addf %167, %168 : vector<16x1xf32>
    %170 = math.rsqrt %169 : vector<16x1xf32>
    %171 = vector.broadcast %170 : vector<16x1xf32> to vector<16x128xf32>
    %172 = arith.mulf %162, %171 : vector<16x128xf32>
    %173 = vector.broadcast %155 : vector<1x128xf32> to vector<16x128xf32>
    %174 = arith.mulf %172, %173 : vector<16x128xf32>
    %175 = vector.broadcast %156 : vector<1x128xf32> to vector<16x128xf32>
    %176 = arith.addf %174, %175 : vector<16x128xf32>
    %c1 = arith.constant 1 : index
    %c0_54 = arith.constant 0 : index
    %c0_55 = arith.constant 0 : index
    %177 = vector.load %arg5[%c1, %c0_54, %c0_55] : memref<2x10x128xf32, #tpu.memory_space<vmem>>, vector<1x10x128xf32>
    %178 = vector.shape_cast %177 : vector<1x10x128xf32> to vector<10x128xf32>
    %179 = arith.truncf %176 : vector<16x128xf32> to vector<16x128xbf16>
    %c1_56 = arith.constant 1 : index
    %c0_57 = arith.constant 0 : index
    %c0_58 = arith.constant 0 : index
    %180 = vector.load %arg4[%c1_56, %c0_57, %c0_58] : memref<2x128x768xbf16, #tpu.memory_space<vmem>>, vector<1x128x384xbf16>
    %181 = vector.shape_cast %180 : vector<1x128x384xbf16> to vector<128x384xbf16>
    %cst_59 = arith.constant dense<0.000000e+00> : vector<16x384xf32>
    %182 = tpu.matmul %179, %181, %cst_59 {dimension_numbers = #tpu.dot_dimension_numbers<[1], [0], [0], [1], [0, 0, 1, 1], [], []>} : vector<16x128xbf16>, vector<128x384xbf16>, vector<16x384xf32> -> vector<16x384xf32>
    %183 = vector.extract_strided_slice %182 {offsets = [0, 0], sizes = [16, 128], strides = [1, 1]} : vector<16x384xf32> to vector<16x128xf32>
    %184 = vector.extract_strided_slice %178 {offsets = [0, 0], sizes = [1, 128], strides = [1, 1]} : vector<10x128xf32> to vector<1x128xf32>
    %185 = vector.broadcast %184 : vector<1x128xf32> to vector<16x128xf32>
    %186 = arith.addf %183, %185 : vector<16x128xf32>
    %187 = arith.truncf %186 : vector<16x128xf32> to vector<16x128xbf16>
    %188 = vector.shape_cast %187 : vector<16x128xbf16> to vector<1x16x128xbf16>
    %189 = vector.extract_strided_slice %182 {offsets = [0, 128], sizes = [16, 128], strides = [1, 1]} : vector<16x384xf32> to vector<16x128xf32>
    %190 = vector.extract_strided_slice %178 {offsets = [1, 0], sizes = [1, 128], strides = [1, 1]} : vector<10x128xf32> to vector<1x128xf32>
    %191 = vector.broadcast %190 : vector<1x128xf32> to vector<16x128xf32>
    %192 = arith.addf %189, %191 : vector<16x128xf32>
    %193 = arith.truncf %192 : vector<16x128xf32> to vector<16x128xbf16>
    %194 = vector.shape_cast %193 : vector<16x128xbf16> to vector<1x16x128xbf16>
    %195 = vector.extract_strided_slice %182 {offsets = [0, 256], sizes = [16, 128], strides = [1, 1]} : vector<16x384xf32> to vector<16x128xf32>
    %196 = vector.extract_strided_slice %178 {offsets = [2, 0], sizes = [1, 128], strides = [1, 1]} : vector<10x128xf32> to vector<1x128xf32>
    %197 = vector.broadcast %196 : vector<1x128xf32> to vector<16x128xf32>
    %198 = arith.addf %195, %197 : vector<16x128xf32>
    %199 = arith.truncf %198 : vector<16x128xf32> to vector<16x128xbf16>
    %200 = vector.shape_cast %199 : vector<16x128xbf16> to vector<1x16x128xbf16>
    %201 = vector.extract_strided_slice %188 {offsets = [0, 0, 0], sizes = [1, 16, 32], strides = [1, 1, 1]} : vector<1x16x128xbf16> to vector<1x16x32xbf16>
    %202 = vector.extract_strided_slice %194 {offsets = [0, 0, 0], sizes = [1, 16, 32], strides = [1, 1, 1]} : vector<1x16x128xbf16> to vector<1x16x32xbf16>
    %203 = vector.extract_strided_slice %200 {offsets = [0, 0, 0], sizes = [1, 16, 32], strides = [1, 1, 1]} : vector<1x16x128xbf16> to vector<1x16x32xbf16>
    "tpu.trace_start"() <{level = 10 : i32, message = "bqd,bkd->bqk"}> : () -> ()
    %cst_60 = arith.constant dense<0.000000e+00> : vector<1x16x16xf32>
    %204 = tpu.matmul %201, %202, %cst_60 {dimension_numbers = #tpu.dot_dimension_numbers<[2], [2], [1], [1], [0, 0, 0, 1, 1, 1], [0], [0]>} : vector<1x16x32xbf16>, vector<1x16x32xbf16>, vector<1x16x16xf32> -> vector<1x16x16xf32>
    "tpu.trace_stop"() : () -> ()
    %cst_61 = arith.constant 0.176776692 : f32
    %205 = vector.broadcast %cst_61 : f32 to vector<1x16x16xf32>
    %206 = arith.mulf %204, %205 : vector<1x16x16xf32>
    %cst_62 = arith.constant dense<0xFF800000> : vector<1x16xf32>
    %207 = vector.multi_reduction <maximumf>, %206, %cst_62 [2] : vector<1x16x16xf32> to vector<1x16xf32>
    %208 = vector.shape_cast %207 : vector<1x16xf32> to vector<1x16x1xf32>
    %209 = vector.broadcast %208 : vector<1x16x1xf32> to vector<1x16x16xf32>
    %210 = arith.subf %206, %209 : vector<1x16x16xf32>
    %211 = math.exp %210 : vector<1x16x16xf32>
    %cst_63 = arith.constant dense<0.000000e+00> : vector<1x16xf32>
    %212 = vector.multi_reduction <add>, %211, %cst_63 [2] : vector<1x16x16xf32> to vector<1x16xf32>
    %213 = vector.shape_cast %212 : vector<1x16xf32> to vector<1x16x1xf32>
    %214 = tpu.reciprocal %213 : vector<1x16x1xf32> -> vector<1x16x1xf32>
    %215 = vector.broadcast %214 : vector<1x16x1xf32> to vector<1x16x16xf32>
    %216 = arith.mulf %211, %215 : vector<1x16x16xf32>
    %217 = arith.truncf %216 : vector<1x16x16xf32> to vector<1x16x16xbf16>
    "tpu.trace_start"() <{level = 10 : i32, message = "bqk,bkd->bqd"}> : () -> ()
    %cst_64 = arith.constant dense<0.000000e+00> : vector<1x16x32xf32>
    %218 = tpu.matmul %217, %203, %cst_64 {dimension_numbers = #tpu.dot_dimension_numbers<[2], [1], [1], [2], [0, 0, 0, 1, 1, 2], [0], [0]>} : vector<1x16x16xbf16>, vector<1x16x32xbf16>, vector<1x16x32xf32> -> vector<1x16x32xf32>
    "tpu.trace_stop"() : () -> ()
    %219 = vector.extract_strided_slice %188 {offsets = [0, 0, 32], sizes = [1, 16, 32], strides = [1, 1, 1]} : vector<1x16x128xbf16> to vector<1x16x32xbf16>
    %220 = vector.extract_strided_slice %194 {offsets = [0, 0, 32], sizes = [1, 16, 32], strides = [1, 1, 1]} : vector<1x16x128xbf16> to vector<1x16x32xbf16>
    %221 = vector.extract_strided_slice %200 {offsets = [0, 0, 32], sizes = [1, 16, 32], strides = [1, 1, 1]} : vector<1x16x128xbf16> to vector<1x16x32xbf16>
    "tpu.trace_start"() <{level = 10 : i32, message = "bqd,bkd->bqk"}> : () -> ()
    %cst_65 = arith.constant dense<0.000000e+00> : vector<1x16x16xf32>
    %222 = tpu.matmul %219, %220, %cst_65 {dimension_numbers = #tpu.dot_dimension_numbers<[2], [2], [1], [1], [0, 0, 0, 1, 1, 1], [0], [0]>} : vector<1x16x32xbf16>, vector<1x16x32xbf16>, vector<1x16x16xf32> -> vector<1x16x16xf32>
    "tpu.trace_stop"() : () -> ()
    %cst_66 = arith.constant 0.176776692 : f32
    %223 = vector.broadcast %cst_66 : f32 to vector<1x16x16xf32>
    %224 = arith.mulf %222, %223 : vector<1x16x16xf32>
    %cst_67 = arith.constant dense<0xFF800000> : vector<1x16xf32>
    %225 = vector.multi_reduction <maximumf>, %224, %cst_67 [2] : vector<1x16x16xf32> to vector<1x16xf32>
    %226 = vector.shape_cast %225 : vector<1x16xf32> to vector<1x16x1xf32>
    %227 = vector.broadcast %226 : vector<1x16x1xf32> to vector<1x16x16xf32>
    %228 = arith.subf %224, %227 : vector<1x16x16xf32>
    %229 = math.exp %228 : vector<1x16x16xf32>
    %cst_68 = arith.constant dense<0.000000e+00> : vector<1x16xf32>
    %230 = vector.multi_reduction <add>, %229, %cst_68 [2] : vector<1x16x16xf32> to vector<1x16xf32>
    %231 = vector.shape_cast %230 : vector<1x16xf32> to vector<1x16x1xf32>
    %232 = tpu.reciprocal %231 : vector<1x16x1xf32> -> vector<1x16x1xf32>
    %233 = vector.broadcast %232 : vector<1x16x1xf32> to vector<1x16x16xf32>
    %234 = arith.mulf %229, %233 : vector<1x16x16xf32>
    %235 = arith.truncf %234 : vector<1x16x16xf32> to vector<1x16x16xbf16>
    "tpu.trace_start"() <{level = 10 : i32, message = "bqk,bkd->bqd"}> : () -> ()
    %cst_69 = arith.constant dense<0.000000e+00> : vector<1x16x32xf32>
    %236 = tpu.matmul %235, %221, %cst_69 {dimension_numbers = #tpu.dot_dimension_numbers<[2], [1], [1], [2], [0, 0, 0, 1, 1, 2], [0], [0]>} : vector<1x16x16xbf16>, vector<1x16x32xbf16>, vector<1x16x32xf32> -> vector<1x16x32xf32>
    "tpu.trace_stop"() : () -> ()
    %237 = vector.extract_strided_slice %188 {offsets = [0, 0, 64], sizes = [1, 16, 32], strides = [1, 1, 1]} : vector<1x16x128xbf16> to vector<1x16x32xbf16>
    %238 = vector.extract_strided_slice %194 {offsets = [0, 0, 64], sizes = [1, 16, 32], strides = [1, 1, 1]} : vector<1x16x128xbf16> to vector<1x16x32xbf16>
    %239 = vector.extract_strided_slice %200 {offsets = [0, 0, 64], sizes = [1, 16, 32], strides = [1, 1, 1]} : vector<1x16x128xbf16> to vector<1x16x32xbf16>
    "tpu.trace_start"() <{level = 10 : i32, message = "bqd,bkd->bqk"}> : () -> ()
    %cst_70 = arith.constant dense<0.000000e+00> : vector<1x16x16xf32>
    %240 = tpu.matmul %237, %238, %cst_70 {dimension_numbers = #tpu.dot_dimension_numbers<[2], [2], [1], [1], [0, 0, 0, 1, 1, 1], [0], [0]>} : vector<1x16x32xbf16>, vector<1x16x32xbf16>, vector<1x16x16xf32> -> vector<1x16x16xf32>
    "tpu.trace_stop"() : () -> ()
    %cst_71 = arith.constant 0.176776692 : f32
    %241 = vector.broadcast %cst_71 : f32 to vector<1x16x16xf32>
    %242 = arith.mulf %240, %241 : vector<1x16x16xf32>
    %cst_72 = arith.constant dense<0xFF800000> : vector<1x16xf32>
    %243 = vector.multi_reduction <maximumf>, %242, %cst_72 [2] : vector<1x16x16xf32> to vector<1x16xf32>
    %244 = vector.shape_cast %243 : vector<1x16xf32> to vector<1x16x1xf32>
    %245 = vector.broadcast %244 : vector<1x16x1xf32> to vector<1x16x16xf32>
    %246 = arith.subf %242, %245 : vector<1x16x16xf32>
    %247 = math.exp %246 : vector<1x16x16xf32>
    %cst_73 = arith.constant dense<0.000000e+00> : vector<1x16xf32>
    %248 = vector.multi_reduction <add>, %247, %cst_73 [2] : vector<1x16x16xf32> to vector<1x16xf32>
    %249 = vector.shape_cast %248 : vector<1x16xf32> to vector<1x16x1xf32>
    %250 = tpu.reciprocal %249 : vector<1x16x1xf32> -> vector<1x16x1xf32>
    %251 = vector.broadcast %250 : vector<1x16x1xf32> to vector<1x16x16xf32>
    %252 = arith.mulf %247, %251 : vector<1x16x16xf32>
    %253 = arith.truncf %252 : vector<1x16x16xf32> to vector<1x16x16xbf16>
    "tpu.trace_start"() <{level = 10 : i32, message = "bqk,bkd->bqd"}> : () -> ()
    %cst_74 = arith.constant dense<0.000000e+00> : vector<1x16x32xf32>
    %254 = tpu.matmul %253, %239, %cst_74 {dimension_numbers = #tpu.dot_dimension_numbers<[2], [1], [1], [2], [0, 0, 0, 1, 1, 2], [0], [0]>} : vector<1x16x16xbf16>, vector<1x16x32xbf16>, vector<1x16x32xf32> -> vector<1x16x32xf32>
    "tpu.trace_stop"() : () -> ()
    %255 = vector.extract_strided_slice %188 {offsets = [0, 0, 96], sizes = [1, 16, 32], strides = [1, 1, 1]} : vector<1x16x128xbf16> to vector<1x16x32xbf16>
    %256 = vector.extract_strided_slice %194 {offsets = [0, 0, 96], sizes = [1, 16, 32], strides = [1, 1, 1]} : vector<1x16x128xbf16> to vector<1x16x32xbf16>
    %257 = vector.extract_strided_slice %200 {offsets = [0, 0, 96], sizes = [1, 16, 32], strides = [1, 1, 1]} : vector<1x16x128xbf16> to vector<1x16x32xbf16>
    "tpu.trace_start"() <{level = 10 : i32, message = "bqd,bkd->bqk"}> : () -> ()
    %cst_75 = arith.constant dense<0.000000e+00> : vector<1x16x16xf32>
    %258 = tpu.matmul %255, %256, %cst_75 {dimension_numbers = #tpu.dot_dimension_numbers<[2], [2], [1], [1], [0, 0, 0, 1, 1, 1], [0], [0]>} : vector<1x16x32xbf16>, vector<1x16x32xbf16>, vector<1x16x16xf32> -> vector<1x16x16xf32>
    "tpu.trace_stop"() : () -> ()
    %cst_76 = arith.constant 0.176776692 : f32
    %259 = vector.broadcast %cst_76 : f32 to vector<1x16x16xf32>
    %260 = arith.mulf %258, %259 : vector<1x16x16xf32>
    %cst_77 = arith.constant dense<0xFF800000> : vector<1x16xf32>
    %261 = vector.multi_reduction <maximumf>, %260, %cst_77 [2] : vector<1x16x16xf32> to vector<1x16xf32>
    %262 = vector.shape_cast %261 : vector<1x16xf32> to vector<1x16x1xf32>
    %263 = vector.broadcast %262 : vector<1x16x1xf32> to vector<1x16x16xf32>
    %264 = arith.subf %260, %263 : vector<1x16x16xf32>
    %265 = math.exp %264 : vector<1x16x16xf32>
    %cst_78 = arith.constant dense<0.000000e+00> : vector<1x16xf32>
    %266 = vector.multi_reduction <add>, %265, %cst_78 [2] : vector<1x16x16xf32> to vector<1x16xf32>
    %267 = vector.shape_cast %266 : vector<1x16xf32> to vector<1x16x1xf32>
    %268 = tpu.reciprocal %267 : vector<1x16x1xf32> -> vector<1x16x1xf32>
    %269 = vector.broadcast %268 : vector<1x16x1xf32> to vector<1x16x16xf32>
    %270 = arith.mulf %265, %269 : vector<1x16x16xf32>
    %271 = arith.truncf %270 : vector<1x16x16xf32> to vector<1x16x16xbf16>
    "tpu.trace_start"() <{level = 10 : i32, message = "bqk,bkd->bqd"}> : () -> ()
    %cst_79 = arith.constant dense<0.000000e+00> : vector<1x16x32xf32>
    %272 = tpu.matmul %271, %257, %cst_79 {dimension_numbers = #tpu.dot_dimension_numbers<[2], [1], [1], [2], [0, 0, 0, 1, 1, 2], [0], [0]>} : vector<1x16x16xbf16>, vector<1x16x32xbf16>, vector<1x16x32xf32> -> vector<1x16x32xf32>
    "tpu.trace_stop"() : () -> ()
    %273 = tpu.concatenate %218, %236, %254, %272 in 2 : vector<1x16x32xf32>, vector<1x16x32xf32>, vector<1x16x32xf32>, vector<1x16x32xf32> -> vector<1x16x128xf32>
    %274 = vector.shape_cast %273 : vector<1x16x128xf32> to vector<16x128xf32>
    %275 = arith.truncf %274 : vector<16x128xf32> to vector<16x128xbf16>
    %c1_80 = arith.constant 1 : index
    %c0_81 = arith.constant 0 : index
    %c384_82 = arith.constant 384 : index
    %276 = vector.load %arg4[%c1_80, %c0_81, %c384_82] : memref<2x128x768xbf16, #tpu.memory_space<vmem>>, vector<1x128x128xbf16>
    %277 = vector.shape_cast %276 : vector<1x128x128xbf16> to vector<128x128xbf16>
    %cst_83 = arith.constant dense<0.000000e+00> : vector<16x128xf32>
    %278 = tpu.matmul %275, %277, %cst_83 {dimension_numbers = #tpu.dot_dimension_numbers<[1], [0], [0], [1], [0, 0, 1, 1], [], []>} : vector<16x128xbf16>, vector<128x128xbf16>, vector<16x128xf32> -> vector<16x128xf32>
    %279 = vector.extract_strided_slice %178 {offsets = [3, 0], sizes = [1, 128], strides = [1, 1]} : vector<10x128xf32> to vector<1x128xf32>
    %280 = vector.broadcast %279 : vector<1x128xf32> to vector<16x128xf32>
    %281 = arith.addf %278, %280 : vector<16x128xf32>
    %282 = arith.addf %281, %176 : vector<16x128xf32>
    %283 = vector.extract_strided_slice %178 {offsets = [4, 0], sizes = [1, 128], strides = [1, 1]} : vector<10x128xf32> to vector<1x128xf32>
    %284 = vector.extract_strided_slice %178 {offsets = [5, 0], sizes = [1, 128], strides = [1, 1]} : vector<10x128xf32> to vector<1x128xf32>
    %cst_84 = arith.constant dense<0.000000e+00> : vector<16xf32>
    %285 = vector.multi_reduction <add>, %282, %cst_84 [1] : vector<16x128xf32> to vector<16xf32>
    %286 = vector.shape_cast %285 : vector<16xf32> to vector<16x1xf32>
    %cst_85 = arith.constant 1.280000e+02 : f32
    %287 = vector.broadcast %cst_85 : f32 to vector<16x1xf32>
    %288 = arith.divf %286, %287 : vector<16x1xf32>
    %289 = vector.broadcast %288 : vector<16x1xf32> to vector<16x128xf32>
    %290 = arith.subf %282, %289 : vector<16x128xf32>
    %291 = arith.mulf %290, %290 : vector<16x128xf32>
    %cst_86 = arith.constant dense<0.000000e+00> : vector<16xf32>
    %292 = vector.multi_reduction <add>, %291, %cst_86 [1] : vector<16x128xf32> to vector<16xf32>
    %293 = vector.shape_cast %292 : vector<16xf32> to vector<16x1xf32>
    %cst_87 = arith.constant 1.280000e+02 : f32
    %294 = vector.broadcast %cst_87 : f32 to vector<16x1xf32>
    %295 = arith.divf %293, %294 : vector<16x1xf32>
    %cst_88 = arith.constant 9.99999974E-6 : f32
    %296 = vector.broadcast %cst_88 : f32 to vector<16x1xf32>
    %297 = arith.addf %295, %296 : vector<16x1xf32>
    %298 = math.rsqrt %297 : vector<16x1xf32>
    %299 = vector.broadcast %298 : vector<16x1xf32> to vector<16x128xf32>
    %300 = arith.mulf %290, %299 : vector<16x128xf32>
    %301 = vector.broadcast %283 : vector<1x128xf32> to vector<16x128xf32>
    %302 = arith.mulf %300, %301 : vector<16x128xf32>
    %303 = vector.broadcast %284 : vector<1x128xf32> to vector<16x128xf32>
    %304 = arith.addf %302, %303 : vector<16x128xf32>
    %305 = arith.truncf %304 : vector<16x128xf32> to vector<16x128xbf16>
    %c1_89 = arith.constant 1 : index
    %c0_90 = arith.constant 0 : index
    %c512_91 = arith.constant 512 : index
    %306 = vector.load %arg4[%c1_89, %c0_90, %c512_91] : memref<2x128x768xbf16, #tpu.memory_space<vmem>>, vector<1x128x128xbf16>
    %307 = vector.shape_cast %306 : vector<1x128x128xbf16> to vector<128x128xbf16>
    %cst_92 = arith.constant dense<0.000000e+00> : vector<16x128xf32>
    %308 = tpu.matmul %305, %307, %cst_92 {dimension_numbers = #tpu.dot_dimension_numbers<[1], [0], [0], [1], [0, 0, 1, 1], [], []>} : vector<16x128xbf16>, vector<128x128xbf16>, vector<16x128xf32> -> vector<16x128xf32>
    %309 = vector.extract_strided_slice %178 {offsets = [6, 0], sizes = [1, 128], strides = [1, 1]} : vector<10x128xf32> to vector<1x128xf32>
    %310 = vector.broadcast %309 : vector<1x128xf32> to vector<16x128xf32>
    %311 = arith.addf %308, %310 : vector<16x128xf32>
    %cst_93 = arith.constant 0.000000e+00 : f32
    %312 = vector.broadcast %cst_93 : f32 to vector<16x128xf32>
    %313 = arith.maximumf %311, %312 : vector<16x128xf32>
    %314 = arith.truncf %313 : vector<16x128xf32> to vector<16x128xbf16>
    %c1_94 = arith.constant 1 : index
    %c0_95 = arith.constant 0 : index
    %c640_96 = arith.constant 640 : index
    %315 = vector.load %arg4[%c1_94, %c0_95, %c640_96] : memref<2x128x768xbf16, #tpu.memory_space<vmem>>, vector<1x128x128xbf16>
    %316 = vector.shape_cast %315 : vector<1x128x128xbf16> to vector<128x128xbf16>
    %cst_97 = arith.constant dense<0.000000e+00> : vector<16x128xf32>
    %317 = tpu.matmul %314, %316, %cst_97 {dimension_numbers = #tpu.dot_dimension_numbers<[1], [0], [0], [1], [0, 0, 1, 1], [], []>} : vector<16x128xbf16>, vector<128x128xbf16>, vector<16x128xf32> -> vector<16x128xf32>
    %318 = vector.extract_strided_slice %178 {offsets = [7, 0], sizes = [1, 128], strides = [1, 1]} : vector<10x128xf32> to vector<1x128xf32>
    %319 = vector.broadcast %318 : vector<1x128xf32> to vector<16x128xf32>
    %320 = arith.addf %317, %319 : vector<16x128xf32>
    %321 = arith.addf %320, %304 : vector<16x128xf32>
    %322 = vector.extract_strided_slice %178 {offsets = [8, 0], sizes = [1, 128], strides = [1, 1]} : vector<10x128xf32> to vector<1x128xf32>
    %323 = vector.extract_strided_slice %178 {offsets = [9, 0], sizes = [1, 128], strides = [1, 1]} : vector<10x128xf32> to vector<1x128xf32>
    %cst_98 = arith.constant dense<0.000000e+00> : vector<16xf32>
    %324 = vector.multi_reduction <add>, %321, %cst_98 [1] : vector<16x128xf32> to vector<16xf32>
    %325 = vector.shape_cast %324 : vector<16xf32> to vector<16x1xf32>
    %cst_99 = arith.constant 1.280000e+02 : f32
    %326 = vector.broadcast %cst_99 : f32 to vector<16x1xf32>
    %327 = arith.divf %325, %326 : vector<16x1xf32>
    %328 = vector.broadcast %327 : vector<16x1xf32> to vector<16x128xf32>
    %329 = arith.subf %321, %328 : vector<16x128xf32>
    %330 = arith.mulf %329, %329 : vector<16x128xf32>
    %cst_100 = arith.constant dense<0.000000e+00> : vector<16xf32>
    %331 = vector.multi_reduction <add>, %330, %cst_100 [1] : vector<16x128xf32> to vector<16xf32>
    %332 = vector.shape_cast %331 : vector<16xf32> to vector<16x1xf32>
    %cst_101 = arith.constant 1.280000e+02 : f32
    %333 = vector.broadcast %cst_101 : f32 to vector<16x1xf32>
    %334 = arith.divf %332, %333 : vector<16x1xf32>
    %cst_102 = arith.constant 9.99999974E-6 : f32
    %335 = vector.broadcast %cst_102 : f32 to vector<16x1xf32>
    %336 = arith.addf %334, %335 : vector<16x1xf32>
    %337 = math.rsqrt %336 : vector<16x1xf32>
    %338 = vector.broadcast %337 : vector<16x1xf32> to vector<16x128xf32>
    %339 = arith.mulf %329, %338 : vector<16x128xf32>
    %340 = vector.broadcast %322 : vector<1x128xf32> to vector<16x128xf32>
    %341 = arith.mulf %339, %340 : vector<16x128xf32>
    %342 = vector.broadcast %323 : vector<1x128xf32> to vector<16x128xf32>
    %343 = arith.addf %341, %342 : vector<16x128xf32>
    %344 = arith.truncf %343 : vector<16x128xf32> to vector<16x128xbf16>
    %c0_103 = arith.constant 0 : index
    %c0_104 = arith.constant 0 : index
    %345 = vector.load %arg6[%c0_103, %c0_104] : memref<128x128xbf16, #tpu.memory_space<vmem>>, vector<128x128xbf16>
    %cst_105 = arith.constant dense<0.000000e+00> : vector<16x128xf32>
    %346 = tpu.matmul %344, %345, %cst_105 {dimension_numbers = #tpu.dot_dimension_numbers<[1], [0], [0], [1], [0, 0, 1, 1], [], []>} : vector<16x128xbf16>, vector<128x128xbf16>, vector<16x128xf32> -> vector<16x128xf32>
    %c0_106 = arith.constant 0 : index
    %c0_107 = arith.constant 0 : index
    %347 = vector.load %arg7[%c0_106, %c0_107] : memref<1x128xf32, #tpu.memory_space<vmem>>, vector<1x128xf32>
    %348 = vector.broadcast %347 : vector<1x128xf32> to vector<16x128xf32>
    %349 = arith.addf %346, %348 : vector<16x128xf32>
    %350 = vector.shape_cast %349 : vector<16x128xf32> to vector<1x16x128xf32>
    %c0_108 = arith.constant 0 : index
    %c0_109 = arith.constant 0 : index
    %c0_110 = arith.constant 0 : index
    %351 = vector.load %arg8[%c0_108, %c0_109, %c0_110] : memref<1x16x128xf32, #tpu.memory_space<vmem>>, vector<1x16x128xf32>
    tpu.vector_store %arg8[%c0_108, %c0_109, %c0_110], %350 {strides = array<i32>} : memref<1x16x128xf32, #tpu.memory_space<vmem>>, vector<1x16x128xf32>,
    return
  }
  func.func @transform_0(%arg0: i32) -> (i32, i32, i32) {
    %c0_i32 = arith.constant 0 : i32
    %c0_i32_0 = arith.constant 0 : i32
    %c0_i32_1 = arith.constant 0 : i32
    return %arg0, %c0_i32, %c0_i32_0 : i32, i32, i32
  }
  func.func @transform_1(%arg0: i32) -> (i32, i32) {
    %c0_i32 = arith.constant 0 : i32
    %c0_i32_0 = arith.constant 0 : i32
    %c0_i32_1 = arith.constant 0 : i32
    return %c0_i32, %c0_i32_0 : i32, i32
  }
  func.func @transform_2(%arg0: i32) -> (i32, i32) {
    %c0_i32 = arith.constant 0 : i32
    %c0_i32_0 = arith.constant 0 : i32
    %c0_i32_1 = arith.constant 0 : i32
    return %c0_i32, %c0_i32_0 : i32, i32
  }
  func.func @transform_3(%arg0: i32) -> (i32, i32, i32) {
    %c0_i32 = arith.constant 0 : i32
    %c0_i32_0 = arith.constant 0 : i32
    %c0_i32_1 = arith.constant 0 : i32
    %c0_i32_2 = arith.constant 0 : i32
    return %c0_i32, %c0_i32_0, %c0_i32_1 : i32, i32, i32
  }
  func.func @transform_4(%arg0: i32) -> (i32, i32, i32) {
    %c0_i32 = arith.constant 0 : i32
    %c0_i32_0 = arith.constant 0 : i32
    %c0_i32_1 = arith.constant 0 : i32
    %c0_i32_2 = arith.constant 0 : i32
    return %c0_i32, %c0_i32_0, %c0_i32_1 : i32, i32, i32
  }
  func.func @transform_5(%arg0: i32) -> (i32, i32) {
    %c0_i32 = arith.constant 0 : i32
    %c0_i32_0 = arith.constant 0 : i32
    %c0_i32_1 = arith.constant 0 : i32
    return %c0_i32, %c0_i32_0 : i32, i32
  }
  func.func @transform_6(%arg0: i32) -> (i32, i32) {
    %c0_i32 = arith.constant 0 : i32
    %c0_i32_0 = arith.constant 0 : i32
    %c0_i32_1 = arith.constant 0 : i32
    return %c0_i32, %c0_i32_0 : i32, i32
  }
  func.func @transform_7(%arg0: i32) -> (i32, i32, i32) {
    %c0_i32 = arith.constant 0 : i32
    %c0_i32_0 = arith.constant 0 : i32
    %c0_i32_1 = arith.constant 0 : i32
    return %arg0, %c0_i32, %c0_i32_0 : i32, i32, i32
  }
}

</mosaic_0001>

<llo_original>
// kernel: whole_sequence_model_forward.1
$region0: #{whole_sequence_model_forward.1}
  #allocation0 [shape = 'u32[]', space=smem, size = 0x4, offset = 0x4, fixed_abs, tag = 'smem constant byte address 0x4 - core index']
  #allocation1 [shape = 'u32[144,128]{1,0:T(1,128)}', space=vmem, size = 0x12000, scoped, tag = 'internal scratch']
  %s0 = inlined_call_operand.vmem [shape: f32[2,16,8], index: 0, kind: input, shape index: {}]
  %s1 = inlined_call_operand.vmem [shape: bf16[8,128], index: 1, kind: input, shape index: {}]
  %s2 = inlined_call_operand.vmem [shape: f32[1,128], index: 2, kind: input, shape index: {}]
  %s3 = inlined_call_operand.hbm [shape: bf16[2,128,768], index: 3, kind: input, shape index: {}]
  %s4 = inlined_call_operand.vmem [shape: f32[2,10,128], index: 4, kind: input, shape index: {}]
  %s5 = inlined_call_operand.vmem [shape: bf16[128,128], index: 5, kind: input, shape index: {}]
  %s6 = inlined_call_operand.vmem [shape: f32[1,128], index: 6, kind: input, shape index: {}]
  %s7 = inlined_call_operand.vmem [shape: f32[2,16,128], index: 7, kind: output, shape index: {}]
  %s8 = sld [smem:[#allocation0]]
  $region65: #{whole_sequence_model_forward.1} parent=0
    _
  %s10 = ssub.s32 1, %s8
  %s11 = scalar_select 0, %s10, %s8
  $region1: #{whole_sequence_model_forward.1} parent=0
    #allocation2 [shape = 'u8[393216]{0}', space=vmem, size = 0x60000, scoped, tag = 'input window, operand 3, single buffered']
    #allocation3 [shape = 's32[2]{0}', space=sflag, size = 0x8, scoped, tag = 'scoped memory for whole_sequence_model_forward.1']
    %12 = vsyncpa [#allocation3], 0
    loop: start=0, step=1, limit=4
    $region2: #{whole_sequence_model_forward.1} parent=1 // loop_pre_header
      _
    $region3: #{whole_sequence_model_forward.1} parent=1 // loop_header
      %s14 = sphi 0, %s18
      %p15 = scmp.ge.s32.totalorder %s14, 4
      %s24 = sphi 0, %s26
      %s27 = sphi 0, %s24
      %s28 = sphi 0, %s27
      %s44 = sphi 0, %s28
      %s48 = sphi 0, %s48
      %s50 = sphi 0, %s48
      %s51 = sphi 0, %s50
      %s65 = sphi 0, %s51
      %s69 = sphi 0, %s69
      %s71 = sphi 0, %s69
      %s72 = sphi 0, %s71
      %s86 = sphi 0, %s72
      %s90 = sphi 0, %s90
      %s92 = sphi 0, %s90
      %s93 = sphi 0, %s92
      %s107 = sphi 0, %s93
      %s111 = sphi 0, %s111
      %s113 = sphi 0, %s111
      %s114 = sphi 0, %s113
      %s128 = sphi 0, %s114
      %s132 = sphi 0, %s132
      %s134 = sphi 0, %s132
      %s135 = sphi 0, %s134
      %s149 = sphi 0, %s135
      %s153 = sphi 0, %s153
      %s155 = sphi 0, %s153
      %s156 = sphi 0, %s155
      %s170 = sphi 0, %s156
      %s176 = sphi 0, %s178
      %s179 = sphi 0, %s176
      %s180 = sphi 0, %s179
      %s196 = sphi 0, %s180
    $region4: #{whole_sequence_model_forward.1} parent=1 // loop_header_branch
      %17 = sbr.rel (%p15) target = $region8
    $region5: #{whole_sequence_model_forward.1} parent=1 // loop_body
      %s19 = ssub.s32 %s14, 1
      %s20 = ssub.s32 %s14, 2
      %s21 = sadd.s32 %s14, 1
      %s22 = ssub.s32 %s14, %s21
      %p23 = scmp.eq.s32.totalorder %s22, 0
      %s25 = sadd.s32 %s24, 1
      %s26 = scalar_select %p23, %s24, %s25
      %p29 = pneg %p23
      %p30 = scmp.eq.s32.totalorder %s14, 1
      %p31 = por %p29, %p30
      %p32 = scmp.ne.s32.totalorder %s24, %s27
      %p33 = scmp.eq.s32.totalorder %s14, 0
      %p34 = por %p32, %p33
      %p35 = scmp.ne.s32.totalorder %s24, %s27
      %p36 = scmp.eq.s32.totalorder %s19, 1
      %p37 = por %p35, %p36
      %p38 = scmp.ne.s32.totalorder %s27, %s28
      %p39 = scmp.eq.s32.totalorder %s19, 0
      %p40 = por %p38, %p39
      %p41 = scmp.ne.s32.totalorder %s27, %s28
      %p42 = scmp.eq.s32.totalorder %s20, 1
      %p43 = por %p41, %p42
      %p45 = scmp.ne.s32.totalorder %s28, %s44
      %p46 = scmp.eq.s32.totalorder %s20, 0
      %p47 = por %p45, %p46
      %s49 = sadd.s32 %s48, 1
      %p52 = scmp.eq.s32.totalorder %s14, 1
      %p53 = scmp.ne.s32.totalorder %s48, %s50
      %p54 = scmp.eq.s32.totalorder %s14, 0
      %p55 = por %p53, %p54
      %p56 = scmp.ne.s32.totalorder %s48, %s50
      %p57 = scmp.eq.s32.totalorder %s19, 1
      %p58 = por %p56, %p57
      %p59 = scmp.ne.s32.totalorder %s50, %s51
      %p60 = scmp.eq.s32.totalorder %s19, 0
      %p61 = por %p59, %p60
      %p62 = scmp.ne.s32.totalorder %s50, %s51
      %p63 = scmp.eq.s32.totalorder %s20, 1
      %p64 = por %p62, %p63
      %p66 = scmp.ne.s32.totalorder %s51, %s65
      %p67 = scmp.eq.s32.totalorder %s20, 0
      %p68 = por %p66, %p67
      %s70 = sadd.s32 %s69, 1
      %p73 = scmp.eq.s32.totalorder %s14, 1
      %p74 = scmp.ne.s32.totalorder %s69, %s71
      %p75 = scmp.eq.s32.totalorder %s14, 0
      %p76 = por %p74, %p75
      %p77 = scmp.ne.s32.totalorder %s69, %s71
      %p78 = scmp.eq.s32.totalorder %s19, 1
      %p79 = por %p77, %p78
      %p80 = scmp.ne.s32.totalorder %s71, %s72
      %p81 = scmp.eq.s32.totalorder %s19, 0
      %p82 = por %p80, %p81
      %p83 = scmp.ne.s32.totalorder %s71, %s72
      %p84 = scmp.eq.s32.totalorder %s20, 1
      %p85 = por %p83, %p84
      %p87 = scmp.ne.s32.totalorder %s72, %s86
      %p88 = scmp.eq.s32.totalorder %s20, 0
      %p89 = por %p87, %p88
      %s91 = sadd.s32 %s90, 1
      %p94 = scmp.eq.s32.totalorder %s14, 1
      %p95 = scmp.ne.s32.totalorder %s90, %s92
      %p96 = scmp.eq.s32.totalorder %s14, 0
      %p97 = por %p95, %p96
      %p98 = scmp.ne.s32.totalorder %s90, %s92
      %p99 = scmp.eq.s32.totalorder %s19, 1
      %p100 = por %p98, %p99
      %p101 = scmp.ne.s32.totalorder %s92, %s93
      %p102 = scmp.eq.s32.totalorder %s19, 0
      %p103 = por %p101, %p102
      %p104 = scmp.ne.s32.totalorder %s92, %s93
      %p105 = scmp.eq.s32.totalorder %s20, 1
      %p106 = por %p104, %p105
      %p108 = scmp.ne.s32.totalorder %s93, %s107
      %p109 = scmp.eq.s32.totalorder %s20, 0
      %p110 = por %p108, %p109
      %s112 = sadd.s32 %s111, 1
      %p115 = scmp.eq.s32.totalorder %s14, 1
      %p116 = scmp.ne.s32.totalorder %s111, %s113
      %p117 = scmp.eq.s32.totalorder %s14, 0
      %p118 = por %p116, %p117
      %p119 = scmp.ne.s32.totalorder %s111, %s113
      %p120 = scmp.eq.s32.totalorder %s19, 1
      %p121 = por %p119, %p120
      %p122 = scmp.ne.s32.totalorder %s113, %s114
      %p123 = scmp.eq.s32.totalorder %s19, 0
      %p124 = por %p122, %p123
      %p125 = scmp.ne.s32.totalorder %s113, %s114
      %p126 = scmp.eq.s32.totalorder %s20, 1
      %p127 = por %p125, %p126
      %p129 = scmp.ne.s32.totalorder %s114, %s128
      %p130 = scmp.eq.s32.totalorder %s20, 0
      %p131 = por %p129, %p130
      %s133 = sadd.s32 %s132, 1
      %p136 = scmp.eq.s32.totalorder %s14, 1
      %p137 = scmp.ne.s32.totalorder %s132, %s134
      %p138 = scmp.eq.s32.totalorder %s14, 0
      %p139 = por %p137, %p138
      %p140 = scmp.ne.s32.totalorder %s132, %s134
      %p141 = scmp.eq.s32.totalorder %s19, 1
      %p142 = por %p140, %p141
      %p143 = scmp.ne.s32.totalorder %s134, %s135
      %p144 = scmp.eq.s32.totalorder %s19, 0
      %p145 = por %p143, %p144
      %p146 = scmp.ne.s32.totalorder %s134, %s135
      %p147 = scmp.eq.s32.totalorder %s20, 1
      %p148 = por %p146, %p147
      %p150 = scmp.ne.s32.totalorder %s135, %s149
      %p151 = scmp.eq.s32.totalorder %s20, 0
      %p152 = por %p150, %p151
      %s154 = sadd.s32 %s153, 1
      %p157 = scmp.eq.s32.totalorder %s14, 1
      %p158 = scmp.ne.s32.totalorder %s153, %s155
      %p159 = scmp.eq.s32.totalorder %s14, 0
      %p160 = por %p158, %p159
      %p161 = scmp.ne.s32.totalorder %s153, %s155
      %p162 = scmp.eq.s32.totalorder %s19, 1
      %p163 = por %p161, %p162
      %p164 = scmp.ne.s32.totalorder %s155, %s156
      %p165 = scmp.eq.s32.totalorder %s19, 0
      %p166 = por %p164, %p165
      %p167 = scmp.ne.s32.totalorder %s155, %s156
      %p168 = scmp.eq.s32.totalorder %s20, 1
      %p169 = por %p167, %p168
      %p171 = scmp.ne.s32.totalorder %s156, %s170
      %p172 = scmp.eq.s32.totalorder %s20, 0
      %p173 = por %p171, %p172
      %s174 = ssub.s32 %s14, %s21
      %p175 = scmp.eq.s32.totalorder %s174, 0
      %s177 = sadd.s32 %s176, 1
      %s178 = scalar_select %p175, %s176, %s177
      %p181 = pneg %p175
      %p182 = scmp.eq.s32.totalorder %s14, 1
      %p183 = por %p181, %p182
      %p184 = scmp.ne.s32.totalorder %s176, %s179
      %p185 = scmp.eq.s32.totalorder %s14, 0
      %p186 = por %p184, %p185
      %p187 = scmp.ne.s32.totalorder %s176, %s179
      %p188 = scmp.eq.s32.totalorder %s19, 1
      %p189 = por %p187, %p188
      %p190 = scmp.ne.s32.totalorder %s179, %s180
      %p191 = scmp.eq.s32.totalorder %s19, 0
      %p192 = por %p190, %p191
      %p193 = scmp.ne.s32.totalorder %s179, %s180
      %p194 = scmp.eq.s32.totalorder %s20, 1
      %p195 = por %p193, %p194
      %p197 = scmp.ne.s32.totalorder %s180, %s196
      %p198 = scmp.eq.s32.totalorder %s20, 0
      %p199 = por %p197, %p198
      %p200 = scmp.le.s32.totalorder 1, %s14
      %p201 = scmp.lt.s32.totalorder %s14, 3
      %p202 = pnand %p200, %p201
      %p203 = pneg %p202
      // Predicated region
      $region9: #{whole_sequence_model_forward.1} parent=5 // pred_check
        _
      $region10: #{whole_sequence_model_forward.1} parent=5 // pred_check_branch
        %205 = sbr.rel (%p202) target = $region12
      $region11: #{whole_sequence_model_forward.1} parent=5 // pred_region
        %s206 = ssub.s32 %s14, 1
        // Predicated region
        $region13: #{whole_sequence_model_forward.1} parent=11 // pred_check
          %p207 = pneg %p61
        $region14: #{whole_sequence_model_forward.1} parent=11 // pred_check_branch
          %209 = sbr.rel (%p207) target = $region16
        $region15: #{whole_sequence_model_forward.1} parent=11 // pred_region
          _
        $region16: #{whole_sequence_model_forward.1} parent=11 // pred_fallthru
          _
        // Predicated region
        $region17: #{whole_sequence_model_forward.1} parent=11 // pred_check
          %p210 = pneg %p82
        $region18: #{whole_sequence_model_forward.1} parent=11 // pred_check_branch
          %212 = sbr.rel (%p210) target = $region20
        $region19: #{whole_sequence_model_forward.1} parent=11 // pred_region
          _
        $region20: #{whole_sequence_model_forward.1} parent=11 // pred_fallthru
          _
        // Predicated region
        $region21: #{whole_sequence_model_forward.1} parent=11 // pred_check
          %p213 = pneg %p103
        $region22: #{whole_sequence_model_forward.1} parent=11 // pred_check_branch
          %215 = sbr.rel (%p213) target = $region24
        $region23: #{whole_sequence_model_forward.1} parent=11 // pred_region
          %s217 = ssub.s32 12288, 12288
          %218 = vsyncadd [#allocation3], %s217
          %s219 = sshll.u32 [#allocation2], 4
          %s220 = int_to_ptr.vmem [resolvable:$true] %s219
          %225 = dma.hbm_to_vmem [thread:$0]  %s3, 12288, %s220, [#allocation3], 384, 384, 24
        $region24: #{whole_sequence_model_forward.1} parent=11 // pred_fallthru
          _
        // Predicated region
        $region25: #{whole_sequence_model_forward.1} parent=11 // pred_check
          %p226 = pneg %p124
        $region26: #{whole_sequence_model_forward.1} parent=11 // pred_check_branch
          %228 = sbr.rel (%p226) target = $region28
        $region27: #{whole_sequence_model_forward.1} parent=11 // pred_region
          _
        $region28: #{whole_sequence_model_forward.1} parent=11 // pred_fallthru
          _
        // Predicated region
        $region29: #{whole_sequence_model_forward.1} parent=11 // pred_check
          %p229 = pneg %p145
        $region30: #{whole_sequence_model_forward.1} parent=11 // pred_check_branch
          %231 = sbr.rel (%p229) target = $region32
        $region31: #{whole_sequence_model_forward.1} parent=11 // pred_region
          _
        $region32: #{whole_sequence_model_forward.1} parent=11 // pred_fallthru
          _
        // Predicated region
        $region33: #{whole_sequence_model_forward.1} parent=11 // pred_check
          %p232 = pneg %p166
        $region34: #{whole_sequence_model_forward.1} parent=11 // pred_check_branch
          %234 = sbr.rel (%p232) target = $region36
        $region35: #{whole_sequence_model_forward.1} parent=11 // pred_region
          _
        $region36: #{whole_sequence_model_forward.1} parent=11 // pred_fallthru
          _
      $region12: #{whole_sequence_model_forward.1} parent=5 // pred_fallthru
        _
      %p235 = scmp.lt.s32.totalorder %s14, 2
      // Predicated region
      $region37: #{whole_sequence_model_forward.1} parent=5 // pred_check
        %p236 = pneg %p235
      $region38: #{whole_sequence_model_forward.1} parent=5 // pred_check_branch
        %238 = sbr.rel (%p236) target = $region40
      $region39: #{whole_sequence_model_forward.1} parent=5 // pred_region
        // Predicated region
        $region41: #{whole_sequence_model_forward.1} parent=39 // pred_check
          %p239 = pneg %p34
        $region42: #{whole_sequence_model_forward.1} parent=39 // pred_check_branch
          %241 = sbr.rel (%p239) target = $region44
        $region43: #{whole_sequence_model_forward.1} parent=39 // pred_region
          %p242 = scmp.lt.s32.totalorder %s14, 1
          %s243 = scalar_select %p242, %s14, 1
          %s244 = smul.addr %s243, 2
          %s245 = smul.addr %s244, 8
          %s246 = scalar_lea.vmem %s0, %s245
        $region44: #{whole_sequence_model_forward.1} parent=39 // pred_fallthru
          _
      $region40: #{whole_sequence_model_forward.1} parent=5 // pred_fallthru
        _
      %p247 = scmp.le.s32.totalorder 1, %s14
      %p248 = scmp.lt.s32.totalorder %s14, 3
      %p249 = pnand %p247, %p248
      %p250 = pneg %p249
      // Predicated region
      $region45: #{whole_sequence_model_forward.1} parent=5 // pred_check
        _
      $region46: #{whole_sequence_model_forward.1} parent=5 // pred_check_branch
        %252 = sbr.rel (%p249) target = $region48
      $region47: #{whole_sequence_model_forward.1} parent=5 // pred_region
        %s253 = ssub.s32 %s14, 1
        // Predicated region
        $region49: #{whole_sequence_model_forward.1} parent=47 // pred_check
          %p254 = pneg %p103
        $region50: #{whole_sequence_model_forward.1} parent=47 // pred_check_branch
          %256 = sbr.rel (%p254) target = $region52
        $region51: #{whole_sequence_model_forward.1} parent=47 // pred_region
          %257 = dma.done [#allocation3], 12288
        $region52: #{whole_sequence_model_forward.1} parent=47 // pred_fallthru
          _
        %p258 = scmp.lt.s32.totalorder %s19, 1
        %s259 = scalar_select %p258, %s19, 1
        %s260 = smul.addr %s259, 2
        %s261 = smul.addr %s260, 8
        %s262 = scalar_lea.vmem %s0, %s261
        %p263 = pneg %p40
        %p264 = pneg %p37
        %p265 = pneg %p61
        %p266 = pneg %p58
        %p267 = pneg %p82
        %p268 = pneg %p79
        %p269 = pneg %p103
        %p270 = pneg %p100
        %p271 = pneg %p124
        %p272 = pneg %p121
        %p273 = pneg %p145
        %p274 = pneg %p142
        %p275 = pneg %p166
        %p276 = pneg %p163
        %p277 = pneg %p192
        %p278 = pneg %p189
        %p279 = scmp.lt.s32.totalorder %s19, 1
        %s280 = scalar_select %p279, %s19, 1
        %s281 = smul.addr %s280, 2
        %s282 = smul.addr %s281, 8
        %s283 = scalar_lea.vmem %s7, %s282
        %p284 = scmp.lt.s32.totalorder %s19, 1
        %s285 = scalar_select %p284, %s19, 1
        %s286 = smul.addr %s285, 2
        %s287 = smul.addr %s286, 8
        %s288 = scalar_lea.vmem %s0, %s287
        %p289 = scmp.lt.s32.totalorder %s19, 1
        %s290 = scalar_select %p289, %s19, 1
        %s291 = smul.addr %s290, 2
        %s292 = smul.addr %s291, 8
        %s293 = scalar_lea.vmem %s7, %s292
        %v295 = vld [vmem:[%s288] sm:$0xff]
        %v296 = vld [vmem:[%s288 + $0x8] sm:$0xff]
        %v297 = vpack.c.bf16 %v296, %v295
        %v298 = vld [vmem:[%s1] sm:$0xf]
        %v299 = vld [vmem:[%s2] sm:$0x1]
        %v301 = vlaneseq
        %v302 = vshrl.u32 %v301, 7
        %v303 = vsub.s32 0, %v302
        %v304 = vrot.slane %v299, %v303
        %vm306 = vcmask 64512
        %v308 = vsel %vm306, %v297, 0
        %vm310 = vcmask 1043456
        %v312 = vsel %vm310, %v298, 0
        %314 = vmatprep.subr.bf16.mxu0 0
        %315 = vmatpush1.bf16.msra.mxu0 %v312
        %316 = vmatprep.subr.bf16.mxu0 0
        %317 = vmatpush1.bf16.msra.mxu0 0
        %318 = vmatprep.subr.bf16.mxu0 0
        %319 = vmatpush1.bf16.msra.mxu0 0
        %320 = vmatprep.subr.bf16.mxu0 0
        %321 = vmatpush1.bf16.msra.mxu0 0
        %322 = vmatprep.subr.bf16.mxu0 0
        %323 = vmatpush1.bf16.msra.mxu0 0
        %324 = vmatprep.subr.bf16.mxu0 0
        %325 = vmatpush1.bf16.msra.mxu0 0
        %326 = vmatprep.subr.bf16.mxu0 0
        %327 = vmatpush1.bf16.msra.mxu0 0
        %328 = vmatprep.subr.bf16.mxu0 0
        %329 = vmatpush1.bf16.msra.mxu0 0
        %330 = vmatprep.subr.bf16.mxu0 0
        %331 = vmatpush1.bf16.msra.mxu0 0
        %332 = vmatprep.subr.bf16.mxu0 0
        %333 = vmatpush1.bf16.msra.mxu0 0
        %334 = vmatprep.subr.bf16.mxu0 0
        %335 = vmatpush1.bf16.msra.mxu0 0
        %336 = vmatprep.subr.bf16.mxu0 0
        %337 = vmatpush1.bf16.msra.mxu0 0
        %338 = vmatprep.subr.bf16.mxu0 0
        %339 = vmatpush1.bf16.msra.mxu0 0
        %340 = vmatprep.subr.bf16.mxu0 0
        %341 = vmatpush1.bf16.msra.mxu0 0
        %342 = vmatprep.subr.bf16.mxu0 0
        %343 = vmatpush1.bf16.msra.mxu0 0
        %344 = vmatprep.subr.bf16.mxu0 0
        %345 = vmatpush1.bf16.msra.mxu0 0
        %346 = vmatprep.mubr.bf16.mxu0 0
        %347 = vmatmul.mubr.bf16.gmra.mrb[0].mxu0 %v308
        %v348 = vpop.f32.mrb[0].mxu0
        %v349 = vadd.f32 %v304, %v348
        %v350 = vpop.f32.mrb[0].mxu0
        %v351 = vpop.f32.mrb[0].mxu0
        %v352 = vadd.f32 %v304, %v351
        %v353 = vpop.f32.mrb[0].mxu0
        %354 = vdwg.mxu0
        %v355 = vmul.f32 %v349, 11.313708
        %v356 = vmul.f32 %v352, 11.313708
        %v357 = vld [vmem:[%s4] sm:$0xff]
        %v358 = vld [vmem:[%s4 + $0x8] sm:$0x3]
        %v359 = vpack.c.bf16 %v356, %v355
        %v360 = vld [vmem:[#allocation2] sm:$0xff]
        %v361 = vld [vmem:[#allocation2 + $0x8] sm:$0xf]
        %v362 = vld [vmem:[#allocation2 + $0x18] sm:$0xff]
        %v363 = vld [vmem:[#allocation2 + $0x20] sm:$0xf]
        %v364 = vld [vmem:[#allocation2 + $0x30] sm:$0xff]
        %v365 = vld [vmem:[#allocation2 + $0x38] sm:$0xf]
        %v366 = vld [vmem:[#allocation2 + $0x48] sm:$0xff]
        %v367 = vld [vmem:[#allocation2 + $0x50] sm:$0xf]
        %v368 = vld [vmem:[#allocation2 + $0x60] sm:$0xff]
        %v369 = vld [vmem:[#allocation2 + $0x68] sm:$0xf]
        %v370 = vld [vmem:[#allocation2 + $0x78] sm:$0xff]
        %v371 = vld [vmem:[#allocation2 + $0x80] sm:$0xf]
        %v372 = vld [vmem:[#allocation2 + $0x90] sm:$0xff]
        %v373 = vld [vmem:[#allocation2 + $0x98] sm:$0xf]
        %v374 = vld [vmem:[#allocation2 + $0xa8] sm:$0xff]
        %v375 = vld [vmem:[#allocation2 + $0xb0] sm:$0xf]
        %v376 = vld [vmem:[#allocation2 + $0xc0] sm:$0xff]
        %v377 = vld [vmem:[#allocation2 + $0xc8] sm:$0xf]
        %v378 = vld [vmem:[#allocation2 + $0xd8] sm:$0xff]
        %v379 = vld [vmem:[#allocation2 + $0xe0] sm:$0xf]
        %v380 = vld [vmem:[#allocation2 + $0xf0] sm:$0xff]
        %v381 = vld [vmem:[#allocation2 + $0xf8] sm:$0xf]
        %v382 = vld [vmem:[#allocation2 + $0x108] sm:$0xff]
        %v383 = vld [vmem:[#allocation2 + $0x110] sm:$0xf]
        %v384 = vld [vmem:[#allocation2 + $0x120] sm:$0xff]
        %v385 = vld [vmem:[#allocation2 + $0x128] sm:$0xf]
        %v386 = vld [vmem:[#allocation2 + $0x138] sm:$0xff]
        %v387 = vld [vmem:[#allocation2 + $0x140] sm:$0xf]
        %v388 = vld [vmem:[#allocation2 + $0x150] sm:$0xff]
        %v389 = vld [vmem:[#allocation2 + $0x158] sm:$0xf]
        %v390 = vld [vmem:[#allocation2 + $0x168] sm:$0xff]
        %v391 = vld [vmem:[#allocation2 + $0x170] sm:$0xf]
        %v424 = vunpack.c.l.b16 %v360
        %v425 = vunpack.c.h.b16 %v360
        %v426 = vunpack.c.l.b16 %v361
        %v427 = vunpack.c.l.b16 %v362
        %v428 = vunpack.c.h.b16 %v362
        %v429 = vunpack.c.l.b16 %v363
        %v430 = vunpack.c.l.b16 %v364
        %v431 = vunpack.c.h.b16 %v364
        %v432 = vunpack.c.l.b16 %v365
        %v433 = vunpack.c.l.b16 %v366
        %v434 = vunpack.c.h.b16 %v366
        %v435 = vunpack.c.l.b16 %v367
        %v436 = vunpack.c.l.b16 %v368
        %v437 = vunpack.c.h.b16 %v368
        %v438 = vunpack.c.l.b16 %v369
        %v439 = vunpack.c.l.b16 %v370
        %v440 = vunpack.c.h.b16 %v370
        %v441 = vunpack.c.l.b16 %v371
        %v442 = vunpack.c.l.b16 %v372
        %v443 = vunpack.c.h.b16 %v372
        %v444 = vunpack.c.l.b16 %v373
        %v445 = vunpack.c.l.b16 %v374
        %v446 = vunpack.c.h.b16 %v374
        %v447 = vunpack.c.l.b16 %v375
        %v448 = vunpack.c.l.b16 %v376
        %v449 = vunpack.c.h.b16 %v376
        %v450 = vunpack.c.l.b16 %v377
        %v451 = vunpack.c.l.b16 %v378
        %v452 = vunpack.c.h.b16 %v378
        %v453 = vunpack.c.l.b16 %v379
        %v454 = vunpack.c.l.b16 %v380
        %v455 = vunpack.c.h.b16 %v380
        %v456 = vunpack.c.l.b16 %v381
        %v457 = vunpack.c.l.b16 %v382
        %v458 = vunpack.c.h.b16 %v382
        %v459 = vunpack.c.l.b16 %v383
        %v460 = vunpack.c.l.b16 %v384
        %v461 = vunpack.c.h.b16 %v384
        %v462 = vunpack.c.l.b16 %v385
        %v463 = vunpack.c.l.b16 %v386
        %v464 = vunpack.c.h.b16 %v386
        %v465 = vunpack.c.l.b16 %v387
        %v466 = vunpack.c.l.b16 %v388
        %v467 = vunpack.c.h.b16 %v388
        %v468 = vunpack.c.l.b16 %v389
        %v469 = vunpack.c.l.b16 %v390
        %v470 = vunpack.c.h.b16 %v390
        %v471 = vunpack.c.l.b16 %v391
        %v472 = vpack.c.b16 %v427, %v424
        %v473 = vpack.c.b16 %v428, %v425
        %v474 = vpack.c.b16 %v429, %v426
        %v475 = vpack.c.b16 %v433, %v430
        %v476 = vpack.c.b16 %v434, %v431
        %v477 = vpack.c.b16 %v435, %v432
        %v478 = vpack.c.b16 %v439, %v436
        %v479 = vpack.c.b16 %v440, %v437
        %v480 = vpack.c.b16 %v441, %v438
        %v481 = vpack.c.b16 %v445, %v442
        %v482 = vpack.c.b16 %v446, %v443
        %v483 = vpack.c.b16 %v447, %v444
        %v484 = vpack.c.b16 %v451, %v448
        %v485 = vpack.c.b16 %v452, %v449
        %v486 = vpack.c.b16 %v453, %v450
        %v487 = vpack.c.b16 %v457, %v454
        %v488 = vpack.c.b16 %v458, %v455
        %v489 = vpack.c.b16 %v459, %v456
        %v490 = vpack.c.b16 %v463, %v460
        %v491 = vpack.c.b16 %v464, %v461
        %v492 = vpack.c.b16 %v465, %v462
        %v493 = vpack.c.b16 %v469, %v466
        %v494 = vpack.c.b16 %v470, %v467
        %v495 = vpack.c.b16 %v471, %v468
        %520 = vmatprep.subr.bf16.mxu0 %v473
        %521 = vmatpush1.bf16.msra.mxu0 %v472
        %522 = vmatprep.subr.bf16.mxu0 %v476
        %523 = vmatpush1.bf16.msra.mxu0 %v475
        %524 = vmatprep.subr.bf16.mxu0 %v479
        %525 = vmatpush1.bf16.msra.mxu0 %v478
        %526 = vmatprep.subr.bf16.mxu0 %v482
        %527 = vmatpush1.bf16.msra.mxu0 %v481
        %528 = vmatprep.subr.bf16.mxu0 %v485
        %529 = vmatpush1.bf16.msra.mxu0 %v484
        %530 = vmatprep.subr.bf16.mxu0 %v488
        %531 = vmatpush1.bf16.msra.mxu0 %v487
        %532 = vmatprep.subr.bf16.mxu0 %v491
        %533 = vmatpush1.bf16.msra.mxu0 %v490
        %534 = vmatprep.subr.bf16.mxu0 %v494
        %535 = vmatpush1.bf16.msra.mxu0 %v493
        %536 = vmatprep.subr.bf16.mxu0 0
        %537 = vmatpush1.bf16.msra.mxu0 0
        %538 = vmatprep.subr.bf16.mxu0 0
        %539 = vmatpush1.bf16.msra.mxu0 0
        %540 = vmatprep.subr.bf16.mxu0 0
        %541 = vmatpush1.bf16.msra.mxu0 0
        %542 = vmatprep.subr.bf16.mxu0 0
        %543 = vmatpush1.bf16.msra.mxu0 0
        %544 = vmatprep.subr.bf16.mxu0 0
        %545 = vmatpush1.bf16.msra.mxu0 0
        %546 = vmatprep.subr.bf16.mxu0 0
        %547 = vmatpush1.bf16.msra.mxu0 0
        %548 = vmatprep.subr.bf16.mxu0 0
        %549 = vmatpush1.bf16.msra.mxu0 0
        %550 = vmatprep.subr.bf16.mxu0 0
        %551 = vmatpush1.bf16.msra.mxu0 0
        %552 = vmatprep.mubr.bf16.mxu0 0
        %553 = vmatmul.mubr.bf16.gmra.mrb[0].mxu0 %v359
        %v554 = vpop.f32.mrb[0].mxu0
        %v555 = vadd.f32 0.0, %v554
        %v556 = vpop.f32.mrb[0].mxu0
        %v557 = vadd.f32 0.0, %v556
        %v558 = vpop.f32.mrb[0].mxu0
        %v559 = vadd.f32 0.0, %v558
        %v560 = vpop.f32.mrb[0].mxu0
        %v561 = vadd.f32 0.0, %v560
        %562 = vdwg.mxu0
        %563 = vmatprep.subr.bf16.mxu0 0
        %564 = vmatpush1.bf16.msra.mxu0 %v474
        %565 = vmatprep.subr.bf16.mxu0 0
        %566 = vmatpush1.bf16.msra.mxu0 %v477
        %567 = vmatprep.subr.bf16.mxu0 0
        %568 = vmatpush1.bf16.msra.mxu0 %v480
        %569 = vmatprep.subr.bf16.mxu0 0
        %570 = vmatpush1.bf16.msra.mxu0 %v483
        %571 = vmatprep.subr.bf16.mxu0 0
        %572 = vmatpush1.bf16.msra.mxu0 %v486
        %573 = vmatprep.subr.bf16.mxu0 0
        %574 = vmatpush1.bf16.msra.mxu0 %v489
        %575 = vmatprep.subr.bf16.mxu0 0
        %576 = vmatpush1.bf16.msra.mxu0 %v492
        %577 = vmatprep.subr.bf16.mxu0 0
        %578 = vmatpush1.bf16.msra.mxu0 %v495
        %579 = vmatprep.subr.bf16.mxu0 0
        %580 = vmatpush1.bf16.msra.mxu0 0
        %581 = vmatprep.subr.bf16.mxu0 0
        %582 = vmatpush1.bf16.msra.mxu0 0
        %583 = vmatprep.subr.bf16.mxu0 0
        %584 = vmatpush1.bf16.msra.mxu0 0
        %585 = vmatprep.subr.bf16.mxu0 0
        %586 = vmatpush1.bf16.msra.mxu0 0
        %587 = vmatprep.subr.bf16.mxu0 0
        %588 = vmatpush1.bf16.msra.mxu0 0
        %589 = vmatprep.subr.bf16.mxu0 0
        %590 = vmatpush1.bf16.msra.mxu0 0
        %591 = vmatprep.subr.bf16.mxu0 0
        %592 = vmatpush1.bf16.msra.mxu0 0
        %593 = vmatprep.subr.bf16.mxu0 0
        %594 = vmatpush1.bf16.msra.mxu0 0
        %595 = vmatprep.mubr.bf16.mxu0 0
        %596 = vmatmul.mubr.bf16.gmra.mrb[0].mxu0 %v359
        %v597 = vpop.f32.mrb[0].mxu0
        %v598 = vadd.f32 0.0, %v597
        %v599 = vpop.f32.mrb[0].mxu0
        %v600 = vpop.f32.mrb[0].mxu0
        %v601 = vadd.f32 0.0, %v600
        %v602 = vpop.f32.mrb[0].mxu0
        %603 = vdwg.mxu0
        %v604 = vlaneseq
        %v605 = vshrl.u32 %v604, 7
        %v606 = vsub.s32 0, %v605
        %v607 = vrot.slane %v357, %v606
        %v608 = vadd.f32 %v555, %v607
        %v609 = vadd.f32 %v559, %v607
        %v610 = vpack.c.bf16 %v609, %v608
        %v611 = vlaneseq
        %v612 = vshrl.u32 %v611, 7
        %v613 = vsub.s32 1, %v612
        %v614 = vrot.slane %v357, %v613
        %v615 = vadd.f32 %v557, %v614
        %v616 = vadd.f32 %v561, %v614
        %v617 = vpack.c.bf16 %v616, %v615
        %v618 = vlaneseq
        %v619 = vshrl.u32 %v618, 7
        %v620 = vsub.s32 2, %v619
        %v621 = vrot.slane %v357, %v620
        %v622 = vadd.f32 %v598, %v621
        %v623 = vadd.f32 %v601, %v621
        %v624 = vpack.c.bf16 %v623, %v622
        %vm625 = vcmask 261120
        %v627 = vsel %vm625, %v610, 0
        %v630 = vsel %vm625, %v617, 0
        %632 = vmatprep.subr.bf16.mxu0 0
        %633 = vmatpush1.bf16.xpose.msra.mxu0 %v630
        %634 = vmatprep.subr.bf16.mxu0 0
        %635 = vmatpush1.bf16.xpose.msra.mxu0 0
        %636 = vmatprep.subr.bf16.mxu0 0
        %637 = vmatpush1.bf16.xpose.msra.mxu0 0
        %638 = vmatprep.subr.bf16.mxu0 0
        %639 = vmatpush1.bf16.xpose.msra.mxu0 0
        %640 = vmatprep.subr.bf16.mxu0 0
        %641 = vmatpush1.bf16.xpose.msra.mxu0 0
        %642 = vmatprep.subr.bf16.mxu0 0
        %643 = vmatpush1.bf16.xpose.msra.mxu0 0
        %644 = vmatprep.subr.bf16.mxu0 0
        %645 = vmatpush1.bf16.xpose.msra.mxu0 0
        %646 = vmatprep.subr.bf16.mxu0 0
        %647 = vmatpush1.bf16.xpose.msra.mxu0 0
        %648 = vmatprep.subr.bf16.mxu0 0
        %649 = vmatpush1.bf16.xpose.msra.mxu0 0
        %650 = vmatprep.subr.bf16.mxu0 0
        %651 = vmatpush1.bf16.xpose.msra.mxu0 0
        %652 = vmatprep.subr.bf16.mxu0 0
        %653 = vmatpush1.bf16.xpose.msra.mxu0 0
        %654 = vmatprep.subr.bf16.mxu0 0
        %655 = vmatpush1.bf16.xpose.msra.mxu0 0
        %656 = vmatprep.subr.bf16.mxu0 0
        %657 = vmatpush1.bf16.xpose.msra.mxu0 0
        %658 = vmatprep.subr.bf16.mxu0 0
        %659 = vmatpush1.bf16.xpose.msra.mxu0 0
        %660 = vmatprep.subr.bf16.mxu0 0
        %661 = vmatpush1.bf16.xpose.msra.mxu0 0
        %662 = vmatprep.subr.bf16.mxu0 0
        %663 = vmatpush1.bf16.xpose.msra.mxu0 0
        %664 = vmatprep.mubr.bf16.mxu0 0
        %665 = vmatmul.mubr.bf16.gmra.mrb[0].mxu0 %v627
        %v666 = vpop.f32.mrb[0].mxu0
        %v667 = vadd.f32 0.0, %v666
        %v668 = vpop.f32.mrb[0].mxu0
        %v669 = vpop.f32.mrb[0].mxu0
        %v670 = vadd.f32 0.0, %v669
        %v671 = vpop.f32.mrb[0].mxu0
        %672 = vdwg.mxu0
        %v673 = vmul.f32 %v667, 0.17677669
        %v674 = vmul.f32 %v670, 0.17677669
        %vm675 = vcmask 130048
        %v676 = vsel %vm675, %v673, -inf
        %677 = vmax.xlane.f32.xlu0 %v676
        %v678 = vpop.xlane.xlu0 %677
        %v679 = vsel %vm675, %v674, -inf
        %680 = vmax.xlane.f32.xlu0 %v679
        %v681 = vpop.xlane.xlu0 %680
        %v682 = vsub.f32 %v673, %v678
        %v683 = vsub.f32 %v674, %v681
        %v684 = vmul.f32 %v682, 1.442695
        %v685 = vpow.pop %v684
        %v686 = vmul.f32 %v683, 1.442695
        %v687 = vpow.pop %v686
        %v688 = vsel %vm675, %v685, 0.0
        %689 = vadd.xlane.f32.xlu0 %v688
        %v690 = vpop.xlane.xlu0 %689
        %v691 = vsel %vm675, %v687, 0.0
        %692 = vadd.xlane.f32.xlu0 %v691
        %v693 = vpop.xlane.xlu0 %692
        %v694 = vrcp.pop %v690
        %v695 = vrcp.pop %v693
        %v696 = vmul.f32 %v685, %v694
        %v697 = vmul.f32 %v687, %v695
        %v698 = vpack.c.bf16 %v697, %v696
        %v700 = vsel %vm675, %v698, 0
        %702 = vmatprep.subr.bf16.mxu0 0
        %703 = vmatpush1.bf16.msra.mxu0 %v624
        %704 = vmatprep.subr.bf16.mxu0 0
        %705 = vmatpush1.bf16.msra.mxu0 0
        %706 = vmatprep.subr.bf16.mxu0 0
        %707 = vmatpush1.bf16.msra.mxu0 0
        %708 = vmatprep.subr.bf16.mxu0 0
        %709 = vmatpush1.bf16.msra.mxu0 0
        %710 = vmatprep.subr.bf16.mxu0 0
        %711 = vmatpush1.bf16.msra.mxu0 0
        %712 = vmatprep.subr.bf16.mxu0 0
        %713 = vmatpush1.bf16.msra.mxu0 0
        %714 = vmatprep.subr.bf16.mxu0 0
        %715 = vmatpush1.bf16.msra.mxu0 0
        %716 = vmatprep.subr.bf16.mxu0 0
        %717 = vmatpush1.bf16.msra.mxu0 0
        %718 = vmatprep.subr.bf16.mxu0 0
        %719 = vmatpush1.bf16.msra.mxu0 0
        %720 = vmatprep.subr.bf16.mxu0 0
        %721 = vmatpush1.bf16.msra.mxu0 0
        %722 = vmatprep.subr.bf16.mxu0 0
        %723 = vmatpush1.bf16.msra.mxu0 0
        %724 = vmatprep.subr.bf16.mxu0 0
        %725 = vmatpush1.bf16.msra.mxu0 0
        %726 = vmatprep.subr.bf16.mxu0 0
        %727 = vmatpush1.bf16.msra.mxu0 0
        %728 = vmatprep.subr.bf16.mxu0 0
        %729 = vmatpush1.bf16.msra.mxu0 0
        %730 = vmatprep.subr.bf16.mxu0 0
        %731 = vmatpush1.bf16.msra.mxu0 0
        %732 = vmatprep.subr.bf16.mxu0 0
        %733 = vmatpush1.bf16.msra.mxu0 0
        %734 = vmatprep.mubr.bf16.mxu0 0
        %735 = vmatmul.mubr.bf16.gmra.mrb[0].mxu0 %v700
        %v736 = vpop.f32.mrb[0].mxu0
        %v737 = vadd.f32 0.0, %v736
        %v738 = vpop.f32.mrb[0].mxu0
        %v739 = vpop.f32.mrb[0].mxu0
        %v740 = vadd.f32 0.0, %v739
        %v741 = vpop.f32.mrb[0].mxu0
        %742 = vdwg.mxu0
        %744 = vrot.lane.b32.xlu0 %v610, 96
        %v745 = vpop.permute.xlu0 %744
        %747 = vrot.lane.b32.xlu0 %v617, 96
        %v748 = vpop.permute.xlu0 %747
        %v750 = vsel %vm625, %v745, 0
        %v753 = vsel %vm625, %v748, 0
        %755 = vmatprep.subr.bf16.mxu0 0
        %756 = vmatpush1.bf16.xpose.msra.mxu0 %v753
        %757 = vmatprep.subr.bf16.mxu0 0
        %758 = vmatpush1.bf16.xpose.msra.mxu0 0
        %759 = vmatprep.subr.bf16.mxu0 0
        %760 = vmatpush1.bf16.xpose.msra.mxu0 0
        %761 = vmatprep.subr.bf16.mxu0 0
        %762 = vmatpush1.bf16.xpose.msra.mxu0 0
        %763 = vmatprep.subr.bf16.mxu0 0
        %764 = vmatpush1.bf16.xpose.msra.mxu0 0
        %765 = vmatprep.subr.bf16.mxu0 0
        %766 = vmatpush1.bf16.xpose.msra.mxu0 0
        %767 = vmatprep.subr.bf16.mxu0 0
        %768 = vmatpush1.bf16.xpose.msra.mxu0 0
        %769 = vmatprep.subr.bf16.mxu0 0
        %770 = vmatpush1.bf16.xpose.msra.mxu0 0
        %771 = vmatprep.subr.bf16.mxu0 0
        %772 = vmatpush1.bf16.xpose.msra.mxu0 0
        %773 = vmatprep.subr.bf16.mxu0 0
        %774 = vmatpush1.bf16.xpose.msra.mxu0 0
        %775 = vmatprep.subr.bf16.mxu0 0
        %776 = vmatpush1.bf16.xpose.msra.mxu0 0
        %777 = vmatprep.subr.bf16.mxu0 0
        %778 = vmatpush1.bf16.xpose.msra.mxu0 0
        %779 = vmatprep.subr.bf16.mxu0 0
        %780 = vmatpush1.bf16.xpose.msra.mxu0 0
        %781 = vmatprep.subr.bf16.mxu0 0
        %782 = vmatpush1.bf16.xpose.msra.mxu0 0
        %783 = vmatprep.subr.bf16.mxu0 0
        %784 = vmatpush1.bf16.xpose.msra.mxu0 0
        %785 = vmatprep.subr.bf16.mxu0 0
        %786 = vmatpush1.bf16.xpose.msra.mxu0 0
        %787 = vmatprep.mubr.bf16.mxu0 0
        %788 = vmatmul.mubr.bf16.gmra.mrb[0].mxu0 %v750
        %v789 = vpop.f32.mrb[0].mxu0
        %v790 = vadd.f32 0.0, %v789
        %v791 = vpop.f32.mrb[0].mxu0
        %v792 = vpop.f32.mrb[0].mxu0
        %v793 = vadd.f32 0.0, %v792
        %v794 = vpop.f32.mrb[0].mxu0
        %795 = vdwg.mxu0
        %v796 = vmul.f32 %v790, 0.17677669
        %v797 = vmul.f32 %v793, 0.17677669
        %v798 = vsel %vm675, %v796, -inf
        %799 = vmax.xlane.f32.xlu0 %v798
        %v800 = vpop.xlane.xlu0 %799
        %v801 = vsel %vm675, %v797, -inf
        %802 = vmax.xlane.f32.xlu0 %v801
        %v803 = vpop.xlane.xlu0 %802
        %v804 = vsub.f32 %v796, %v800
        %v805 = vsub.f32 %v797, %v803
        %v806 = vmul.f32 %v804, 1.442695
        %v807 = vpow.pop %v806
        %v808 = vmul.f32 %v805, 1.442695
        %v809 = vpow.pop %v808
        %v810 = vsel %vm675, %v807, 0.0
        %811 = vadd.xlane.f32.xlu0 %v810
        %v812 = vpop.xlane.xlu0 %811
        %v813 = vsel %vm675, %v809, 0.0
        %814 = vadd.xlane.f32.xlu0 %v813
        %v815 = vpop.xlane.xlu0 %814
        %v816 = vrcp.pop %v812
        %v817 = vrcp.pop %v815
        %v818 = vmul.f32 %v807, %v816
        %v819 = vmul.f32 %v809, %v817
        %v820 = vpack.c.bf16 %v819, %v818
        %822 = vrot.lane.b32.xlu0 %v624, 96
        %v823 = vpop.permute.xlu0 %822
        %v826 = vsel %vm675, %v820, 0
        %828 = vmatprep.subr.bf16.mxu0 0
        %829 = vmatpush1.bf16.msra.mxu0 %v823
        %830 = vmatprep.subr.bf16.mxu0 0
        %831 = vmatpush1.bf16.msra.mxu0 0
        %832 = vmatprep.subr.bf16.mxu0 0
        %833 = vmatpush1.bf16.msra.mxu0 0
        %834 = vmatprep.subr.bf16.mxu0 0
        %835 = vmatpush1.bf16.msra.mxu0 0
        %836 = vmatprep.subr.bf16.mxu0 0
        %837 = vmatpush1.bf16.msra.mxu0 0
        %838 = vmatprep.subr.bf16.mxu0 0
        %839 = vmatpush1.bf16.msra.mxu0 0
        %840 = vmatprep.subr.bf16.mxu0 0
        %841 = vmatpush1.bf16.msra.mxu0 0
        %842 = vmatprep.subr.bf16.mxu0 0
        %843 = vmatpush1.bf16.msra.mxu0 0
        %844 = vmatprep.subr.bf16.mxu0 0
        %845 = vmatpush1.bf16.msra.mxu0 0
        %846 = vmatprep.subr.bf16.mxu0 0
        %847 = vmatpush1.bf16.msra.mxu0 0
        %848 = vmatprep.subr.bf16.mxu0 0
        %849 = vmatpush1.bf16.msra.mxu0 0
        %850 = vmatprep.subr.bf16.mxu0 0
        %851 = vmatpush1.bf16.msra.mxu0 0
        %852 = vmatprep.subr.bf16.mxu0 0
        %853 = vmatpush1.bf16.msra.mxu0 0
        %854 = vmatprep.subr.bf16.mxu0 0
        %855 = vmatpush1.bf16.msra.mxu0 0
        %856 = vmatprep.subr.bf16.mxu0 0
        %857 = vmatpush1.bf16.msra.mxu0 0
        %858 = vmatprep.subr.bf16.mxu0 0
        %859 = vmatpush1.bf16.msra.mxu0 0
        %860 = vmatprep.mubr.bf16.mxu0 0
        %861 = vmatmul.mubr.bf16.gmra.mrb[0].mxu0 %v826
        %v862 = vpop.f32.mrb[0].mxu0
        %v863 = vadd.f32 0.0, %v862
        %v864 = vpop.f32.mrb[0].mxu0
        %v865 = vpop.f32.mrb[0].mxu0
        %v866 = vadd.f32 0.0, %v865
        %v867 = vpop.f32.mrb[0].mxu0
        %868 = vdwg.mxu0
        %869 = vrot.lane.b32.xlu0 %v610, 64
        %v870 = vpop.permute.xlu0 %869
        %871 = vrot.lane.b32.xlu0 %v617, 64
        %v872 = vpop.permute.xlu0 %871
        %v874 = vsel %vm625, %v870, 0
        %v877 = vsel %vm625, %v872, 0
        %879 = vmatprep.subr.bf16.mxu0 0
        %880 = vmatpush1.bf16.xpose.msra.mxu0 %v877
        %881 = vmatprep.subr.bf16.mxu0 0
        %882 = vmatpush1.bf16.xpose.msra.mxu0 0
        %883 = vmatprep.subr.bf16.mxu0 0
        %884 = vmatpush1.bf16.xpose.msra.mxu0 0
        %885 = vmatprep.subr.bf16.mxu0 0
        %886 = vmatpush1.bf16.xpose.msra.mxu0 0
        %887 = vmatprep.subr.bf16.mxu0 0
        %888 = vmatpush1.bf16.xpose.msra.mxu0 0
        %889 = vmatprep.subr.bf16.mxu0 0
        %890 = vmatpush1.bf16.xpose.msra.mxu0 0
        %891 = vmatprep.subr.bf16.mxu0 0
        %892 = vmatpush1.bf16.xpose.msra.mxu0 0
        %893 = vmatprep.subr.bf16.mxu0 0
        %894 = vmatpush1.bf16.xpose.msra.mxu0 0
        %895 = vmatprep.subr.bf16.mxu0 0
        %896 = vmatpush1.bf16.xpose.msra.mxu0 0
        %897 = vmatprep.subr.bf16.mxu0 0
        %898 = vmatpush1.bf16.xpose.msra.mxu0 0
        %899 = vmatprep.subr.bf16.mxu0 0
        %900 = vmatpush1.bf16.xpose.msra.mxu0 0
        %901 = vmatprep.subr.bf16.mxu0 0
        %902 = vmatpush1.bf16.xpose.msra.mxu0 0
        %903 = vmatprep.subr.bf16.mxu0 0
        %904 = vmatpush1.bf16.xpose.msra.mxu0 0
        %905 = vmatprep.subr.bf16.mxu0 0
        %906 = vmatpush1.bf16.xpose.msra.mxu0 0
        %907 = vmatprep.subr.bf16.mxu0 0
        %908 = vmatpush1.bf16.xpose.msra.mxu0 0
        %909 = vmatprep.subr.bf16.mxu0 0
        %910 = vmatpush1.bf16.xpose.msra.mxu0 0
        %911 = vmatprep.mubr.bf16.mxu0 0
        %912 = vmatmul.mubr.bf16.gmra.mrb[0].mxu0 %v874
        %v913 = vpop.f32.mrb[0].mxu0
        %v914 = vadd.f32 0.0, %v913
        %v915 = vpop.f32.mrb[0].mxu0
        %v916 = vpop.f32.mrb[0].mxu0
        %v917 = vadd.f32 0.0, %v916
        %v918 = vpop.f32.mrb[0].mxu0
        %919 = vdwg.mxu0
        %v920 = vmul.f32 %v914, 0.17677669
        %v921 = vmul.f32 %v917, 0.17677669
        %v922 = vsel %vm675, %v920, -inf
        %923 = vmax.xlane.f32.xlu0 %v922
        %v924 = vpop.xlane.xlu0 %923
        %v925 = vsel %vm675, %v921, -inf
        %926 = vmax.xlane.f32.xlu0 %v925
        %v927 = vpop.xlane.xlu0 %926
        %v928 = vsub.f32 %v920, %v924
        %v929 = vsub.f32 %v921, %v927
        %v930 = vmul.f32 %v928, 1.442695
        %v931 = vpow.pop %v930
        %v932 = vmul.f32 %v929, 1.442695
        %v933 = vpow.pop %v932
        %v934 = vsel %vm675, %v931, 0.0
        %935 = vadd.xlane.f32.xlu0 %v934
        %v936 = vpop.xlane.xlu0 %935
        %v937 = vsel %vm675, %v933, 0.0
        %938 = vadd.xlane.f32.xlu0 %v937
        %v939 = vpop.xlane.xlu0 %938
        %v940 = vrcp.pop %v936
        %v941 = vrcp.pop %v939
        %v942 = vmul.f32 %v931, %v940
        %v943 = vmul.f32 %v933, %v941
        %v944 = vpack.c.bf16 %v943, %v942
        %945 = vrot.lane.b32.xlu0 %v624, 64
        %v946 = vpop.permute.xlu0 %945
        %v949 = vsel %vm675, %v944, 0
        %951 = vmatprep.subr.bf16.mxu0 0
        %952 = vmatpush1.bf16.msra.mxu0 %v946
        %953 = vmatprep.subr.bf16.mxu0 0
        %954 = vmatpush1.bf16.msra.mxu0 0
        %955 = vmatprep.subr.bf16.mxu0 0
        %956 = vmatpush1.bf16.msra.mxu0 0
        %957 = vmatprep.subr.bf16.mxu0 0
        %958 = vmatpush1.bf16.msra.mxu0 0
        %959 = vmatprep.subr.bf16.mxu0 0
        %960 = vmatpush1.bf16.msra.mxu0 0
        %961 = vmatprep.subr.bf16.mxu0 0
        %962 = vmatpush1.bf16.msra.mxu0 0
        %963 = vmatprep.subr.bf16.mxu0 0
        %964 = vmatpush1.bf16.msra.mxu0 0
        %965 = vmatprep.subr.bf16.mxu0 0
        %966 = vmatpush1.bf16.msra.mxu0 0
        %967 = vmatprep.subr.bf16.mxu0 0
        %968 = vmatpush1.bf16.msra.mxu0 0
        %969 = vmatprep.subr.bf16.mxu0 0
        %970 = vmatpush1.bf16.msra.mxu0 0
        %971 = vmatprep.subr.bf16.mxu0 0
        %972 = vmatpush1.bf16.msra.mxu0 0
        %973 = vmatprep.subr.bf16.mxu0 0
        %974 = vmatpush1.bf16.msra.mxu0 0
        %975 = vmatprep.subr.bf16.mxu0 0
        %976 = vmatpush1.bf16.msra.mxu0 0
        %977 = vmatprep.subr.bf16.mxu0 0
        %978 = vmatpush1.bf16.msra.mxu0 0
        %979 = vmatprep.subr.bf16.mxu0 0
        %980 = vmatpush1.bf16.msra.mxu0 0
        %981 = vmatprep.subr.bf16.mxu0 0
        %982 = vmatpush1.bf16.msra.mxu0 0
        %983 = vmatprep.mubr.bf16.mxu0 0
        %984 = vmatmul.mubr.bf16.gmra.mrb[0].mxu0 %v949
        %v985 = vpop.f32.mrb[0].mxu0
        %v986 = vadd.f32 0.0, %v985
        %v987 = vpop.f32.mrb[0].mxu0
        %v988 = vpop.f32.mrb[0].mxu0
        %v989 = vadd.f32 0.0, %v988
        %v990 = vpop.f32.mrb[0].mxu0
        %991 = vdwg.mxu0
        %992 = vrot.lane.b32.xlu0 %v610, 32
        %v993 = vpop.permute.xlu0 %992
        %994 = vrot.lane.b32.xlu0 %v617, 32
        %v995 = vpop.permute.xlu0 %994
        %v997 = vsel %vm625, %v993, 0
        %v1000 = vsel %vm625, %v995, 0
        %1002 = vmatprep.subr.bf16.mxu0 0
        %1003 = vmatpush1.bf16.xpose.msra.mxu0 %v1000
        %1004 = vmatprep.subr.bf16.mxu0 0
        %1005 = vmatpush1.bf16.xpose.msra.mxu0 0
        %1006 = vmatprep.subr.bf16.mxu0 0
        %1007 = vmatpush1.bf16.xpose.msra.mxu0 0
        %1008 = vmatprep.subr.bf16.mxu0 0
        %1009 = vmatpush1.bf16.xpose.msra.mxu0 0
        %1010 = vmatprep.subr.bf16.mxu0 0
        %1011 = vmatpush1.bf16.xpose.msra.mxu0 0
        %1012 = vmatprep.subr.bf16.mxu0 0
        %1013 = vmatpush1.bf16.xpose.msra.mxu0 0
        %1014 = vmatprep.subr.bf16.mxu0 0
        %1015 = vmatpush1.bf16.xpose.msra.mxu0 0
        %1016 = vmatprep.subr.bf16.mxu0 0
        %1017 = vmatpush1.bf16.xpose.msra.mxu0 0
        %1018 = vmatprep.subr.bf16.mxu0 0
        %1019 = vmatpush1.bf16.xpose.msra.mxu0 0
        %1020 = vmatprep.subr.bf16.mxu0 0
        %1021 = vmatpush1.bf16.xpose.msra.mxu0 0
        %1022 = vmatprep.subr.bf16.mxu0 0
        %1023 = vmatpush1.bf16.xpose.msra.mxu0 0
        %1024 = vmatprep.subr.bf16.mxu0 0
        %1025 = vmatpush1.bf16.xpose.msra.mxu0 0
        %1026 = vmatprep.subr.bf16.mxu0 0
        %1027 = vmatpush1.bf16.xpose.msra.mxu0 0
        %1028 = vmatprep.subr.bf16.mxu0 0
        %1029 = vmatpush1.bf16.xpose.msra.mxu0 0
        %1030 = vmatprep.subr.bf16.mxu0 0
        %1031 = vmatpush1.bf16.xpose.msra.mxu0 0
        %1032 = vmatprep.subr.bf16.mxu0 0
        %1033 = vmatpush1.bf16.xpose.msra.mxu0 0
        %1034 = vmatprep.mubr.bf16.mxu0 0
        %1035 = vmatmul.mubr.bf16.gmra.mrb[0].mxu0 %v997
        %v1036 = vpop.f32.mrb[0].mxu0
        %v1037 = vadd.f32 0.0, %v1036
        %v1038 = vpop.f32.mrb[0].mxu0
        %v1039 = vpop.f32.mrb[0].mxu0
        %v1040 = vadd.f32 0.0, %v1039
        %v1041 = vpop.f32.mrb[0].mxu0
        %1042 = vdwg.mxu0
        %v1043 = vmul.f32 %v1037, 0.17677669
        %v1044 = vmul.f32 %v1040, 0.17677669
        %v1045 = vsel %vm675, %v1043, -inf
        %1046 = vmax.xlane.f32.xlu0 %v1045
        %v1047 = vpop.xlane.xlu0 %1046
        %v1048 = vsel %vm675, %v1044, -inf
        %1049 = vmax.xlane.f32.xlu0 %v1048
        %v1050 = vpop.xlane.xlu0 %1049
        %v1051 = vsub.f32 %v1043, %v1047
        %v1052 = vsub.f32 %v1044, %v1050
        %v1053 = vmul.f32 %v1051, 1.442695
        %v1054 = vpow.pop %v1053
        %v1055 = vmul.f32 %v1052, 1.442695
        %v1056 = vpow.pop %v1055
        %v1057 = vsel %vm675, %v1054, 0.0
        %1058 = vadd.xlane.f32.xlu0 %v1057
        %v1059 = vpop.xlane.xlu0 %1058
        %v1060 = vsel %vm675, %v1056, 0.0
        %1061 = vadd.xlane.f32.xlu0 %v1060
        %v1062 = vpop.xlane.xlu0 %1061
        %v1063 = vrcp.pop %v1059
        %v1064 = vrcp.pop %v1062
        %v1065 = vmul.f32 %v1054, %v1063
        %v1066 = vmul.f32 %v1056, %v1064
        %v1067 = vpack.c.bf16 %v1066, %v1065
        %1068 = vrot.lane.b32.xlu0 %v624, 32
        %v1069 = vpop.permute.xlu0 %1068
        %v1072 = vsel %vm675, %v1067, 0
        %1074 = vmatprep.subr.bf16.mxu0 0
        %1075 = vmatpush1.bf16.msra.mxu0 %v1069
        %1076 = vmatprep.subr.bf16.mxu0 0
        %1077 = vmatpush1.bf16.msra.mxu0 0
        %1078 = vmatprep.subr.bf16.mxu0 0
        %1079 = vmatpush1.bf16.msra.mxu0 0
        %1080 = vmatprep.subr.bf16.mxu0 0
        %1081 = vmatpush1.bf16.msra.mxu0 0
        %1082 = vmatprep.subr.bf16.mxu0 0
        %1083 = vmatpush1.bf16.msra.mxu0 0
        %1084 = vmatprep.subr.bf16.mxu0 0
        %1085 = vmatpush1.bf16.msra.mxu0 0
        %1086 = vmatprep.subr.bf16.mxu0 0
        %1087 = vmatpush1.bf16.msra.mxu0 0
        %1088 = vmatprep.subr.bf16.mxu0 0
        %1089 = vmatpush1.bf16.msra.mxu0 0
        %1090 = vmatprep.subr.bf16.mxu0 0
        %1091 = vmatpush1.bf16.msra.mxu0 0
        %1092 = vmatprep.subr.bf16.mxu0 0
        %1093 = vmatpush1.bf16.msra.mxu0 0
        %1094 = vmatprep.subr.bf16.mxu0 0
        %1095 = vmatpush1.bf16.msra.mxu0 0
        %1096 = vmatprep.subr.bf16.mxu0 0
        %1097 = vmatpush1.bf16.msra.mxu0 0
        %1098 = vmatprep.subr.bf16.mxu0 0
        %1099 = vmatpush1.bf16.msra.mxu0 0
        %1100 = vmatprep.subr.bf16.mxu0 0
        %1101 = vmatpush1.bf16.msra.mxu0 0
        %1102 = vmatprep.subr.bf16.mxu0 0
        %1103 = vmatpush1.bf16.msra.mxu0 0
        %1104 = vmatprep.subr.bf16.mxu0 0
        %1105 = vmatpush1.bf16.msra.mxu0 0
        %1106 = vmatprep.mubr.bf16.mxu0 0
        %1107 = vmatmul.mubr.bf16.gmra.mrb[0].mxu0 %v1072
        %v1108 = vpop.f32.mrb[0].mxu0
        %v1109 = vadd.f32 0.0, %v1108
        %v1110 = vpop.f32.mrb[0].mxu0
        %v1111 = vpop.f32.mrb[0].mxu0
        %v1112 = vadd.f32 0.0, %v1111
        %v1113 = vpop.f32.mrb[0].mxu0
        %1114 = vdwg.mxu0
        %1117 = vrot.lane.b32.xlu0 %v863, 32
        %v1118 = vpop.permute.xlu0 %1117
        %1119 = vrot.lane.b32.xlu0 %v866, 32
        %v1120 = vpop.permute.xlu0 %1119
        %1125 = vrot.lane.b32.xlu0 %v986, 64
        %v1126 = vpop.permute.xlu0 %1125
        %1127 = vrot.lane.b32.xlu0 %v989, 64
        %v1128 = vpop.permute.xlu0 %1127
        %1133 = vrot.lane.b32.xlu0 %v1109, 96
        %v1134 = vpop.permute.xlu0 %1133
        %1135 = vrot.lane.b32.xlu0 %v1112, 96
        %v1136 = vpop.permute.xlu0 %1135
        %v1139 = vsel %vm625, %v737, %v1118
        %v1140 = vsel %vm625, %v740, %v1120
        %vm1141 = vcmask 523264
        %v1142 = vsel %vm1141, %v1139, %v1126
        %v1143 = vsel %vm1141, %v1140, %v1128
        %vm1144 = vcmask 785408
        %v1145 = vsel %vm1144, %v1142, %v1134
        %v1146 = vsel %vm1144, %v1143, %v1136
        %v1147 = vpack.c.bf16 %v1146, %v1145
        %v1148 = vld [vmem:[#allocation2 + $0xc] sm:$0xf]
        %v1149 = vld [vmem:[#allocation2 + $0x24] sm:$0xf]
        %v1150 = vld [vmem:[#allocation2 + $0x3c] sm:$0xf]
        %v1151 = vld [vmem:[#allocation2 + $0x54] sm:$0xf]
        %v1152 = vld [vmem:[#allocation2 + $0x6c] sm:$0xf]
        %v1153 = vld [vmem:[#allocation2 + $0x84] sm:$0xf]
        %v1154 = vld [vmem:[#allocation2 + $0x9c] sm:$0xf]
        %v1155 = vld [vmem:[#allocation2 + $0xb4] sm:$0xf]
        %v1156 = vld [vmem:[#allocation2 + $0xcc] sm:$0xf]
        %v1157 = vld [vmem:[#allocation2 + $0xe4] sm:$0xf]
        %v1158 = vld [vmem:[#allocation2 + $0xfc] sm:$0xf]
        %v1159 = vld [vmem:[#allocation2 + $0x114] sm:$0xf]
        %v1160 = vld [vmem:[#allocation2 + $0x12c] sm:$0xf]
        %v1161 = vld [vmem:[#allocation2 + $0x144] sm:$0xf]
        %v1162 = vld [vmem:[#allocation2 + $0x15c] sm:$0xf]
        %v1163 = vld [vmem:[#allocation2 + $0x174] sm:$0xf]
        %v1164 = vlaneseq
        %v1165 = vshrl.u32 %v1164, 7
        %v1166 = vsub.s32 3, %v1165
        %v1167 = vrot.slane %v357, %v1166
        %v1184 = vunpack.c.l.b16 %v1148
        %v1185 = vunpack.c.l.b16 %v1149
        %v1186 = vunpack.c.l.b16 %v1150
        %v1187 = vunpack.c.l.b16 %v1151
        %v1188 = vunpack.c.l.b16 %v1152
        %v1189 = vunpack.c.l.b16 %v1153
        %v1190 = vunpack.c.l.b16 %v1154
        %v1191 = vunpack.c.l.b16 %v1155
        %v1192 = vunpack.c.l.b16 %v1156
        %v1193 = vunpack.c.l.b16 %v1157
        %v1194 = vunpack.c.l.b16 %v1158
        %v1195 = vunpack.c.l.b16 %v1159
        %v1196 = vunpack.c.l.b16 %v1160
        %v1197 = vunpack.c.l.b16 %v1161
        %v1198 = vunpack.c.l.b16 %v1162
        %v1199 = vunpack.c.l.b16 %v1163
        %v1200 = vpack.c.b16 %v1185, %v1184
        %v1201 = vpack.c.b16 %v1187, %v1186
        %v1202 = vpack.c.b16 %v1189, %v1188
        %v1203 = vpack.c.b16 %v1191, %v1190
        %v1204 = vpack.c.b16 %v1193, %v1192
        %v1205 = vpack.c.b16 %v1195, %v1194
        %v1206 = vpack.c.b16 %v1197, %v1196
        %v1207 = vpack.c.b16 %v1199, %v1198
        %1216 = vmatprep.subr.bf16.mxu0 0
        %1217 = vmatpush1.bf16.msra.mxu0 %v1200
        %1218 = vmatprep.subr.bf16.mxu0 0
        %1219 = vmatpush1.bf16.msra.mxu0 %v1201
        %1220 = vmatprep.subr.bf16.mxu0 0
        %1221 = vmatpush1.bf16.msra.mxu0 %v1202
        %1222 = vmatprep.subr.bf16.mxu0 0
        %1223 = vmatpush1.bf16.msra.mxu0 %v1203
        %1224 = vmatprep.subr.bf16.mxu0 0
        %1225 = vmatpush1.bf16.msra.mxu0 %v1204
        %1226 = vmatprep.subr.bf16.mxu0 0
        %1227 = vmatpush1.bf16.msra.mxu0 %v1205
        %1228 = vmatprep.subr.bf16.mxu0 0
        %1229 = vmatpush1.bf16.msra.mxu0 %v1206
        %1230 = vmatprep.subr.bf16.mxu0 0
        %1231 = vmatpush1.bf16.msra.mxu0 %v1207
        %1232 = vmatprep.subr.bf16.mxu0 0
        %1233 = vmatpush1.bf16.msra.mxu0 0
        %1234 = vmatprep.subr.bf16.mxu0 0
        %1235 = vmatpush1.bf16.msra.mxu0 0
        %1236 = vmatprep.subr.bf16.mxu0 0
        %1237 = vmatpush1.bf16.msra.mxu0 0
        %1238 = vmatprep.subr.bf16.mxu0 0
        %1239 = vmatpush1.bf16.msra.mxu0 0
        %1240 = vmatprep.subr.bf16.mxu0 0
        %1241 = vmatpush1.bf16.msra.mxu0 0
        %1242 = vmatprep.subr.bf16.mxu0 0
        %1243 = vmatpush1.bf16.msra.mxu0 0
        %1244 = vmatprep.subr.bf16.mxu0 0
        %1245 = vmatpush1.bf16.msra.mxu0 0
        %1246 = vmatprep.subr.bf16.mxu0 0
        %1247 = vmatpush1.bf16.msra.mxu0 0
        %1248 = vmatprep.mubr.bf16.mxu0 0
        %1249 = vmatmul.mubr.bf16.gmra.mrb[0].mxu0 %v1147
        %v1250 = vpop.f32.mrb[0].mxu0
        %v1251 = vadd.f32 %v1167, %v1250
        %v1252 = vpop.f32.mrb[0].mxu0
        %v1253 = vpop.f32.mrb[0].mxu0
        %v1254 = vadd.f32 %v1167, %v1253
        %v1255 = vpop.f32.mrb[0].mxu0
        %1256 = vdwg.mxu0
        %v1257 = vadd.f32 %v1251, %v355
        %v1258 = vadd.f32 %v1254, %v356
        %1259 = vadd.xlane.f32.xlu0 %v1257
        %v1260 = vpop.xlane.xlu0 %1259
        %1261 = vadd.xlane.f32.xlu0 %v1258
        %v1262 = vpop.xlane.xlu0 %1261
        %v1263 = vrcp.pop 128.0
        %v1264 = vmul.f32 %v1260, %v1263
        %v1265 = vmul.f32 %v1262, %v1263
        %v1266 = vsub.f32 %v1257, %v1264
        %v1267 = vsub.f32 %v1258, %v1265
        %v1268 = vmul.f32 %v1266, %v1266
        %v1269 = vmul.f32 %v1267, %v1267
        %1270 = vadd.xlane.f32.xlu0 %v1268
        %v1271 = vpop.xlane.xlu0 %1270
        %1272 = vadd.xlane.f32.xlu0 %v1269
        %v1273 = vpop.xlane.xlu0 %1272
        %v1274 = vmul.f32 %v1271, %v1263
        %v1275 = vmul.f32 %v1273, %v1263
        %v1276 = vadd.f32 %v1274, 1e-05
        %v1277 = vadd.f32 %v1275, 1e-05
        %v1278 = vrsqrt.pop %v1276
        %v1279 = vrsqrt.pop %v1277
        %v1280 = vmul.f32 %v1266, %v1278
        %v1281 = vmul.f32 %v1267, %v1279
        %v1282 = vlaneseq
        %v1283 = vshrl.u32 %v1282, 7
        %v1284 = vsub.s32 4, %v1283
        %v1285 = vrot.slane %v357, %v1284
        %v1286 = vmul.f32 %v1280, %v1285
        %v1287 = vmul.f32 %v1281, %v1285
        %v1288 = vlaneseq
        %v1289 = vshrl.u32 %v1288, 7
        %v1290 = vsub.s32 5, %v1289
        %v1291 = vrot.slane %v357, %v1290
        %v1292 = vadd.f32 %v1286, %v1291
        %v1293 = vadd.f32 %v1287, %v1291
        %v1294 = vpack.c.bf16 %v1293, %v1292
        %v1295 = vld [vmem:[#allocation2 + $0x10] sm:$0xf]
        %v1296 = vld [vmem:[#allocation2 + $0x28] sm:$0xf]
        %v1297 = vld [vmem:[#allocation2 + $0x40] sm:$0xf]
        %v1298 = vld [vmem:[#allocation2 + $0x58] sm:$0xf]
        %v1299 = vld [vmem:[#allocation2 + $0x70] sm:$0xf]
        %v1300 = vld [vmem:[#allocation2 + $0x88] sm:$0xf]
        %v1301 = vld [vmem:[#allocation2 + $0xa0] sm:$0xf]
        %v1302 = vld [vmem:[#allocation2 + $0xb8] sm:$0xf]
        %v1303 = vld [vmem:[#allocation2 + $0xd0] sm:$0xf]
        %v1304 = vld [vmem:[#allocation2 + $0xe8] sm:$0xf]
        %v1305 = vld [vmem:[#allocation2 + $0x100] sm:$0xf]
        %v1306 = vld [vmem:[#allocation2 + $0x118] sm:$0xf]
        %v1307 = vld [vmem:[#allocation2 + $0x130] sm:$0xf]
        %v1308 = vld [vmem:[#allocation2 + $0x148] sm:$0xf]
        %v1309 = vld [vmem:[#allocation2 + $0x160] sm:$0xf]
        %v1310 = vld [vmem:[#allocation2 + $0x178] sm:$0xf]
        %v1311 = vlaneseq
        %v1312 = vshrl.u32 %v1311, 7
        %v1313 = vsub.s32 6, %v1312
        %v1314 = vrot.slane %v357, %v1313
        %v1331 = vunpack.c.l.b16 %v1295
        %v1332 = vunpack.c.l.b16 %v1296
        %v1333 = vunpack.c.l.b16 %v1297
        %v1334 = vunpack.c.l.b16 %v1298
        %v1335 = vunpack.c.l.b16 %v1299
        %v1336 = vunpack.c.l.b16 %v1300
        %v1337 = vunpack.c.l.b16 %v1301
        %v1338 = vunpack.c.l.b16 %v1302
        %v1339 = vunpack.c.l.b16 %v1303
        %v1340 = vunpack.c.l.b16 %v1304
        %v1341 = vunpack.c.l.b16 %v1305
        %v1342 = vunpack.c.l.b16 %v1306
        %v1343 = vunpack.c.l.b16 %v1307
        %v1344 = vunpack.c.l.b16 %v1308
        %v1345 = vunpack.c.l.b16 %v1309
        %v1346 = vunpack.c.l.b16 %v1310
        %v1347 = vpack.c.b16 %v1332, %v1331
        %v1348 = vpack.c.b16 %v1334, %v1333
        %v1349 = vpack.c.b16 %v1336, %v1335
        %v1350 = vpack.c.b16 %v1338, %v1337
        %v1351 = vpack.c.b16 %v1340, %v1339
        %v1352 = vpack.c.b16 %v1342, %v1341
        %v1353 = vpack.c.b16 %v1344, %v1343
        %v1354 = vpack.c.b16 %v1346, %v1345
        %1363 = vmatprep.subr.bf16.mxu0 0
        %1364 = vmatpush1.bf16.msra.mxu0 %v1347
        %1365 = vmatprep.subr.bf16.mxu0 0
        %1366 = vmatpush1.bf16.msra.mxu0 %v1348
        %1367 = vmatprep.subr.bf16.mxu0 0
        %1368 = vmatpush1.bf16.msra.mxu0 %v1349
        %1369 = vmatprep.subr.bf16.mxu0 0
        %1370 = vmatpush1.bf16.msra.mxu0 %v1350
        %1371 = vmatprep.subr.bf16.mxu0 0
        %1372 = vmatpush1.bf16.msra.mxu0 %v1351
        %1373 = vmatprep.subr.bf16.mxu0 0
        %1374 = vmatpush1.bf16.msra.mxu0 %v1352
        %1375 = vmatprep.subr.bf16.mxu0 0
        %1376 = vmatpush1.bf16.msra.mxu0 %v1353
        %1377 = vmatprep.subr.bf16.mxu0 0
        %1378 = vmatpush1.bf16.msra.mxu0 %v1354
        %1379 = vmatprep.subr.bf16.mxu0 0
        %1380 = vmatpush1.bf16.msra.mxu0 0
        %1381 = vmatprep.subr.bf16.mxu0 0
        %1382 = vmatpush1.bf16.msra.mxu0 0
        %1383 = vmatprep.subr.bf16.mxu0 0
        %1384 = vmatpush1.bf16.msra.mxu0 0
        %1385 = vmatprep.subr.bf16.mxu0 0
        %1386 = vmatpush1.bf16.msra.mxu0 0
        %1387 = vmatprep.subr.bf16.mxu0 0
        %1388 = vmatpush1.bf16.msra.mxu0 0
        %1389 = vmatprep.subr.bf16.mxu0 0
        %1390 = vmatpush1.bf16.msra.mxu0 0
        %1391 = vmatprep.subr.bf16.mxu0 0
        %1392 = vmatpush1.bf16.msra.mxu0 0
        %1393 = vmatprep.subr.bf16.mxu0 0
        %1394 = vmatpush1.bf16.msra.mxu0 0
        %1395 = vmatprep.mubr.bf16.mxu0 0
        %1396 = vmatmul.mubr.bf16.gmra.mrb[0].mxu0 %v1294
        %v1397 = vpop.f32.mrb[0].mxu0
        %v1398 = vadd.f32 %v1314, %v1397
        %v1399 = vpop.f32.mrb[0].mxu0
        %v1400 = vpop.f32.mrb[0].mxu0
        %v1401 = vadd.f32 %v1314, %v1400
        %v1402 = vpop.f32.mrb[0].mxu0
        %1403 = vdwg.mxu0
        %v1404 = vmax.f32 %v1398, 0.0
        %v1405 = vmax.f32 %v1401, 0.0
        %v1406 = vpack.c.bf16 %v1405, %v1404
        %v1407 = vld [vmem:[#allocation2 + $0x14] sm:$0xf]
        %v1408 = vld [vmem:[#allocation2 + $0x2c] sm:$0xf]
        %v1409 = vld [vmem:[#allocation2 + $0x44] sm:$0xf]
        %v1410 = vld [vmem:[#allocation2 + $0x5c] sm:$0xf]
        %v1411 = vld [vmem:[#allocation2 + $0x74] sm:$0xf]
        %v1412 = vld [vmem:[#allocation2 + $0x8c] sm:$0xf]
        %v1413 = vld [vmem:[#allocation2 + $0xa4] sm:$0xf]
        %v1414 = vld [vmem:[#allocation2 + $0xbc] sm:$0xf]
        %v1415 = vld [vmem:[#allocation2 + $0xd4] sm:$0xf]
        %v1416 = vld [vmem:[#allocation2 + $0xec] sm:$0xf]
        %v1417 = vld [vmem:[#allocation2 + $0x104] sm:$0xf]
        %v1418 = vld [vmem:[#allocation2 + $0x11c] sm:$0xf]
        %v1419 = vld [vmem:[#allocation2 + $0x134] sm:$0xf]
        %v1420 = vld [vmem:[#allocation2 + $0x14c] sm:$0xf]
        %v1421 = vld [vmem:[#allocation2 + $0x164] sm:$0xf]
        %v1422 = vld [vmem:[#allocation2 + $0x17c] sm:$0xf]
        %v1423 = vlaneseq
        %v1424 = vshrl.u32 %v1423, 7
        %v1425 = vsub.s32 7, %v1424
        %v1426 = vrot.slane %v357, %v1425
        %v1443 = vunpack.c.l.b16 %v1407
        %v1444 = vunpack.c.l.b16 %v1408
        %v1445 = vunpack.c.l.b16 %v1409
        %v1446 = vunpack.c.l.b16 %v1410
        %v1447 = vunpack.c.l.b16 %v1411
        %v1448 = vunpack.c.l.b16 %v1412
        %v1449 = vunpack.c.l.b16 %v1413
        %v1450 = vunpack.c.l.b16 %v1414
        %v1451 = vunpack.c.l.b16 %v1415
        %v1452 = vunpack.c.l.b16 %v1416
        %v1453 = vunpack.c.l.b16 %v1417
        %v1454 = vunpack.c.l.b16 %v1418
        %v1455 = vunpack.c.l.b16 %v1419
        %v1456 = vunpack.c.l.b16 %v1420
        %v1457 = vunpack.c.l.b16 %v1421
        %v1458 = vunpack.c.l.b16 %v1422
        %v1459 = vpack.c.b16 %v1444, %v1443
        %v1460 = vpack.c.b16 %v1446, %v1445
        %v1461 = vpack.c.b16 %v1448, %v1447
        %v1462 = vpack.c.b16 %v1450, %v1449
        %v1463 = vpack.c.b16 %v1452, %v1451
        %v1464 = vpack.c.b16 %v1454, %v1453
        %v1465 = vpack.c.b16 %v1456, %v1455
        %v1466 = vpack.c.b16 %v1458, %v1457
        %1475 = vmatprep.subr.bf16.mxu0 0
        %1476 = vmatpush1.bf16.msra.mxu0 %v1459
        %1477 = vmatprep.subr.bf16.mxu0 0
        %1478 = vmatpush1.bf16.msra.mxu0 %v1460
        %1479 = vmatprep.subr.bf16.mxu0 0
        %1480 = vmatpush1.bf16.msra.mxu0 %v1461
        %1481 = vmatprep.subr.bf16.mxu0 0
        %1482 = vmatpush1.bf16.msra.mxu0 %v1462
        %1483 = vmatprep.subr.bf16.mxu0 0
        %1484 = vmatpush1.bf16.msra.mxu0 %v1463
        %1485 = vmatprep.subr.bf16.mxu0 0
        %1486 = vmatpush1.bf16.msra.mxu0 %v1464
        %1487 = vmatprep.subr.bf16.mxu0 0
        %1488 = vmatpush1.bf16.msra.mxu0 %v1465
        %1489 = vmatprep.subr.bf16.mxu0 0
        %1490 = vmatpush1.bf16.msra.mxu0 %v1466
        %1491 = vmatprep.subr.bf16.mxu0 0
        %1492 = vmatpush1.bf16.msra.mxu0 0
        %1493 = vmatprep.subr.bf16.mxu0 0
        %1494 = vmatpush1.bf16.msra.mxu0 0
        %1495 = vmatprep.subr.bf16.mxu0 0
        %1496 = vmatpush1.bf16.msra.mxu0 0
        %1497 = vmatprep.subr.bf16.mxu0 0
        %1498 = vmatpush1.bf16.msra.mxu0 0
        %1499 = vmatprep.subr.bf16.mxu0 0
        %1500 = vmatpush1.bf16.msra.mxu0 0
        %1501 = vmatprep.subr.bf16.mxu0 0
        %1502 = vmatpush1.bf16.msra.mxu0 0
        %1503 = vmatprep.subr.bf16.mxu0 0
        %1504 = vmatpush1.bf16.msra.mxu0 0
        %1505 = vmatprep.subr.bf16.mxu0 0
        %1506 = vmatpush1.bf16.msra.mxu0 0
        %1507 = vmatprep.mubr.bf16.mxu0 0
        %1508 = vmatmul.mubr.bf16.gmra.mrb[0].mxu0 %v1406
        %v1509 = vpop.f32.mrb[0].mxu0
        %v1510 = vadd.f32 %v1426, %v1509
        %v1511 = vpop.f32.mrb[0].mxu0
        %v1512 = vpop.f32.mrb[0].mxu0
        %v1513 = vadd.f32 %v1426, %v1512
        %v1514 = vpop.f32.mrb[0].mxu0
        %1515 = vdwg.mxu0
        %v1516 = vadd.f32 %v1510, %v1292
        %v1517 = vadd.f32 %v1513, %v1293
        %1518 = vadd.xlane.f32.xlu0 %v1516
        %v1519 = vpop.xlane.xlu0 %1518
        %1520 = vadd.xlane.f32.xlu0 %v1517
        %v1521 = vpop.xlane.xlu0 %1520
        %v1522 = vmul.f32 %v1519, %v1263
        %v1523 = vmul.f32 %v1521, %v1263
        %v1524 = vsub.f32 %v1516, %v1522
        %v1525 = vsub.f32 %v1517, %v1523
        %v1526 = vmul.f32 %v1524, %v1524
        %v1527 = vmul.f32 %v1525, %v1525
        %1528 = vadd.xlane.f32.xlu0 %v1526
        %v1529 = vpop.xlane.xlu0 %1528
        %1530 = vadd.xlane.f32.xlu0 %v1527
        %v1531 = vpop.xlane.xlu0 %1530
        %v1532 = vmul.f32 %v1529, %v1263
        %v1533 = vmul.f32 %v1531, %v1263
        %v1534 = vadd.f32 %v1532, 1e-05
        %v1535 = vadd.f32 %v1533, 1e-05
        %v1536 = vrsqrt.pop %v1534
        %v1537 = vrsqrt.pop %v1535
        %v1538 = vmul.f32 %v1524, %v1536
        %v1539 = vmul.f32 %v1525, %v1537
        %v1540 = vlaneseq
        %v1541 = vshrl.u32 %v1540, 7
        %v1542 = vsub.s32 0, %v1541
        %v1543 = vrot.slane %v358, %v1542
        %v1544 = vmul.f32 %v1538, %v1543
        %v1545 = vmul.f32 %v1539, %v1543
        %v1546 = vlaneseq
        %v1547 = vshrl.u32 %v1546, 7
        %v1548 = vsub.s32 1, %v1547
        %v1549 = vrot.slane %v358, %v1548
        %v1550 = vadd.f32 %v1544, %v1549
        %v1551 = vadd.f32 %v1545, %v1549
        %s1552 = scalar_lea.vmem %s4, 16
        %v1553 = vld [vmem:[%s1552] sm:$0xff]
        %v1554 = vld [vmem:[%s1552 + $0x8] sm:$0x3]
        %v1555 = vpack.c.bf16 %v1551, %v1550
        %s1556 = scalar_lea.vmem [#allocation2], 384
        %v1557 = vld [vmem:[%s1556] sm:$0xff]
        %v1558 = vld [vmem:[%s1556 + $0x8] sm:$0xf]
        %v1559 = vld [vmem:[%s1556 + $0x18] sm:$0xff]
        %v1560 = vld [vmem:[%s1556 + $0x20] sm:$0xf]
        %v1561 = vld [vmem:[%s1556 + $0x30] sm:$0xff]
        %v1562 = vld [vmem:[%s1556 + $0x38] sm:$0xf]
        %v1563 = vld [vmem:[%s1556 + $0x48] sm:$0xff]
        %v1564 = vld [vmem:[%s1556 + $0x50] sm:$0xf]
        %v1565 = vld [vmem:[%s1556 + $0x60] sm:$0xff]
        %v1566 = vld [vmem:[%s1556 + $0x68] sm:$0xf]
        %v1567 = vld [vmem:[%s1556 + $0x78] sm:$0xff]
        %v1568 = vld [vmem:[%s1556 + $0x80] sm:$0xf]
        %v1569 = vld [vmem:[%s1556 + $0x90] sm:$0xff]
        %v1570 = vld [vmem:[%s1556 + $0x98] sm:$0xf]
        %v1571 = vld [vmem:[%s1556 + $0xa8] sm:$0xff]
        %v1572 = vld [vmem:[%s1556 + $0xb0] sm:$0xf]
        %v1573 = vld [vmem:[%s1556 + $0xc0] sm:$0xff]
        %v1574 = vld [vmem:[%s1556 + $0xc8] sm:$0xf]
        %v1575 = vld [vmem:[%s1556 + $0xd8] sm:$0xff]
        %v1576 = vld [vmem:[%s1556 + $0xe0] sm:$0xf]
        %v1577 = vld [vmem:[%s1556 + $0xf0] sm:$0xff]
        %v1578 = vld [vmem:[%s1556 + $0xf8] sm:$0xf]
        %v1579 = vld [vmem:[%s1556 + $0x108] sm:$0xff]
        %v1580 = vld [vmem:[%s1556 + $0x110] sm:$0xf]
        %v1581 = vld [vmem:[%s1556 + $0x120] sm:$0xff]
        %v1582 = vld [vmem:[%s1556 + $0x128] sm:$0xf]
        %v1583 = vld [vmem:[%s1556 + $0x138] sm:$0xff]
        %v1584 = vld [vmem:[%s1556 + $0x140] sm:$0xf]
        %v1585 = vld [vmem:[%s1556 + $0x150] sm:$0xff]
        %v1586 = vld [vmem:[%s1556 + $0x158] sm:$0xf]
        %v1587 = vld [vmem:[%s1556 + $0x168] sm:$0xff]
        %v1588 = vld [vmem:[%s1556 + $0x170] sm:$0xf]
        %v1621 = vunpack.c.l.b16 %v1557
        %v1622 = vunpack.c.h.b16 %v1557
        %v1623 = vunpack.c.l.b16 %v1558
        %v1624 = vunpack.c.l.b16 %v1559
        %v1625 = vunpack.c.h.b16 %v1559
        %v1626 = vunpack.c.l.b16 %v1560
        %v1627 = vunpack.c.l.b16 %v1561
        %v1628 = vunpack.c.h.b16 %v1561
        %v1629 = vunpack.c.l.b16 %v1562
        %v1630 = vunpack.c.l.b16 %v1563
        %v1631 = vunpack.c.h.b16 %v1563
        %v1632 = vunpack.c.l.b16 %v1564
        %v1633 = vunpack.c.l.b16 %v1565
        %v1634 = vunpack.c.h.b16 %v1565
        %v1635 = vunpack.c.l.b16 %v1566
        %v1636 = vunpack.c.l.b16 %v1567
        %v1637 = vunpack.c.h.b16 %v1567
        %v1638 = vunpack.c.l.b16 %v1568
        %v1639 = vunpack.c.l.b16 %v1569
        %v1640 = vunpack.c.h.b16 %v1569
        %v1641 = vunpack.c.l.b16 %v1570
        %v1642 = vunpack.c.l.b16 %v1571
        %v1643 = vunpack.c.h.b16 %v1571
        %v1644 = vunpack.c.l.b16 %v1572
        %v1645 = vunpack.c.l.b16 %v1573
        %v1646 = vunpack.c.h.b16 %v1573
        %v1647 = vunpack.c.l.b16 %v1574
        %v1648 = vunpack.c.l.b16 %v1575
        %v1649 = vunpack.c.h.b16 %v1575
        %v1650 = vunpack.c.l.b16 %v1576
        %v1651 = vunpack.c.l.b16 %v1577
        %v1652 = vunpack.c.h.b16 %v1577
        %v1653 = vunpack.c.l.b16 %v1578
        %v1654 = vunpack.c.l.b16 %v1579
        %v1655 = vunpack.c.h.b16 %v1579
        %v1656 = vunpack.c.l.b16 %v1580
        %v1657 = vunpack.c.l.b16 %v1581
        %v1658 = vunpack.c.h.b16 %v1581
        %v1659 = vunpack.c.l.b16 %v1582
        %v1660 = vunpack.c.l.b16 %v1583
        %v1661 = vunpack.c.h.b16 %v1583
        %v1662 = vunpack.c.l.b16 %v1584
        %v1663 = vunpack.c.l.b16 %v1585
        %v1664 = vunpack.c.h.b16 %v1585
        %v1665 = vunpack.c.l.b16 %v1586
        %v1666 = vunpack.c.l.b16 %v1587
        %v1667 = vunpack.c.h.b16 %v1587
        %v1668 = vunpack.c.l.b16 %v1588
        %v1669 = vpack.c.b16 %v1624, %v1621
        %v1670 = vpack.c.b16 %v1625, %v1622
        %v1671 = vpack.c.b16 %v1626, %v1623
        %v1672 = vpack.c.b16 %v1630, %v1627
        %v1673 = vpack.c.b16 %v1631, %v1628
        %v1674 = vpack.c.b16 %v1632, %v1629
        %v1675 = vpack.c.b16 %v1636, %v1633
        %v1676 = vpack.c.b16 %v1637, %v1634
        %v1677 = vpack.c.b16 %v1638, %v1635
        %v1678 = vpack.c.b16 %v1642, %v1639
        %v1679 = vpack.c.b16 %v1643, %v1640
        %v1680 = vpack.c.b16 %v1644, %v1641
        %v1681 = vpack.c.b16 %v1648, %v1645
        %v1682 = vpack.c.b16 %v1649, %v1646
        %v1683 = vpack.c.b16 %v1650, %v1647
        %v1684 = vpack.c.b16 %v1654, %v1651
        %v1685 = vpack.c.b16 %v1655, %v1652
        %v1686 = vpack.c.b16 %v1656, %v1653
        %v1687 = vpack.c.b16 %v1660, %v1657
        %v1688 = vpack.c.b16 %v1661, %v1658
        %v1689 = vpack.c.b16 %v1662, %v1659
        %v1690 = vpack.c.b16 %v1666, %v1663
        %v1691 = vpack.c.b16 %v1667, %v1664
        %v1692 = vpack.c.b16 %v1668, %v1665
        %1717 = vmatprep.subr.bf16.mxu0 %v1670
        %1718 = vmatpush1.bf16.msra.mxu0 %v1669
        %1719 = vmatprep.subr.bf16.mxu0 %v1673
        %1720 = vmatpush1.bf16.msra.mxu0 %v1672
        %1721 = vmatprep.subr.bf16.mxu0 %v1676
        %1722 = vmatpush1.bf16.msra.mxu0 %v1675
        %1723 = vmatprep.subr.bf16.mxu0 %v1679
        %1724 = vmatpush1.bf16.msra.mxu0 %v1678
        %1725 = vmatprep.subr.bf16.mxu0 %v1682
        %1726 = vmatpush1.bf16.msra.mxu0 %v1681
        %1727 = vmatprep.subr.bf16.mxu0 %v1685
        %1728 = vmatpush1.bf16.msra.mxu0 %v1684
        %1729 = vmatprep.subr.bf16.mxu0 %v1688
        %1730 = vmatpush1.bf16.msra.mxu0 %v1687
        %1731 = vmatprep.subr.bf16.mxu0 %v1691
        %1732 = vmatpush1.bf16.msra.mxu0 %v1690
        %1733 = vmatprep.subr.bf16.mxu0 0
        %1734 = vmatpush1.bf16.msra.mxu0 0
        %1735 = vmatprep.subr.bf16.mxu0 0
        %1736 = vmatpush1.bf16.msra.mxu0 0
        %1737 = vmatprep.subr.bf16.mxu0 0
        %1738 = vmatpush1.bf16.msra.mxu0 0
        %1739 = vmatprep.subr.bf16.mxu0 0
        %1740 = vmatpush1.bf16.msra.mxu0 0
        %1741 = vmatprep.subr.bf16.mxu0 0
        %1742 = vmatpush1.bf16.msra.mxu0 0
        %1743 = vmatprep.subr.bf16.mxu0 0
        %1744 = vmatpush1.bf16.msra.mxu0 0
        %1745 = vmatprep.subr.bf16.mxu0 0
        %1746 = vmatpush1.bf16.msra.mxu0 0
        %1747 = vmatprep.subr.bf16.mxu0 0
        %1748 = vmatpush1.bf16.msra.mxu0 0
        %1749 = vmatprep.mubr.bf16.mxu0 0
        %1750 = vmatmul.mubr.bf16.gmra.mrb[0].mxu0 %v1555
        %v1751 = vpop.f32.mrb[0].mxu0
        %v1752 = vadd.f32 0.0, %v1751
        %v1753 = vpop.f32.mrb[0].mxu0
        %v1754 = vadd.f32 0.0, %v1753
        %v1755 = vpop.f32.mrb[0].mxu0
        %v1756 = vadd.f32 0.0, %v1755
        %v1757 = vpop.f32.mrb[0].mxu0
        %v1758 = vadd.f32 0.0, %v1757
        %1759 = vdwg.mxu0
        %1760 = vmatprep.subr.bf16.mxu0 0
        %1761 = vmatpush1.bf16.msra.mxu0 %v1671
        %1762 = vmatprep.subr.bf16.mxu0 0
        %1763 = vmatpush1.bf16.msra.mxu0 %v1674
        %1764 = vmatprep.subr.bf16.mxu0 0
        %1765 = vmatpush1.bf16.msra.mxu0 %v1677
        %1766 = vmatprep.subr.bf16.mxu0 0
        %1767 = vmatpush1.bf16.msra.mxu0 %v1680
        %1768 = vmatprep.subr.bf16.mxu0 0
        %1769 = vmatpush1.bf16.msra.mxu0 %v1683
        %1770 = vmatprep.subr.bf16.mxu0 0
        %1771 = vmatpush1.bf16.msra.mxu0 %v1686
        %1772 = vmatprep.subr.bf16.mxu0 0
        %1773 = vmatpush1.bf16.msra.mxu0 %v1689
        %1774 = vmatprep.subr.bf16.mxu0 0
        %1775 = vmatpush1.bf16.msra.mxu0 %v1692
        %1776 = vmatprep.subr.bf16.mxu0 0
        %1777 = vmatpush1.bf16.msra.mxu0 0
        %1778 = vmatprep.subr.bf16.mxu0 0
        %1779 = vmatpush1.bf16.msra.mxu0 0
        %1780 = vmatprep.subr.bf16.mxu0 0
        %1781 = vmatpush1.bf16.msra.mxu0 0
        %1782 = vmatprep.subr.bf16.mxu0 0
        %1783 = vmatpush1.bf16.msra.mxu0 0
        %1784 = vmatprep.subr.bf16.mxu0 0
        %1785 = vmatpush1.bf16.msra.mxu0 0
        %1786 = vmatprep.subr.bf16.mxu0 0
        %1787 = vmatpush1.bf16.msra.mxu0 0
        %1788 = vmatprep.subr.bf16.mxu0 0
        %1789 = vmatpush1.bf16.msra.mxu0 0
        %1790 = vmatprep.subr.bf16.mxu0 0
        %1791 = vmatpush1.bf16.msra.mxu0 0
        %1792 = vmatprep.mubr.bf16.mxu0 0
        %1793 = vmatmul.mubr.bf16.gmra.mrb[0].mxu0 %v1555
        %v1794 = vpop.f32.mrb[0].mxu0
        %v1795 = vadd.f32 0.0, %v1794
        %v1796 = vpop.f32.mrb[0].mxu0
        %v1797 = vpop.f32.mrb[0].mxu0
        %v1798 = vadd.f32 0.0, %v1797
        %v1799 = vpop.f32.mrb[0].mxu0
        %1800 = vdwg.mxu0
        %v1801 = vlaneseq
        %v1802 = vshrl.u32 %v1801, 7
        %v1803 = vsub.s32 0, %v1802
        %v1804 = vrot.slane %v1553, %v1803
        %v1805 = vadd.f32 %v1752, %v1804
        %v1806 = vadd.f32 %v1756, %v1804
        %v1807 = vpack.c.bf16 %v1806, %v1805
        %v1808 = vlaneseq
        %v1809 = vshrl.u32 %v1808, 7
        %v1810 = vsub.s32 1, %v1809
        %v1811 = vrot.slane %v1553, %v1810
        %v1812 = vadd.f32 %v1754, %v1811
        %v1813 = vadd.f32 %v1758, %v1811
        %v1814 = vpack.c.bf16 %v1813, %v1812
        %v1815 = vlaneseq
        %v1816 = vshrl.u32 %v1815, 7
        %v1817 = vsub.s32 2, %v1816
        %v1818 = vrot.slane %v1553, %v1817
        %v1819 = vadd.f32 %v1795, %v1818
        %v1820 = vadd.f32 %v1798, %v1818
        %v1821 = vpack.c.bf16 %v1820, %v1819
        %v1823 = vsel %vm625, %v1807, 0
        %v1826 = vsel %vm625, %v1814, 0
        %1828 = vmatprep.subr.bf16.mxu0 0
        %1829 = vmatpush1.bf16.xpose.msra.mxu0 %v1826
        %1830 = vmatprep.subr.bf16.mxu0 0
        %1831 = vmatpush1.bf16.xpose.msra.mxu0 0
        %1832 = vmatprep.subr.bf16.mxu0 0
        %1833 = vmatpush1.bf16.xpose.msra.mxu0 0
        %1834 = vmatprep.subr.bf16.mxu0 0
        %1835 = vmatpush1.bf16.xpose.msra.mxu0 0
        %1836 = vmatprep.subr.bf16.mxu0 0
        %1837 = vmatpush1.bf16.xpose.msra.mxu0 0
        %1838 = vmatprep.subr.bf16.mxu0 0
        %1839 = vmatpush1.bf16.xpose.msra.mxu0 0
        %1840 = vmatprep.subr.bf16.mxu0 0
        %1841 = vmatpush1.bf16.xpose.msra.mxu0 0
        %1842 = vmatprep.subr.bf16.mxu0 0
        %1843 = vmatpush1.bf16.xpose.msra.mxu0 0
        %1844 = vmatprep.subr.bf16.mxu0 0
        %1845 = vmatpush1.bf16.xpose.msra.mxu0 0
        %1846 = vmatprep.subr.bf16.mxu0 0
        %1847 = vmatpush1.bf16.xpose.msra.mxu0 0
        %1848 = vmatprep.subr.bf16.mxu0 0
        %1849 = vmatpush1.bf16.xpose.msra.mxu0 0
        %1850 = vmatprep.subr.bf16.mxu0 0
        %1851 = vmatpush1.bf16.xpose.msra.mxu0 0
        %1852 = vmatprep.subr.bf16.mxu0 0
        %1853 = vmatpush1.bf16.xpose.msra.mxu0 0
        %1854 = vmatprep.subr.bf16.mxu0 0
        %1855 = vmatpush1.bf16.xpose.msra.mxu0 0
        %1856 = vmatprep.subr.bf16.mxu0 0
        %1857 = vmatpush1.bf16.xpose.msra.mxu0 0
        %1858 = vmatprep.subr.bf16.mxu0 0
        %1859 = vmatpush1.bf16.xpose.msra.mxu0 0
        %1860 = vmatprep.mubr.bf16.mxu0 0
        %1861 = vmatmul.mubr.bf16.gmra.mrb[0].mxu0 %v1823
        %v1862 = vpop.f32.mrb[0].mxu0
        %v1863 = vadd.f32 0.0, %v1862
        %v1864 = vpop.f32.mrb[0].mxu0
        %v1865 = vpop.f32.mrb[0].mxu0
        %v1866 = vadd.f32 0.0, %v1865
        %v1867 = vpop.f32.mrb[0].mxu0
        %1868 = vdwg.mxu0
        %v1869 = vmul.f32 %v1863, 0.17677669
        %v1870 = vmul.f32 %v1866, 0.17677669
        %v1871 = vsel %vm675, %v1869, -inf
        %1872 = vmax.xlane.f32.xlu0 %v1871
        %v1873 = vpop.xlane.xlu0 %1872
        %v1874 = vsel %vm675, %v1870, -inf
        %1875 = vmax.xlane.f32.xlu0 %v1874
        %v1876 = vpop.xlane.xlu0 %1875
        %v1877 = vsub.f32 %v1869, %v1873
        %v1878 = vsub.f32 %v1870, %v1876
        %v1879 = vmul.f32 %v1877, 1.442695
        %v1880 = vpow.pop %v1879
        %v1881 = vmul.f32 %v1878, 1.442695
        %v1882 = vpow.pop %v1881
        %v1883 = vsel %vm675, %v1880, 0.0
        %1884 = vadd.xlane.f32.xlu0 %v1883
        %v1885 = vpop.xlane.xlu0 %1884
        %v1886 = vsel %vm675, %v1882, 0.0
        %1887 = vadd.xlane.f32.xlu0 %v1886
        %v1888 = vpop.xlane.xlu0 %1887
        %v1889 = vrcp.pop %v1885
        %v1890 = vrcp.pop %v1888
        %v1891 = vmul.f32 %v1880, %v1889
        %v1892 = vmul.f32 %v1882, %v1890
        %v1893 = vpack.c.bf16 %v1892, %v1891
        %v1895 = vsel %vm675, %v1893, 0
        %1897 = vmatprep.subr.bf16.mxu0 0
        %1898 = vmatpush1.bf16.msra.mxu0 %v1821
        %1899 = vmatprep.subr.bf16.mxu0 0
        %1900 = vmatpush1.bf16.msra.mxu0 0
        %1901 = vmatprep.subr.bf16.mxu0 0
        %1902 = vmatpush1.bf16.msra.mxu0 0
        %1903 = vmatprep.subr.bf16.mxu0 0
        %1904 = vmatpush1.bf16.msra.mxu0 0
        %1905 = vmatprep.subr.bf16.mxu0 0
        %1906 = vmatpush1.bf16.msra.mxu0 0
        %1907 = vmatprep.subr.bf16.mxu0 0
        %1908 = vmatpush1.bf16.msra.mxu0 0
        %1909 = vmatprep.subr.bf16.mxu0 0
        %1910 = vmatpush1.bf16.msra.mxu0 0
        %1911 = vmatprep.subr.bf16.mxu0 0
        %1912 = vmatpush1.bf16.msra.mxu0 0
        %1913 = vmatprep.subr.bf16.mxu0 0
        %1914 = vmatpush1.bf16.msra.mxu0 0
        %1915 = vmatprep.subr.bf16.mxu0 0
        %1916 = vmatpush1.bf16.msra.mxu0 0
        %1917 = vmatprep.subr.bf16.mxu0 0
        %1918 = vmatpush1.bf16.msra.mxu0 0
        %1919 = vmatprep.subr.bf16.mxu0 0
        %1920 = vmatpush1.bf16.msra.mxu0 0
        %1921 = vmatprep.subr.bf16.mxu0 0
        %1922 = vmatpush1.bf16.msra.mxu0 0
        %1923 = vmatprep.subr.bf16.mxu0 0
        %1924 = vmatpush1.bf16.msra.mxu0 0
        %1925 = vmatprep.subr.bf16.mxu0 0
        %1926 = vmatpush1.bf16.msra.mxu0 0
        %1927 = vmatprep.subr.bf16.mxu0 0
        %1928 = vmatpush1.bf16.msra.mxu0 0
        %1929 = vmatprep.mubr.bf16.mxu0 0
        %1930 = vmatmul.mubr.bf16.gmra.mrb[0].mxu0 %v1895
        %v1931 = vpop.f32.mrb[0].mxu0
        %v1932 = vadd.f32 0.0, %v1931
        %v1933 = vpop.f32.mrb[0].mxu0
        %v1934 = vpop.f32.mrb[0].mxu0
        %v1935 = vadd.f32 0.0, %v1934
        %v1936 = vpop.f32.mrb[0].mxu0
        %1937 = vdwg.mxu0
        %1939 = vrot.lane.b32.xlu0 %v1807, 96
        %v1940 = vpop.permute.xlu0 %1939
        %1942 = vrot.lane.b32.xlu0 %v1814, 96
        %v1943 = vpop.permute.xlu0 %1942
        %v1945 = vsel %vm625, %v1940, 0
        %v1948 = vsel %vm625, %v1943, 0
        %1950 = vmatprep.subr.bf16.mxu0 0
        %1951 = vmatpush1.bf16.xpose.msra.mxu0 %v1948
        %1952 = vmatprep.subr.bf16.mxu0 0
        %1953 = vmatpush1.bf16.xpose.msra.mxu0 0
        %1954 = vmatprep.subr.bf16.mxu0 0
        %1955 = vmatpush1.bf16.xpose.msra.mxu0 0
        %1956 = vmatprep.subr.bf16.mxu0 0
        %1957 = vmatpush1.bf16.xpose.msra.mxu0 0
        %1958 = vmatprep.subr.bf16.mxu0 0
        %1959 = vmatpush1.bf16.xpose.msra.mxu0 0
        %1960 = vmatprep.subr.bf16.mxu0 0
        %1961 = vmatpush1.bf16.xpose.msra.mxu0 0
        %1962 = vmatprep.subr.bf16.mxu0 0
        %1963 = vmatpush1.bf16.xpose.msra.mxu0 0
        %1964 = vmatprep.subr.bf16.mxu0 0
        %1965 = vmatpush1.bf16.xpose.msra.mxu0 0
        %1966 = vmatprep.subr.bf16.mxu0 0
        %1967 = vmatpush1.bf16.xpose.msra.mxu0 0
        %1968 = vmatprep.subr.bf16.mxu0 0
        %1969 = vmatpush1.bf16.xpose.msra.mxu0 0
        %1970 = vmatprep.subr.bf16.mxu0 0
        %1971 = vmatpush1.bf16.xpose.msra.mxu0 0
        %1972 = vmatprep.subr.bf16.mxu0 0
        %1973 = vmatpush1.bf16.xpose.msra.mxu0 0
        %1974 = vmatprep.subr.bf16.mxu0 0
        %1975 = vmatpush1.bf16.xpose.msra.mxu0 0
        %1976 = vmatprep.subr.bf16.mxu0 0
        %1977 = vmatpush1.bf16.xpose.msra.mxu0 0
        %1978 = vmatprep.subr.bf16.mxu0 0
        %1979 = vmatpush1.bf16.xpose.msra.mxu0 0
        %1980 = vmatprep.subr.bf16.mxu0 0
        %1981 = vmatpush1.bf16.xpose.msra.mxu0 0
        %1982 = vmatprep.mubr.bf16.mxu0 0
        %1983 = vmatmul.mubr.bf16.gmra.mrb[0].mxu0 %v1945
        %v1984 = vpop.f32.mrb[0].mxu0
        %v1985 = vadd.f32 0.0, %v1984
        %v1986 = vpop.f32.mrb[0].mxu0
        %v1987 = vpop.f32.mrb[0].mxu0
        %v1988 = vadd.f32 0.0, %v1987
        %v1989 = vpop.f32.mrb[0].mxu0
        %1990 = vdwg.mxu0
        %v1991 = vmul.f32 %v1985, 0.17677669
        %v1992 = vmul.f32 %v1988, 0.17677669
        %v1993 = vsel %vm675, %v1991, -inf
        %1994 = vmax.xlane.f32.xlu0 %v1993
        %v1995 = vpop.xlane.xlu0 %1994
        %v1996 = vsel %vm675, %v1992, -inf
        %1997 = vmax.xlane.f32.xlu0 %v1996
        %v1998 = vpop.xlane.xlu0 %1997
        %v1999 = vsub.f32 %v1991, %v1995
        %v2000 = vsub.f32 %v1992, %v1998
        %v2001 = vmul.f32 %v1999, 1.442695
        %v2002 = vpow.pop %v2001
        %v2003 = vmul.f32 %v2000, 1.442695
        %v2004 = vpow.pop %v2003
        %v2005 = vsel %vm675, %v2002, 0.0
        %2006 = vadd.xlane.f32.xlu0 %v2005
        %v2007 = vpop.xlane.xlu0 %2006
        %v2008 = vsel %vm675, %v2004, 0.0
        %2009 = vadd.xlane.f32.xlu0 %v2008
        %v2010 = vpop.xlane.xlu0 %2009
        %v2011 = vrcp.pop %v2007
        %v2012 = vrcp.pop %v2010
        %v2013 = vmul.f32 %v2002, %v2011
        %v2014 = vmul.f32 %v2004, %v2012
        %v2015 = vpack.c.bf16 %v2014, %v2013
        %2017 = vrot.lane.b32.xlu0 %v1821, 96
        %v2018 = vpop.permute.xlu0 %2017
        %v2021 = vsel %vm675, %v2015, 0
        %2023 = vmatprep.subr.bf16.mxu0 0
        %2024 = vmatpush1.bf16.msra.mxu0 %v2018
        %2025 = vmatprep.subr.bf16.mxu0 0
        %2026 = vmatpush1.bf16.msra.mxu0 0
        %2027 = vmatprep.subr.bf16.mxu0 0
        %2028 = vmatpush1.bf16.msra.mxu0 0
        %2029 = vmatprep.subr.bf16.mxu0 0
        %2030 = vmatpush1.bf16.msra.mxu0 0
        %2031 = vmatprep.subr.bf16.mxu0 0
        %2032 = vmatpush1.bf16.msra.mxu0 0
        %2033 = vmatprep.subr.bf16.mxu0 0
        %2034 = vmatpush1.bf16.msra.mxu0 0
        %2035 = vmatprep.subr.bf16.mxu0 0
        %2036 = vmatpush1.bf16.msra.mxu0 0
        %2037 = vmatprep.subr.bf16.mxu0 0
        %2038 = vmatpush1.bf16.msra.mxu0 0
        %2039 = vmatprep.subr.bf16.mxu0 0
        %2040 = vmatpush1.bf16.msra.mxu0 0
        %2041 = vmatprep.subr.bf16.mxu0 0
        %2042 = vmatpush1.bf16.msra.mxu0 0
        %2043 = vmatprep.subr.bf16.mxu0 0
        %2044 = vmatpush1.bf16.msra.mxu0 0
        %2045 = vmatprep.subr.bf16.mxu0 0
        %2046 = vmatpush1.bf16.msra.mxu0 0
        %2047 = vmatprep.subr.bf16.mxu0 0
        %2048 = vmatpush1.bf16.msra.mxu0 0
        %2049 = vmatprep.subr.bf16.mxu0 0
        %2050 = vmatpush1.bf16.msra.mxu0 0
        %2051 = vmatprep.subr.bf16.mxu0 0
        %2052 = vmatpush1.bf16.msra.mxu0 0
        %2053 = vmatprep.subr.bf16.mxu0 0
        %2054 = vmatpush1.bf16.msra.mxu0 0
        %2055 = vmatprep.mubr.bf16.mxu0 0
        %2056 = vmatmul.mubr.bf16.gmra.mrb[0].mxu0 %v2021
        %v2057 = vpop.f32.mrb[0].mxu0
        %v2058 = vadd.f32 0.0, %v2057
        %v2059 = vpop.f32.mrb[0].mxu0
        %v2060 = vpop.f32.mrb[0].mxu0
        %v2061 = vadd.f32 0.0, %v2060
        %v2062 = vpop.f32.mrb[0].mxu0
        %2063 = vdwg.mxu0
        %2064 = vrot.lane.b32.xlu0 %v1807, 64
        %v2065 = vpop.permute.xlu0 %2064
        %2066 = vrot.lane.b32.xlu0 %v1814, 64
        %v2067 = vpop.permute.xlu0 %2066
        %v2069 = vsel %vm625, %v2065, 0
        %v2072 = vsel %vm625, %v2067, 0
        %2074 = vmatprep.subr.bf16.mxu0 0
        %2075 = vmatpush1.bf16.xpose.msra.mxu0 %v2072
        %2076 = vmatprep.subr.bf16.mxu0 0
        %2077 = vmatpush1.bf16.xpose.msra.mxu0 0
        %2078 = vmatprep.subr.bf16.mxu0 0
        %2079 = vmatpush1.bf16.xpose.msra.mxu0 0
        %2080 = vmatprep.subr.bf16.mxu0 0
        %2081 = vmatpush1.bf16.xpose.msra.mxu0 0
        %2082 = vmatprep.subr.bf16.mxu0 0
        %2083 = vmatpush1.bf16.xpose.msra.mxu0 0
        %2084 = vmatprep.subr.bf16.mxu0 0
        %2085 = vmatpush1.bf16.xpose.msra.mxu0 0
        %2086 = vmatprep.subr.bf16.mxu0 0
        %2087 = vmatpush1.bf16.xpose.msra.mxu0 0
        %2088 = vmatprep.subr.bf16.mxu0 0
        %2089 = vmatpush1.bf16.xpose.msra.mxu0 0
        %2090 = vmatprep.subr.bf16.mxu0 0
        %2091 = vmatpush1.bf16.xpose.msra.mxu0 0
        %2092 = vmatprep.subr.bf16.mxu0 0
        %2093 = vmatpush1.bf16.xpose.msra.mxu0 0
        %2094 = vmatprep.subr.bf16.mxu0 0
        %2095 = vmatpush1.bf16.xpose.msra.mxu0 0
        %2096 = vmatprep.subr.bf16.mxu0 0
        %2097 = vmatpush1.bf16.xpose.msra.mxu0 0
        %2098 = vmatprep.subr.bf16.mxu0 0
        %2099 = vmatpush1.bf16.xpose.msra.mxu0 0
        %2100 = vmatprep.subr.bf16.mxu0 0
        %2101 = vmatpush1.bf16.xpose.msra.mxu0 0
        %2102 = vmatprep.subr.bf16.mxu0 0
        %2103 = vmatpush1.bf16.xpose.msra.mxu0 0
        %2104 = vmatprep.subr.bf16.mxu0 0
        %2105 = vmatpush1.bf16.xpose.msra.mxu0 0
        %2106 = vmatprep.mubr.bf16.mxu0 0
        %2107 = vmatmul.mubr.bf16.gmra.mrb[0].mxu0 %v2069
        %v2108 = vpop.f32.mrb[0].mxu0
        %v2109 = vadd.f32 0.0, %v2108
        %v2110 = vpop.f32.mrb[0].mxu0
        %v2111 = vpop.f32.mrb[0].mxu0
        %v2112 = vadd.f32 0.0, %v2111
        %v2113 = vpop.f32.mrb[0].mxu0
        %2114 = vdwg.mxu0
        %v2115 = vmul.f32 %v2109, 0.17677669
        %v2116 = vmul.f32 %v2112, 0.17677669
        %v2117 = vsel %vm675, %v2115, -inf
        %2118 = vmax.xlane.f32.xlu0 %v2117
        %v2119 = vpop.xlane.xlu0 %2118
        %v2120 = vsel %vm675, %v2116, -inf
        %2121 = vmax.xlane.f32.xlu0 %v2120
        %v2122 = vpop.xlane.xlu0 %2121
        %v2123 = vsub.f32 %v2115, %v2119
        %v2124 = vsub.f32 %v2116, %v2122
        %v2125 = vmul.f32 %v2123, 1.442695
        %v2126 = vpow.pop %v2125
        %v2127 = vmul.f32 %v2124, 1.442695
        %v2128 = vpow.pop %v2127
        %v2129 = vsel %vm675, %v2126, 0.0
        %2130 = vadd.xlane.f32.xlu0 %v2129
        %v2131 = vpop.xlane.xlu0 %2130
        %v2132 = vsel %vm675, %v2128, 0.0
        %2133 = vadd.xlane.f32.xlu0 %v2132
        %v2134 = vpop.xlane.xlu0 %2133
        %v2135 = vrcp.pop %v2131
        %v2136 = vrcp.pop %v2134
        %v2137 = vmul.f32 %v2126, %v2135
        %v2138 = vmul.f32 %v2128, %v2136
        %v2139 = vpack.c.bf16 %v2138, %v2137
        %2140 = vrot.lane.b32.xlu0 %v1821, 64
        %v2141 = vpop.permute.xlu0 %2140
        %v2144 = vsel %vm675, %v2139, 0
        %2146 = vmatprep.subr.bf16.mxu0 0
        %2147 = vmatpush1.bf16.msra.mxu0 %v2141
        %2148 = vmatprep.subr.bf16.mxu0 0
        %2149 = vmatpush1.bf16.msra.mxu0 0
        %2150 = vmatprep.subr.bf16.mxu0 0
        %2151 = vmatpush1.bf16.msra.mxu0 0
        %2152 = vmatprep.subr.bf16.mxu0 0
        %2153 = vmatpush1.bf16.msra.mxu0 0
        %2154 = vmatprep.subr.bf16.mxu0 0
        %2155 = vmatpush1.bf16.msra.mxu0 0
        %2156 = vmatprep.subr.bf16.mxu0 0
        %2157 = vmatpush1.bf16.msra.mxu0 0
        %2158 = vmatprep.subr.bf16.mxu0 0
        %2159 = vmatpush1.bf16.msra.mxu0 0
        %2160 = vmatprep.subr.bf16.mxu0 0
        %2161 = vmatpush1.bf16.msra.mxu0 0
        %2162 = vmatprep.subr.bf16.mxu0 0
        %2163 = vmatpush1.bf16.msra.mxu0 0
        %2164 = vmatprep.subr.bf16.mxu0 0
        %2165 = vmatpush1.bf16.msra.mxu0 0
        %2166 = vmatprep.subr.bf16.mxu0 0
        %2167 = vmatpush1.bf16.msra.mxu0 0
        %2168 = vmatprep.subr.bf16.mxu0 0
        %2169 = vmatpush1.bf16.msra.mxu0 0
        %2170 = vmatprep.subr.bf16.mxu0 0
        %2171 = vmatpush1.bf16.msra.mxu0 0
        %2172 = vmatprep.subr.bf16.mxu0 0
        %2173 = vmatpush1.bf16.msra.mxu0 0
        %2174 = vmatprep.subr.bf16.mxu0 0
        %2175 = vmatpush1.bf16.msra.mxu0 0
        %2176 = vmatprep.subr.bf16.mxu0 0
        %2177 = vmatpush1.bf16.msra.mxu0 0
        %2178 = vmatprep.mubr.bf16.mxu0 0
        %2179 = vmatmul.mubr.bf16.gmra.mrb[0].mxu0 %v2144
        %v2180 = vpop.f32.mrb[0].mxu0
        %v2181 = vadd.f32 0.0, %v2180
        %v2182 = vpop.f32.mrb[0].mxu0
        %v2183 = vpop.f32.mrb[0].mxu0
        %v2184 = vadd.f32 0.0, %v2183
        %v2185 = vpop.f32.mrb[0].mxu0
        %2186 = vdwg.mxu0
        %2187 = vrot.lane.b32.xlu0 %v1807, 32
        %v2188 = vpop.permute.xlu0 %2187
        %2189 = vrot.lane.b32.xlu0 %v1814, 32
        %v2190 = vpop.permute.xlu0 %2189
        %v2192 = vsel %vm625, %v2188, 0
        %v2195 = vsel %vm625, %v2190, 0
        %2197 = vmatprep.subr.bf16.mxu0 0
        %2198 = vmatpush1.bf16.xpose.msra.mxu0 %v2195
        %2199 = vmatprep.subr.bf16.mxu0 0
        %2200 = vmatpush1.bf16.xpose.msra.mxu0 0
        %2201 = vmatprep.subr.bf16.mxu0 0
        %2202 = vmatpush1.bf16.xpose.msra.mxu0 0
        %2203 = vmatprep.subr.bf16.mxu0 0
        %2204 = vmatpush1.bf16.xpose.msra.mxu0 0
        %2205 = vmatprep.subr.bf16.mxu0 0
        %2206 = vmatpush1.bf16.xpose.msra.mxu0 0
        %2207 = vmatprep.subr.bf16.mxu0 0
        %2208 = vmatpush1.bf16.xpose.msra.mxu0 0
        %2209 = vmatprep.subr.bf16.mxu0 0
        %2210 = vmatpush1.bf16.xpose.msra.mxu0 0
        %2211 = vmatprep.subr.bf16.mxu0 0
        %2212 = vmatpush1.bf16.xpose.msra.mxu0 0
        %2213 = vmatprep.subr.bf16.mxu0 0
        %2214 = vmatpush1.bf16.xpose.msra.mxu0 0
        %2215 = vmatprep.subr.bf16.mxu0 0
        %2216 = vmatpush1.bf16.xpose.msra.mxu0 0
        %2217 = vmatprep.subr.bf16.mxu0 0
        %2218 = vmatpush1.bf16.xpose.msra.mxu0 0
        %2219 = vmatprep.subr.bf16.mxu0 0
        %2220 = vmatpush1.bf16.xpose.msra.mxu0 0
        %2221 = vmatprep.subr.bf16.mxu0 0
        %2222 = vmatpush1.bf16.xpose.msra.mxu0 0
        %2223 = vmatprep.subr.bf16.mxu0 0
        %2224 = vmatpush1.bf16.xpose.msra.mxu0 0
        %2225 = vmatprep.subr.bf16.mxu0 0
        %2226 = vmatpush1.bf16.xpose.msra.mxu0 0
        %2227 = vmatprep.subr.bf16.mxu0 0
        %2228 = vmatpush1.bf16.xpose.msra.mxu0 0
        %2229 = vmatprep.mubr.bf16.mxu0 0
        %2230 = vmatmul.mubr.bf16.gmra.mrb[0].mxu0 %v2192
        %v2231 = vpop.f32.mrb[0].mxu0
        %v2232 = vadd.f32 0.0, %v2231
        %v2233 = vpop.f32.mrb[0].mxu0
        %v2234 = vpop.f32.mrb[0].mxu0
        %v2235 = vadd.f32 0.0, %v2234
        %v2236 = vpop.f32.mrb[0].mxu0
        %2237 = vdwg.mxu0
        %v2238 = vmul.f32 %v2232, 0.17677669
        %v2239 = vmul.f32 %v2235, 0.17677669
        %v2240 = vsel %vm675, %v2238, -inf
        %2241 = vmax.xlane.f32.xlu0 %v2240
        %v2242 = vpop.xlane.xlu0 %2241
        %v2243 = vsel %vm675, %v2239, -inf
        %2244 = vmax.xlane.f32.xlu0 %v2243
        %v2245 = vpop.xlane.xlu0 %2244
        %v2246 = vsub.f32 %v2238, %v2242
        %v2247 = vsub.f32 %v2239, %v2245
        %v2248 = vmul.f32 %v2246, 1.442695
        %v2249 = vpow.pop %v2248
        %v2250 = vmul.f32 %v2247, 1.442695
        %v2251 = vpow.pop %v2250
        %v2252 = vsel %vm675, %v2249, 0.0
        %2253 = vadd.xlane.f32.xlu0 %v2252
        %v2254 = vpop.xlane.xlu0 %2253
        %v2255 = vsel %vm675, %v2251, 0.0
        %2256 = vadd.xlane.f32.xlu0 %v2255
        %v2257 = vpop.xlane.xlu0 %2256
        %v2258 = vrcp.pop %v2254
        %v2259 = vrcp.pop %v2257
        %v2260 = vmul.f32 %v2249, %v2258
        %v2261 = vmul.f32 %v2251, %v2259
        %v2262 = vpack.c.bf16 %v2261, %v2260
        %2263 = vrot.lane.b32.xlu0 %v1821, 32
        %v2264 = vpop.permute.xlu0 %2263
        %v2267 = vsel %vm675, %v2262, 0
        %2269 = vmatprep.subr.bf16.mxu0 0
        %2270 = vmatpush1.bf16.msra.mxu0 %v2264
        %2271 = vmatprep.subr.bf16.mxu0 0
        %2272 = vmatpush1.bf16.msra.mxu0 0
        %2273 = vmatprep.subr.bf16.mxu0 0
        %2274 = vmatpush1.bf16.msra.mxu0 0
        %2275 = vmatprep.subr.bf16.mxu0 0
        %2276 = vmatpush1.bf16.msra.mxu0 0
        %2277 = vmatprep.subr.bf16.mxu0 0
        %2278 = vmatpush1.bf16.msra.mxu0 0
        %2279 = vmatprep.subr.bf16.mxu0 0
        %2280 = vmatpush1.bf16.msra.mxu0 0
        %2281 = vmatprep.subr.bf16.mxu0 0
        %2282 = vmatpush1.bf16.msra.mxu0 0
        %2283 = vmatprep.subr.bf16.mxu0 0
        %2284 = vmatpush1.bf16.msra.mxu0 0
        %2285 = vmatprep.subr.bf16.mxu0 0
        %2286 = vmatpush1.bf16.msra.mxu0 0
        %2287 = vmatprep.subr.bf16.mxu0 0
        %2288 = vmatpush1.bf16.msra.mxu0 0
        %2289 = vmatprep.subr.bf16.mxu0 0
        %2290 = vmatpush1.bf16.msra.mxu0 0
        %2291 = vmatprep.subr.bf16.mxu0 0
        %2292 = vmatpush1.bf16.msra.mxu0 0
        %2293 = vmatprep.subr.bf16.mxu0 0
        %2294 = vmatpush1.bf16.msra.mxu0 0
        %2295 = vmatprep.subr.bf16.mxu0 0
        %2296 = vmatpush1.bf16.msra.mxu0 0
        %2297 = vmatprep.subr.bf16.mxu0 0
        %2298 = vmatpush1.bf16.msra.mxu0 0
        %2299 = vmatprep.subr.bf16.mxu0 0
        %2300 = vmatpush1.bf16.msra.mxu0 0
        %2301 = vmatprep.mubr.bf16.mxu0 0
        %2302 = vmatmul.mubr.bf16.gmra.mrb[0].mxu0 %v2267
        %v2303 = vpop.f32.mrb[0].mxu0
        %v2304 = vadd.f32 0.0, %v2303
        %v2305 = vpop.f32.mrb[0].mxu0
        %v2306 = vpop.f32.mrb[0].mxu0
        %v2307 = vadd.f32 0.0, %v2306
        %v2308 = vpop.f32.mrb[0].mxu0
        %2309 = vdwg.mxu0
        %2312 = vrot.lane.b32.xlu0 %v2058, 32
        %v2313 = vpop.permute.xlu0 %2312
        %2314 = vrot.lane.b32.xlu0 %v2061, 32
        %v2315 = vpop.permute.xlu0 %2314
        %2320 = vrot.lane.b32.xlu0 %v2181, 64
        %v2321 = vpop.permute.xlu0 %2320
        %2322 = vrot.lane.b32.xlu0 %v2184, 64
        %v2323 = vpop.permute.xlu0 %2322
        %2328 = vrot.lane.b32.xlu0 %v2304, 96
        %v2329 = vpop.permute.xlu0 %2328
        %2330 = vrot.lane.b32.xlu0 %v2307, 96
        %v2331 = vpop.permute.xlu0 %2330
        %v2334 = vsel %vm625, %v1932, %v2313
        %v2335 = vsel %vm625, %v1935, %v2315
        %v2336 = vsel %vm1141, %v2334, %v2321
        %v2337 = vsel %vm1141, %v2335, %v2323
        %v2338 = vsel %vm1144, %v2336, %v2329
        %v2339 = vsel %vm1144, %v2337, %v2331
        %v2340 = vpack.c.bf16 %v2339, %v2338
        %v2341 = vld [vmem:[%s1556 + $0xc] sm:$0xf]
        %v2342 = vld [vmem:[%s1556 + $0x24] sm:$0xf]
        %v2343 = vld [vmem:[%s1556 + $0x3c] sm:$0xf]
        %v2344 = vld [vmem:[%s1556 + $0x54] sm:$0xf]
        %v2345 = vld [vmem:[%s1556 + $0x6c] sm:$0xf]
        %v2346 = vld [vmem:[%s1556 + $0x84] sm:$0xf]
        %v2347 = vld [vmem:[%s1556 + $0x9c] sm:$0xf]
        %v2348 = vld [vmem:[%s1556 + $0xb4] sm:$0xf]
        %v2349 = vld [vmem:[%s1556 + $0xcc] sm:$0xf]
        %v2350 = vld [vmem:[%s1556 + $0xe4] sm:$0xf]
        %v2351 = vld [vmem:[%s1556 + $0xfc] sm:$0xf]
        %v2352 = vld [vmem:[%s1556 + $0x114] sm:$0xf]
        %v2353 = vld [vmem:[%s1556 + $0x12c] sm:$0xf]
        %v2354 = vld [vmem:[%s1556 + $0x144] sm:$0xf]
        %v2355 = vld [vmem:[%s1556 + $0x15c] sm:$0xf]
        %v2356 = vld [vmem:[%s1556 + $0x174] sm:$0xf]
        %v2357 = vlaneseq
        %v2358 = vshrl.u32 %v2357, 7
        %v2359 = vsub.s32 3, %v2358
        %v2360 = vrot.slane %v1553, %v2359
        %v2377 = vunpack.c.l.b16 %v2341
        %v2378 = vunpack.c.l.b16 %v2342
        %v2379 = vunpack.c.l.b16 %v2343
        %v2380 = vunpack.c.l.b16 %v2344
        %v2381 = vunpack.c.l.b16 %v2345
        %v2382 = vunpack.c.l.b16 %v2346
        %v2383 = vunpack.c.l.b16 %v2347
        %v2384 = vunpack.c.l.b16 %v2348
        %v2385 = vunpack.c.l.b16 %v2349
        %v2386 = vunpack.c.l.b16 %v2350
        %v2387 = vunpack.c.l.b16 %v2351
        %v2388 = vunpack.c.l.b16 %v2352
        %v2389 = vunpack.c.l.b16 %v2353
        %v2390 = vunpack.c.l.b16 %v2354
        %v2391 = vunpack.c.l.b16 %v2355
        %v2392 = vunpack.c.l.b16 %v2356
        %v2393 = vpack.c.b16 %v2378, %v2377
        %v2394 = vpack.c.b16 %v2380, %v2379
        %v2395 = vpack.c.b16 %v2382, %v2381
        %v2396 = vpack.c.b16 %v2384, %v2383
        %v2397 = vpack.c.b16 %v2386, %v2385
        %v2398 = vpack.c.b16 %v2388, %v2387
        %v2399 = vpack.c.b16 %v2390, %v2389
        %v2400 = vpack.c.b16 %v2392, %v2391
        %2409 = vmatprep.subr.bf16.mxu0 0
        %2410 = vmatpush1.bf16.msra.mxu0 %v2393
        %2411 = vmatprep.subr.bf16.mxu0 0
        %2412 = vmatpush1.bf16.msra.mxu0 %v2394
        %2413 = vmatprep.subr.bf16.mxu0 0
        %2414 = vmatpush1.bf16.msra.mxu0 %v2395
        %2415 = vmatprep.subr.bf16.mxu0 0
        %2416 = vmatpush1.bf16.msra.mxu0 %v2396
        %2417 = vmatprep.subr.bf16.mxu0 0
        %2418 = vmatpush1.bf16.msra.mxu0 %v2397
        %2419 = vmatprep.subr.bf16.mxu0 0
        %2420 = vmatpush1.bf16.msra.mxu0 %v2398
        %2421 = vmatprep.subr.bf16.mxu0 0
        %2422 = vmatpush1.bf16.msra.mxu0 %v2399
        %2423 = vmatprep.subr.bf16.mxu0 0
        %2424 = vmatpush1.bf16.msra.mxu0 %v2400
        %2425 = vmatprep.subr.bf16.mxu0 0
        %2426 = vmatpush1.bf16.msra.mxu0 0
        %2427 = vmatprep.subr.bf16.mxu0 0
        %2428 = vmatpush1.bf16.msra.mxu0 0
        %2429 = vmatprep.subr.bf16.mxu0 0
        %2430 = vmatpush1.bf16.msra.mxu0 0
        %2431 = vmatprep.subr.bf16.mxu0 0
        %2432 = vmatpush1.bf16.msra.mxu0 0
        %2433 = vmatprep.subr.bf16.mxu0 0
        %2434 = vmatpush1.bf16.msra.mxu0 0
        %2435 = vmatprep.subr.bf16.mxu0 0
        %2436 = vmatpush1.bf16.msra.mxu0 0
        %2437 = vmatprep.subr.bf16.mxu0 0
        %2438 = vmatpush1.bf16.msra.mxu0 0
        %2439 = vmatprep.subr.bf16.mxu0 0
        %2440 = vmatpush1.bf16.msra.mxu0 0
        %2441 = vmatprep.mubr.bf16.mxu0 0
        %2442 = vmatmul.mubr.bf16.gmra.mrb[0].mxu0 %v2340
        %v2443 = vpop.f32.mrb[0].mxu0
        %v2444 = vadd.f32 %v2360, %v2443
        %v2445 = vpop.f32.mrb[0].mxu0
        %v2446 = vpop.f32.mrb[0].mxu0
        %v2447 = vadd.f32 %v2360, %v2446
        %v2448 = vpop.f32.mrb[0].mxu0
        %2449 = vdwg.mxu0
        %v2450 = vadd.f32 %v2444, %v1550
        %v2451 = vadd.f32 %v2447, %v1551
        %2452 = vadd.xlane.f32.xlu0 %v2450
        %v2453 = vpop.xlane.xlu0 %2452
        %2454 = vadd.xlane.f32.xlu0 %v2451
        %v2455 = vpop.xlane.xlu0 %2454
        %v2456 = vmul.f32 %v2453, %v1263
        %v2457 = vmul.f32 %v2455, %v1263
        %v2458 = vsub.f32 %v2450, %v2456
        %v2459 = vsub.f32 %v2451, %v2457
        %v2460 = vmul.f32 %v2458, %v2458
        %v2461 = vmul.f32 %v2459, %v2459
        %2462 = vadd.xlane.f32.xlu0 %v2460
        %v2463 = vpop.xlane.xlu0 %2462
        %2464 = vadd.xlane.f32.xlu0 %v2461
        %v2465 = vpop.xlane.xlu0 %2464
        %v2466 = vmul.f32 %v2463, %v1263
        %v2467 = vmul.f32 %v2465, %v1263
        %v2468 = vadd.f32 %v2466, 1e-05
        %v2469 = vadd.f32 %v2467, 1e-05
        %v2470 = vrsqrt.pop %v2468
        %v2471 = vrsqrt.pop %v2469
        %v2472 = vmul.f32 %v2458, %v2470
        %v2473 = vmul.f32 %v2459, %v2471
        %v2474 = vlaneseq
        %v2475 = vshrl.u32 %v2474, 7
        %v2476 = vsub.s32 4, %v2475
        %v2477 = vrot.slane %v1553, %v2476
        %v2478 = vmul.f32 %v2472, %v2477
        %v2479 = vmul.f32 %v2473, %v2477
        %v2480 = vlaneseq
        %v2481 = vshrl.u32 %v2480, 7
        %v2482 = vsub.s32 5, %v2481
        %v2483 = vrot.slane %v1553, %v2482
        %v2484 = vadd.f32 %v2478, %v2483
        %v2485 = vadd.f32 %v2479, %v2483
        %v2486 = vpack.c.bf16 %v2485, %v2484
        %v2487 = vld [vmem:[%s1556 + $0x10] sm:$0xf]
        %v2488 = vld [vmem:[%s1556 + $0x28] sm:$0xf]
        %v2489 = vld [vmem:[%s1556 + $0x40] sm:$0xf]
        %v2490 = vld [vmem:[%s1556 + $0x58] sm:$0xf]
        %v2491 = vld [vmem:[%s1556 + $0x70] sm:$0xf]
        %v2492 = vld [vmem:[%s1556 + $0x88] sm:$0xf]
        %v2493 = vld [vmem:[%s1556 + $0xa0] sm:$0xf]
        %v2494 = vld [vmem:[%s1556 + $0xb8] sm:$0xf]
        %v2495 = vld [vmem:[%s1556 + $0xd0] sm:$0xf]
        %v2496 = vld [vmem:[%s1556 + $0xe8] sm:$0xf]
        %v2497 = vld [vmem:[%s1556 + $0x100] sm:$0xf]
        %v2498 = vld [vmem:[%s1556 + $0x118] sm:$0xf]
        %v2499 = vld [vmem:[%s1556 + $0x130] sm:$0xf]
        %v2500 = vld [vmem:[%s1556 + $0x148] sm:$0xf]
        %v2501 = vld [vmem:[%s1556 + $0x160] sm:$0xf]
        %v2502 = vld [vmem:[%s1556 + $0x178] sm:$0xf]
        %v2503 = vlaneseq
        %v2504 = vshrl.u32 %v2503, 7
        %v2505 = vsub.s32 6, %v2504
        %v2506 = vrot.slane %v1553, %v2505
        %v2523 = vunpack.c.l.b16 %v2487
        %v2524 = vunpack.c.l.b16 %v2488
        %v2525 = vunpack.c.l.b16 %v2489
        %v2526 = vunpack.c.l.b16 %v2490
        %v2527 = vunpack.c.l.b16 %v2491
        %v2528 = vunpack.c.l.b16 %v2492
        %v2529 = vunpack.c.l.b16 %v2493
        %v2530 = vunpack.c.l.b16 %v2494
        %v2531 = vunpack.c.l.b16 %v2495
        %v2532 = vunpack.c.l.b16 %v2496
        %v2533 = vunpack.c.l.b16 %v2497
        %v2534 = vunpack.c.l.b16 %v2498
        %v2535 = vunpack.c.l.b16 %v2499
        %v2536 = vunpack.c.l.b16 %v2500
        %v2537 = vunpack.c.l.b16 %v2501
        %v2538 = vunpack.c.l.b16 %v2502
        %v2539 = vpack.c.b16 %v2524, %v2523
        %v2540 = vpack.c.b16 %v2526, %v2525
        %v2541 = vpack.c.b16 %v2528, %v2527
        %v2542 = vpack.c.b16 %v2530, %v2529
        %v2543 = vpack.c.b16 %v2532, %v2531
        %v2544 = vpack.c.b16 %v2534, %v2533
        %v2545 = vpack.c.b16 %v2536, %v2535
        %v2546 = vpack.c.b16 %v2538, %v2537
        %2555 = vmatprep.subr.bf16.mxu0 0
        %2556 = vmatpush1.bf16.msra.mxu0 %v2539
        %2557 = vmatprep.subr.bf16.mxu0 0
        %2558 = vmatpush1.bf16.msra.mxu0 %v2540
        %2559 = vmatprep.subr.bf16.mxu0 0
        %2560 = vmatpush1.bf16.msra.mxu0 %v2541
        %2561 = vmatprep.subr.bf16.mxu0 0
        %2562 = vmatpush1.bf16.msra.mxu0 %v2542
        %2563 = vmatprep.subr.bf16.mxu0 0
        %2564 = vmatpush1.bf16.msra.mxu0 %v2543
        %2565 = vmatprep.subr.bf16.mxu0 0
        %2566 = vmatpush1.bf16.msra.mxu0 %v2544
        %2567 = vmatprep.subr.bf16.mxu0 0
        %2568 = vmatpush1.bf16.msra.mxu0 %v2545
        %2569 = vmatprep.subr.bf16.mxu0 0
        %2570 = vmatpush1.bf16.msra.mxu0 %v2546
        %2571 = vmatprep.subr.bf16.mxu0 0
        %2572 = vmatpush1.bf16.msra.mxu0 0
        %2573 = vmatprep.subr.bf16.mxu0 0
        %2574 = vmatpush1.bf16.msra.mxu0 0
        %2575 = vmatprep.subr.bf16.mxu0 0
        %2576 = vmatpush1.bf16.msra.mxu0 0
        %2577 = vmatprep.subr.bf16.mxu0 0
        %2578 = vmatpush1.bf16.msra.mxu0 0
        %2579 = vmatprep.subr.bf16.mxu0 0
        %2580 = vmatpush1.bf16.msra.mxu0 0
        %2581 = vmatprep.subr.bf16.mxu0 0
        %2582 = vmatpush1.bf16.msra.mxu0 0
        %2583 = vmatprep.subr.bf16.mxu0 0
        %2584 = vmatpush1.bf16.msra.mxu0 0
        %2585 = vmatprep.subr.bf16.mxu0 0
        %2586 = vmatpush1.bf16.msra.mxu0 0
        %2587 = vmatprep.mubr.bf16.mxu0 0
        %2588 = vmatmul.mubr.bf16.gmra.mrb[0].mxu0 %v2486
        %v2589 = vpop.f32.mrb[0].mxu0
        %v2590 = vadd.f32 %v2506, %v2589
        %v2591 = vpop.f32.mrb[0].mxu0
        %v2592 = vpop.f32.mrb[0].mxu0
        %v2593 = vadd.f32 %v2506, %v2592
        %v2594 = vpop.f32.mrb[0].mxu0
        %2595 = vdwg.mxu0
        %v2596 = vmax.f32 %v2590, 0.0
        %v2597 = vmax.f32 %v2593, 0.0
        %v2598 = vpack.c.bf16 %v2597, %v2596
        %v2599 = vld [vmem:[%s1556 + $0x14] sm:$0xf]
        %v2600 = vld [vmem:[%s1556 + $0x2c] sm:$0xf]
        %v2601 = vld [vmem:[%s1556 + $0x44] sm:$0xf]
        %v2602 = vld [vmem:[%s1556 + $0x5c] sm:$0xf]
        %v2603 = vld [vmem:[%s1556 + $0x74] sm:$0xf]
        %v2604 = vld [vmem:[%s1556 + $0x8c] sm:$0xf]
        %v2605 = vld [vmem:[%s1556 + $0xa4] sm:$0xf]
        %v2606 = vld [vmem:[%s1556 + $0xbc] sm:$0xf]
        %v2607 = vld [vmem:[%s1556 + $0xd4] sm:$0xf]
        %v2608 = vld [vmem:[%s1556 + $0xec] sm:$0xf]
        %v2609 = vld [vmem:[%s1556 + $0x104] sm:$0xf]
        %v2610 = vld [vmem:[%s1556 + $0x11c] sm:$0xf]
        %v2611 = vld [vmem:[%s1556 + $0x134] sm:$0xf]
        %v2612 = vld [vmem:[%s1556 + $0x14c] sm:$0xf]
        %v2613 = vld [vmem:[%s1556 + $0x164] sm:$0xf]
        %v2614 = vld [vmem:[%s1556 + $0x17c] sm:$0xf]
        %v2615 = vlaneseq
        %v2616 = vshrl.u32 %v2615, 7
        %v2617 = vsub.s32 7, %v2616
        %v2618 = vrot.slane %v1553, %v2617
        %v2635 = vunpack.c.l.b16 %v2599
        %v2636 = vunpack.c.l.b16 %v2600
        %v2637 = vunpack.c.l.b16 %v2601
        %v2638 = vunpack.c.l.b16 %v2602
        %v2639 = vunpack.c.l.b16 %v2603
        %v2640 = vunpack.c.l.b16 %v2604
        %v2641 = vunpack.c.l.b16 %v2605
        %v2642 = vunpack.c.l.b16 %v2606
        %v2643 = vunpack.c.l.b16 %v2607
        %v2644 = vunpack.c.l.b16 %v2608
        %v2645 = vunpack.c.l.b16 %v2609
        %v2646 = vunpack.c.l.b16 %v2610
        %v2647 = vunpack.c.l.b16 %v2611
        %v2648 = vunpack.c.l.b16 %v2612
        %v2649 = vunpack.c.l.b16 %v2613
        %v2650 = vunpack.c.l.b16 %v2614
        %v2651 = vpack.c.b16 %v2636, %v2635
        %v2652 = vpack.c.b16 %v2638, %v2637
        %v2653 = vpack.c.b16 %v2640, %v2639
        %v2654 = vpack.c.b16 %v2642, %v2641
        %v2655 = vpack.c.b16 %v2644, %v2643
        %v2656 = vpack.c.b16 %v2646, %v2645
        %v2657 = vpack.c.b16 %v2648, %v2647
        %v2658 = vpack.c.b16 %v2650, %v2649
        %2667 = vmatprep.subr.bf16.mxu0 0
        %2668 = vmatpush1.bf16.msra.mxu0 %v2651
        %2669 = vmatprep.subr.bf16.mxu0 0
        %2670 = vmatpush1.bf16.msra.mxu0 %v2652
        %2671 = vmatprep.subr.bf16.mxu0 0
        %2672 = vmatpush1.bf16.msra.mxu0 %v2653
        %2673 = vmatprep.subr.bf16.mxu0 0
        %2674 = vmatpush1.bf16.msra.mxu0 %v2654
        %2675 = vmatprep.subr.bf16.mxu0 0
        %2676 = vmatpush1.bf16.msra.mxu0 %v2655
        %2677 = vmatprep.subr.bf16.mxu0 0
        %2678 = vmatpush1.bf16.msra.mxu0 %v2656
        %2679 = vmatprep.subr.bf16.mxu0 0
        %2680 = vmatpush1.bf16.msra.mxu0 %v2657
        %2681 = vmatprep.subr.bf16.mxu0 0
        %2682 = vmatpush1.bf16.msra.mxu0 %v2658
        %2683 = vmatprep.subr.bf16.mxu0 0
        %2684 = vmatpush1.bf16.msra.mxu0 0
        %2685 = vmatprep.subr.bf16.mxu0 0
        %2686 = vmatpush1.bf16.msra.mxu0 0
        %2687 = vmatprep.subr.bf16.mxu0 0
        %2688 = vmatpush1.bf16.msra.mxu0 0
        %2689 = vmatprep.subr.bf16.mxu0 0
        %2690 = vmatpush1.bf16.msra.mxu0 0
        %2691 = vmatprep.subr.bf16.mxu0 0
        %2692 = vmatpush1.bf16.msra.mxu0 0
        %2693 = vmatprep.subr.bf16.mxu0 0
        %2694 = vmatpush1.bf16.msra.mxu0 0
        %2695 = vmatprep.subr.bf16.mxu0 0
        %2696 = vmatpush1.bf16.msra.mxu0 0
        %2697 = vmatprep.subr.bf16.mxu0 0
        %2698 = vmatpush1.bf16.msra.mxu0 0
        %2699 = vmatprep.mubr.bf16.mxu0 0
        %2700 = vmatmul.mubr.bf16.gmra.mrb[0].mxu0 %v2598
        %v2701 = vpop.f32.mrb[0].mxu0
        %v2702 = vadd.f32 %v2618, %v2701
        %v2703 = vpop.f32.mrb[0].mxu0
        %v2704 = vpop.f32.mrb[0].mxu0
        %v2705 = vadd.f32 %v2618, %v2704
        %v2706 = vpop.f32.mrb[0].mxu0
        %2707 = vdwg.mxu0
        %v2708 = vadd.f32 %v2702, %v2484
        %v2709 = vadd.f32 %v2705, %v2485
        %2710 = vadd.xlane.f32.xlu0 %v2708
        %v2711 = vpop.xlane.xlu0 %2710
        %2712 = vadd.xlane.f32.xlu0 %v2709
        %v2713 = vpop.xlane.xlu0 %2712
        %v2714 = vmul.f32 %v2711, %v1263
        %v2715 = vmul.f32 %v2713, %v1263
        %v2716 = vsub.f32 %v2708, %v2714
        %v2717 = vsub.f32 %v2709, %v2715
        %v2718 = vmul.f32 %v2716, %v2716
        %v2719 = vmul.f32 %v2717, %v2717
        %2720 = vadd.xlane.f32.xlu0 %v2718
        %v2721 = vpop.xlane.xlu0 %2720
        %2722 = vadd.xlane.f32.xlu0 %v2719
        %v2723 = vpop.xlane.xlu0 %2722
        %v2724 = vmul.f32 %v2721, %v1263
        %v2725 = vmul.f32 %v2723, %v1263
        %v2726 = vadd.f32 %v2724, 1e-05
        %v2727 = vadd.f32 %v2725, 1e-05
        %v2728 = vrsqrt.pop %v2726
        %v2729 = vrsqrt.pop %v2727
        %v2730 = vmul.f32 %v2716, %v2728
        %v2731 = vmul.f32 %v2717, %v2729
        %v2732 = vlaneseq
        %v2733 = vshrl.u32 %v2732, 7
        %v2734 = vsub.s32 0, %v2733
        %v2735 = vrot.slane %v1554, %v2734
        %v2736 = vmul.f32 %v2730, %v2735
        %v2737 = vmul.f32 %v2731, %v2735
        %v2738 = vlaneseq
        %v2739 = vshrl.u32 %v2738, 7
        %v2740 = vsub.s32 1, %v2739
        %v2741 = vrot.slane %v1554, %v2740
        %v2742 = vadd.f32 %v2736, %v2741
        %v2743 = vadd.f32 %v2737, %v2741
        %v2744 = vpack.c.bf16 %v2743, %v2742
        %v2745 = vld [vmem:[%s5] sm:$0xf]
        %v2746 = vld [vmem:[%s5 + $0x4] sm:$0xf]
        %v2747 = vld [vmem:[%s5 + $0x8] sm:$0xf]
        %v2748 = vld [vmem:[%s5 + $0xc] sm:$0xf]
        %v2749 = vld [vmem:[%s5 + $0x10] sm:$0xf]
        %v2750 = vld [vmem:[%s5 + $0x14] sm:$0xf]
        %v2751 = vld [vmem:[%s5 + $0x18] sm:$0xf]
        %v2752 = vld [vmem:[%s5 + $0x1c] sm:$0xf]
        %v2753 = vld [vmem:[%s5 + $0x20] sm:$0xf]
        %v2754 = vld [vmem:[%s5 + $0x24] sm:$0xf]
        %v2755 = vld [vmem:[%s5 + $0x28] sm:$0xf]
        %v2756 = vld [vmem:[%s5 + $0x2c] sm:$0xf]
        %v2757 = vld [vmem:[%s5 + $0x30] sm:$0xf]
        %v2758 = vld [vmem:[%s5 + $0x34] sm:$0xf]
        %v2759 = vld [vmem:[%s5 + $0x38] sm:$0xf]
        %v2760 = vld [vmem:[%s5 + $0x3c] sm:$0xf]
        %v2761 = vld [vmem:[%s6] sm:$0x1]
        %v2763 = vlaneseq
        %v2764 = vshrl.u32 %v2763, 7
        %v2765 = vsub.s32 0, %v2764
        %v2766 = vrot.slane %v2761, %v2765
        %v2784 = vunpack.c.l.b16 %v2745
        %v2785 = vunpack.c.l.b16 %v2746
        %v2786 = vunpack.c.l.b16 %v2747
        %v2787 = vunpack.c.l.b16 %v2748
        %v2788 = vunpack.c.l.b16 %v2749
        %v2789 = vunpack.c.l.b16 %v2750
        %v2790 = vunpack.c.l.b16 %v2751
        %v2791 = vunpack.c.l.b16 %v2752
        %v2792 = vunpack.c.l.b16 %v2753
        %v2793 = vunpack.c.l.b16 %v2754
        %v2794 = vunpack.c.l.b16 %v2755
        %v2795 = vunpack.c.l.b16 %v2756
        %v2796 = vunpack.c.l.b16 %v2757
        %v2797 = vunpack.c.l.b16 %v2758
        %v2798 = vunpack.c.l.b16 %v2759
        %v2799 = vunpack.c.l.b16 %v2760
        %v2800 = vpack.c.b16 %v2785, %v2784
        %v2801 = vpack.c.b16 %v2787, %v2786
        %v2802 = vpack.c.b16 %v2789, %v2788
        %v2803 = vpack.c.b16 %v2791, %v2790
        %v2804 = vpack.c.b16 %v2793, %v2792
        %v2805 = vpack.c.b16 %v2795, %v2794
        %v2806 = vpack.c.b16 %v2797, %v2796
        %v2807 = vpack.c.b16 %v2799, %v2798
        %2816 = vmatprep.subr.bf16.mxu0 0
        %2817 = vmatpush1.bf16.msra.mxu0 %v2800
        %2818 = vmatprep.subr.bf16.mxu0 0
        %2819 = vmatpush1.bf16.msra.mxu0 %v2801
        %2820 = vmatprep.subr.bf16.mxu0 0
        %2821 = vmatpush1.bf16.msra.mxu0 %v2802
        %2822 = vmatprep.subr.bf16.mxu0 0
        %2823 = vmatpush1.bf16.msra.mxu0 %v2803
        %2824 = vmatprep.subr.bf16.mxu0 0
        %2825 = vmatpush1.bf16.msra.mxu0 %v2804
        %2826 = vmatprep.subr.bf16.mxu0 0
        %2827 = vmatpush1.bf16.msra.mxu0 %v2805
        %2828 = vmatprep.subr.bf16.mxu0 0
        %2829 = vmatpush1.bf16.msra.mxu0 %v2806
        %2830 = vmatprep.subr.bf16.mxu0 0
        %2831 = vmatpush1.bf16.msra.mxu0 %v2807
        %2832 = vmatprep.subr.bf16.mxu0 0
        %2833 = vmatpush1.bf16.msra.mxu0 0
        %2834 = vmatprep.subr.bf16.mxu0 0
        %2835 = vmatpush1.bf16.msra.mxu0 0
        %2836 = vmatprep.subr.bf16.mxu0 0
        %2837 = vmatpush1.bf16.msra.mxu0 0
        %2838 = vmatprep.subr.bf16.mxu0 0
        %2839 = vmatpush1.bf16.msra.mxu0 0
        %2840 = vmatprep.subr.bf16.mxu0 0
        %2841 = vmatpush1.bf16.msra.mxu0 0
        %2842 = vmatprep.subr.bf16.mxu0 0
        %2843 = vmatpush1.bf16.msra.mxu0 0
        %2844 = vmatprep.subr.bf16.mxu0 0
        %2845 = vmatpush1.bf16.msra.mxu0 0
        %2846 = vmatprep.subr.bf16.mxu0 0
        %2847 = vmatpush1.bf16.msra.mxu0 0
        %2848 = vmatprep.mubr.bf16.mxu0 0
        %2849 = vmatmul.mubr.bf16.gmra.mrb[0].mxu0 %v2744
        %v2850 = vpop.f32.mrb[0].mxu0
        %v2851 = vadd.f32 %v2766, %v2850
        %v2852 = vpop.f32.mrb[0].mxu0
        %v2853 = vpop.f32.mrb[0].mxu0
        %v2854 = vadd.f32 %v2766, %v2853
        %v2855 = vpop.f32.mrb[0].mxu0
        %2856 = vdwg.mxu0
        %2857 = vst [vmem:[%s293] sm:$0xff] %v2851
        %2858 = vst [vmem:[%s293 + $0x8] sm:$0xff] %v2854
        %p2859 = scmp.lt.s32.totalorder %s19, 1
        %s2860 = scalar_select %p2859, %s19, 1
        %s2861 = smul.addr %s2860, 2
        %s2862 = smul.addr %s2861, 8
        %s2863 = scalar_lea.vmem %s7, %s2862
        // Predicated region
        $region53: #{whole_sequence_model_forward.1} parent=47 // pred_check
          %p2864 = pneg %p189
        $region54: #{whole_sequence_model_forward.1} parent=47 // pred_check_branch
          %2866 = sbr.rel (%p2864) target = $region56
        $region55: #{whole_sequence_model_forward.1} parent=47 // pred_region
          _
        $region56: #{whole_sequence_model_forward.1} parent=47 // pred_fallthru
          _
      $region48: #{whole_sequence_model_forward.1} parent=5 // pred_fallthru
        _
      %p2867 = scmp.le.s32.totalorder 2, %s14
      // Predicated region
      $region57: #{whole_sequence_model_forward.1} parent=5 // pred_check
        %p2868 = pneg %p2867
      $region58: #{whole_sequence_model_forward.1} parent=5 // pred_check_branch
        %2870 = sbr.rel (%p2868) target = $region60
      $region59: #{whole_sequence_model_forward.1} parent=5 // pred_region
        %s2871 = ssub.s32 %s14, 2
        // Predicated region
        $region61: #{whole_sequence_model_forward.1} parent=59 // pred_check
          %p2872 = pneg %p195
        $region62: #{whole_sequence_model_forward.1} parent=59 // pred_check_branch
          %2874 = sbr.rel (%p2872) target = $region64
        $region63: #{whole_sequence_model_forward.1} parent=59 // pred_region
          %p2875 = scmp.lt.s32.totalorder %s20, 1
          %s2876 = scalar_select %p2875, %s20, 1
          %s2877 = smul.addr %s2876, 2
          %s2878 = smul.addr %s2877, 8
          %s2879 = scalar_lea.vmem %s7, %s2878
        $region64: #{whole_sequence_model_forward.1} parent=59 // pred_fallthru
          _
      $region60: #{whole_sequence_model_forward.1} parent=5 // pred_fallthru
        _
    $region6: #{whole_sequence_model_forward.1} parent=1 // loop_footer
      %s18 = sadd.s32 1, %s14
    $region7: #{whole_sequence_model_forward.1} parent=1 // loop_footer_branch
      %13 = sbr.rel target = $region3
    $region8: #{whole_sequence_model_forward.1} parent=1 // loop_exit
      _
    %2880 = vsyncpa [#allocation3], 1
    %s2881 = scalar_lea.sflag [#allocation3], 1
    %2882 = vsyncpa %s2881, 1

</llo_original>
